<compile_context>
chip_gen: v7x
topology: tpu7x:2x2x1
jax: 0.10.0
libtpu: 0.0.40
codegen_flags: <defaults>
</compile_context>

<pallas_src>
import math
import numpy as np
import jax
import jax.numpy as jnp
from jax.experimental import pallas as pl
from jax.experimental.pallas import tpu as pltpu

# ---------------- model config (small, consistent with the module) ----------------
B, S = 2, 8
IN_FT = 6
D_MODEL = 32
NUM_HEADS = 4
D_HEAD = D_MODEL // NUM_HEADS
FT_SIZE = 32
ATTR_SIZE = 12
MAX_LEN = 16

_VMEM = pl.BlockSpec(memory_space=pltpu.MemorySpace.VMEM)


# ------------------------------- fused Pallas kernel --------------------------------
def _fused_forward_kernel(x_ref, dw_ref, db_ref, wqkv_ref, bqkv_ref, ert_ref,
                          wih_ref, bg_ref, whh_ref, tm_ref, attr_ref, ft_ref):
    # ---- DenseL: (B*S, in_ft) @ (in_ft, d_model) ----
    h = jnp.dot(x_ref[...], dw_ref[...], preferred_element_type=jnp.float32) + db_ref[...]

    # ---- fused Q/K/V projection: single (B*S, 3*d_model) matmul (lane-dense, 96 wide) ----
    # Note: the 1/sqrt(d_head) attention scale is pre-folded into the Q columns/bias.
    qkv = jnp.dot(h, wqkv_ref[...], preferred_element_type=jnp.float32) + bqkv_ref[...]
    qkv3 = qkv.reshape(B, S, 3 * D_MODEL)

    # ---- constants hoisted out of the per-head loop (mask / skew selectors) ----
    row = jax.lax.broadcasted_iota(jnp.int32, (S, S), 0)
    col = jax.lax.broadcasted_iota(jnp.int32, (S, S), 1)
    causal = (row >= col)[None, :, :]                      # (1, S, S)
    neg_big = jnp.float32(-1e30)
    # skew: Srel[i, j] = QEr[i, S-1-i+j]  ->  selector r picks the (i-j)==S-1-r diagonal
    skew_sel = [((row - col) == (S - 1 - r)).astype(jnp.float32)[None, :, :]
                for r in range(S)]

    ert = ert_ref[...]                                     # (d_head, S) = Er[max_len-S:, :].T
    bg = bg_ref[...]                                       # (1, 4*ft) = b_ih + b_hh

    # ---- relative-global attention, per head (unrolled: NUM_HEADS = 4) ----
    # LSTM gate input accumulated head-by-head:
    #   attn_out @ W_ih^T == sum_h out_h @ W_ih^T[h*d_head:(h+1)*d_head, :]
    # (avoids concatenating heads; result stays lane-dense at 128 lanes)
    xg = jnp.broadcast_to(bg, (B * S, 4 * FT_SIZE))
    for hh in range(NUM_HEADS):
        qo = hh * D_HEAD
        ko = D_MODEL + qo
        vo = 2 * D_MODEL + qo
        qh = qkv3[:, :, qo:qo + D_HEAD]                    # (B, S, d_head), pre-scaled
        kh = qkv3[:, :, ko:ko + D_HEAD]
        vh = qkv3[:, :, vo:vo + D_HEAD]

        # content scores (MXU, batched over B)
        scores = jnp.einsum("bqd,bkd->bqk", qh, kh, preferred_element_type=jnp.float32)

        # relative-position scores: QEr on the MXU, skew via precomputed diagonal selectors
        qer = jnp.dot(qh.reshape(B * S, D_HEAD), ert,
                      preferred_element_type=jnp.float32).reshape(B, S, S)
        srel = jnp.zeros((B, S, S), jnp.float32)
        for r in range(S):
            srel = srel + qer[:, :, r:r + 1] * skew_sel[r]

        logits = scores + srel                             # scale already folded into q
        logits = jnp.where(causal, logits, neg_big)
        m = jnp.max(logits, axis=-1, keepdims=True)
        e = jnp.exp(logits - m)
        p = e / jnp.sum(e, axis=-1, keepdims=True)
        # TODO(synk): attention dropout implemented as identity (eval-mode semantics).

        out_h = jnp.einsum("bqk,bkd->bqd", p, vh, preferred_element_type=jnp.float32)
        xg = xg + jnp.dot(out_h.reshape(B * S, D_HEAD), wih_ref[qo:qo + D_HEAD, :],
                          preferred_element_type=jnp.float32)

    # ---- LSTM recurrence: one (B, ft) @ (ft, 4*ft) matmul per step, fully unrolled ----
    xg3 = xg.reshape(B, S, 4 * FT_SIZE)                    # (B, S, 128) gate pre-activations
    whh = whh_ref[...]                                     # (ft, 4*ft), lane-dense 128 result
    hcur = jnp.zeros((B, FT_SIZE), jnp.float32)
    ccur = jnp.zeros((B, FT_SIZE), jnp.float32)
    for t in range(S):                                     # static unroll (S = 8)
        gates = xg3[:, t, :] + jnp.dot(hcur, whh, preferred_element_type=jnp.float32)
        gi = jax.nn.sigmoid(gates[:, 0 * FT_SIZE:1 * FT_SIZE])
        gf = jax.nn.sigmoid(gates[:, 1 * FT_SIZE:2 * FT_SIZE])
        gg = jnp.tanh(gates[:, 2 * FT_SIZE:3 * FT_SIZE])
        go = jax.nn.sigmoid(gates[:, 3 * FT_SIZE:4 * FT_SIZE])
        ccur = gf * ccur + gi * gg
        hcur = go * jnp.tanh(ccur)

    # ---- attribute head (fused epilogue): attr = h @ TransMet^T ; ft = attr @ TransMet ----
    tm = tm_ref[...]                                       # (attr_size, ft)
    attr = jax.lax.dot_general(hcur, tm, (((1,), (1,)), ((), ())),
                               preferred_element_type=jnp.float32)
    attr_ref[...] = attr
    ft_ref[...] = jnp.dot(attr, tm, preferred_element_type=jnp.float32)


# ---------------------- parameter preprocessing (done once, outside jit) -----------
def preprocess_params(p):
    """One-time parameter transforms so the jitted forward is a single pallas_call."""
    scale = jnp.float32(1.0 / math.sqrt(D_HEAD))
    # Fold the attention scale into the Q projection: it multiplies both QK^T and Srel
    # (both are linear in q), so (scores + srel) / sqrt(d_head) is preserved exactly.
    qkv_w = jnp.concatenate([p["q_w"] * scale, p["k_w"], p["v_w"]], axis=1)   # (d, 3d)
    qkv_b = jnp.concatenate([p["q_b"] * scale, p["k_b"], p["v_b"]], axis=1)   # (1, 3d)
    return {
        "dense_w": p["dense_w"],                                         # (in_ft, d)
        "dense_b": p["dense_b"],                                         # (1, d)
        "qkv_w": qkv_w,
        "qkv_b": qkv_b,
        "er_sub_t": p["Er"][MAX_LEN - S:, :].T,                          # (d_head, S)
        "w_ih_t": p["w_ih"].T,                                           # (d, 4*ft)
        "gate_bias": (p["b_ih"] + p["b_hh"])[None, :],                   # (1, 4*ft)
        "w_hh_t": p["w_hh"].T,                                           # (ft, 4*ft)
        "trans_met": p["TransMet"],                                      # (attr, ft)
    }


# ------------------------------- forward (single launch) ---------------------------
def zslhar_forward(x, pp):
    b, s, _ = x.shape
    return pl.pallas_call(
        _fused_forward_kernel,
        out_shape=(jax.ShapeDtypeStruct((b, ATTR_SIZE), jnp.float32),
                   jax.ShapeDtypeStruct((b, FT_SIZE), jnp.float32)),
        in_specs=[_VMEM] * 10,
        out_specs=(_VMEM, _VMEM),
    )(x.reshape(b * s, IN_FT), pp["dense_w"], pp["dense_b"], pp["qkv_w"], pp["qkv_b"],
      pp["er_sub_t"], pp["w_ih_t"], pp["gate_bias"], pp["w_hh_t"], pp["trans_met"])


# ------------------------------- reference (plain JAX) -----------------------------
def reference_forward(x, p):
    b, s, _ = x.shape
    h = x @ p["dense_w"] + p["dense_b"]
    k = (h @ p["k_w"] + p["k_b"]).reshape(b, s, NUM_HEADS, D_HEAD).transpose(0, 2, 3, 1)
    v = (h @ p["v_w"] + p["v_b"]).reshape(b, s, NUM_HEADS, D_HEAD).transpose(0, 2, 1, 3)
    q = (h @ p["q_w"] + p["q_b"]).reshape(b, s, NUM_HEADS, D_HEAD).transpose(0, 2, 1, 3)
    er_t = p["Er"][MAX_LEN - s:, :].T
    qer = q @ er_t
    padded = jnp.pad(qer, ((0, 0), (0, 0), (0, 0), (1, 0)))
    srel = padded.reshape(b, NUM_HEADS, s + 1, s)[:, :, 1:, :]
    logits = (q @ k + srel) / math.sqrt(D_HEAD)
    mask = jnp.tril(jnp.ones((s, s)))
    logits = jnp.where(mask == 0, -jnp.inf, logits)
    attn = jax.nn.softmax(logits, axis=-1)
    out = (attn @ v).transpose(0, 2, 1, 3).reshape(b, s, D_MODEL)
    ht = jnp.zeros((b, FT_SIZE), jnp.float32)
    ct = jnp.zeros((b, FT_SIZE), jnp.float32)
    for t in range(s):
        gates = out[:, t, :] @ p["w_ih"].T + p["b_ih"] + ht @ p["w_hh"].T + p["b_hh"]
        i = jax.nn.sigmoid(gates[:, :FT_SIZE])
        f = jax.nn.sigmoid(gates[:, FT_SIZE:2 * FT_SIZE])
        g = jnp.tanh(gates[:, 2 * FT_SIZE:3 * FT_SIZE])
        o = jax.nn.sigmoid(gates[:, 3 * FT_SIZE:])
        ct = f * ct + i * g
        ht = o * jnp.tanh(ct)
    attr_out = ht @ p["TransMet"].T
    ft_out = attr_out @ p["TransMet"]
    return attr_out, ft_out


# ------------------------------- params / main -------------------------------------
def init_params(key):
    ks = jax.random.split(key, 16)

    def rn(k, shape, scale=0.1):
        return scale * jax.random.normal(k, shape, dtype=jnp.float32)

    return {
        "dense_w": rn(ks[0], (IN_FT, D_MODEL)),
        "dense_b": rn(ks[1], (1, D_MODEL)),
        "q_w": rn(ks[2], (D_MODEL, D_MODEL)),
        "q_b": rn(ks[3], (1, D_MODEL)),
        "k_w": rn(ks[4], (D_MODEL, D_MODEL)),
        "k_b": rn(ks[5], (1, D_MODEL)),
        "v_w": rn(ks[6], (D_MODEL, D_MODEL)),
        "v_b": rn(ks[7], (1, D_MODEL)),
        "Er": rn(ks[8], (MAX_LEN, D_HEAD), 1.0),
        "w_ih": rn(ks[9], (4 * FT_SIZE, D_MODEL)),
        "w_hh": rn(ks[10], (4 * FT_SIZE, FT_SIZE)),
        "b_ih": rn(ks[11], (4 * FT_SIZE,)),
        "b_hh": rn(ks[12], (4 * FT_SIZE,)),
        "TransMet": rn(ks[13], (ATTR_SIZE, FT_SIZE), 1.0),
    }


if __name__ == "__main__":
    key = jax.random.PRNGKey(0)
    pkey, xkey = jax.random.split(key)
    params = init_params(pkey)
    x = jax.random.normal(xkey, (B, S, IN_FT), dtype=jnp.float32)

    pp = preprocess_params(params)           # one-time, outside the jitted forward
    fwd = jax.jit(zslhar_forward)
    attr_out, ft_out = fwd(x, pp)
    jax.block_until_ready((attr_out, ft_out))

    ref_attr, ref_ft = reference_forward(x, params)
    assert attr_out.shape == (B, ATTR_SIZE) and ft_out.shape == (B, FT_SIZE)
    np.testing.assert_allclose(np.asarray(attr_out), np.asarray(ref_attr), rtol=1e-2, atol=1e-2)
    np.testing.assert_allclose(np.asarray(ft_out), np.asarray(ref_ft), rtol=1e-2, atol=1e-2)
    print("KERNEL_OK")
</pallas_src>

<mosaic_0001>
module attributes {stable_mosaic.version = 11 : i64} {
  func.func @_fused_forward_kernel(%arg0: memref<16x6xf32, #tpu.memory_space<vmem>>, %arg1: memref<6x32xf32, #tpu.memory_space<vmem>>, %arg2: memref<1x32xf32, #tpu.memory_space<vmem>>, %arg3: memref<32x96xf32, #tpu.memory_space<vmem>>, %arg4: memref<1x96xf32, #tpu.memory_space<vmem>>, %arg5: memref<8x8xf32, #tpu.memory_space<vmem>>, %arg6: memref<32x128xf32, #tpu.memory_space<vmem>>, %arg7: memref<1x128xf32, #tpu.memory_space<vmem>>, %arg8: memref<32x128xf32, #tpu.memory_space<vmem>>, %arg9: memref<12x32xf32, #tpu.memory_space<vmem>>, %arg10: memref<2x12xf32, #tpu.memory_space<vmem>>, %arg11: memref<2x32xf32, #tpu.memory_space<vmem>>) attributes {dimension_semantics = [], scalar_prefetch = 0 : i64, scratch_operands = 0 : i64, tpu.core_type = #tpu.core_type<tc>} {
    %c0 = arith.constant 0 : index
    %c0_0 = arith.constant 0 : index
    %0 = vector.load %arg0[%c0, %c0_0] : memref<16x6xf32, #tpu.memory_space<vmem>>, vector<16x6xf32>
    %c0_1 = arith.constant 0 : index
    %c0_2 = arith.constant 0 : index
    %1 = vector.load %arg1[%c0_1, %c0_2] : memref<6x32xf32, #tpu.memory_space<vmem>>, vector<6x32xf32>
    %cst = arith.constant dense<0.000000e+00> : vector<16x32xf32>
    %2 = tpu.matmul %0, %1, %cst {dimension_numbers = #tpu.dot_dimension_numbers<[1], [0], [0], [1], [0, 0, 1, 1], [], []>} : vector<16x6xf32>, vector<6x32xf32>, vector<16x32xf32> -> vector<16x32xf32>
    %c0_3 = arith.constant 0 : index
    %c0_4 = arith.constant 0 : index
    %3 = vector.load %arg2[%c0_3, %c0_4] : memref<1x32xf32, #tpu.memory_space<vmem>>, vector<1x32xf32>
    %4 = vector.broadcast %3 : vector<1x32xf32> to vector<16x32xf32>
    %5 = arith.addf %2, %4 : vector<16x32xf32>
    %c0_5 = arith.constant 0 : index
    %c0_6 = arith.constant 0 : index
    %6 = vector.load %arg3[%c0_5, %c0_6] : memref<32x96xf32, #tpu.memory_space<vmem>>, vector<32x96xf32>
    %cst_7 = arith.constant dense<0.000000e+00> : vector<16x96xf32>
    %7 = tpu.matmul %5, %6, %cst_7 {dimension_numbers = #tpu.dot_dimension_numbers<[1], [0], [0], [1], [0, 0, 1, 1], [], []>} : vector<16x32xf32>, vector<32x96xf32>, vector<16x96xf32> -> vector<16x96xf32>
    %c0_8 = arith.constant 0 : index
    %c0_9 = arith.constant 0 : index
    %8 = vector.load %arg4[%c0_8, %c0_9] : memref<1x96xf32, #tpu.memory_space<vmem>>, vector<1x96xf32>
    %9 = vector.broadcast %8 : vector<1x96xf32> to vector<16x96xf32>
    %10 = arith.addf %7, %9 : vector<16x96xf32>
    %11 = vector.shape_cast %10 : vector<16x96xf32> to vector<2x8x96xf32>
    %12 = tpu.iota {dimensions = array<i32: 0>} : vector<8x8xi32>
    %13 = tpu.iota {dimensions = array<i32: 1>} : vector<8x8xi32>
    %14 = arith.cmpi sge, %12, %13 : vector<8x8xi32>
    %15 = vector.shape_cast %14 : vector<8x8xi1> to vector<1x8x8xi1>
    %16 = arith.subi %12, %13 : vector<8x8xi32>
    %c7_i32 = arith.constant 7 : i32
    %17 = vector.broadcast %c7_i32 : i32 to vector<8x8xi32>
    %18 = arith.cmpi eq, %16, %17 : vector<8x8xi32>
    %19 = arith.extui %18 : vector<8x8xi1> to vector<8x8xi32>
    %20 = arith.sitofp %19 : vector<8x8xi32> to vector<8x8xf32>
    %21 = vector.shape_cast %20 : vector<8x8xf32> to vector<1x8x8xf32>
    %22 = arith.subi %12, %13 : vector<8x8xi32>
    %c6_i32 = arith.constant 6 : i32
    %23 = vector.broadcast %c6_i32 : i32 to vector<8x8xi32>
    %24 = arith.cmpi eq, %22, %23 : vector<8x8xi32>
    %25 = arith.extui %24 : vector<8x8xi1> to vector<8x8xi32>
    %26 = arith.sitofp %25 : vector<8x8xi32> to vector<8x8xf32>
    %27 = vector.shape_cast %26 : vector<8x8xf32> to vector<1x8x8xf32>
    %28 = arith.subi %12, %13 : vector<8x8xi32>
    %c5_i32 = arith.constant 5 : i32
    %29 = vector.broadcast %c5_i32 : i32 to vector<8x8xi32>
    %30 = arith.cmpi eq, %28, %29 : vector<8x8xi32>
    %31 = arith.extui %30 : vector<8x8xi1> to vector<8x8xi32>
    %32 = arith.sitofp %31 : vector<8x8xi32> to vector<8x8xf32>
    %33 = vector.shape_cast %32 : vector<8x8xf32> to vector<1x8x8xf32>
    %34 = arith.subi %12, %13 : vector<8x8xi32>
    %c4_i32 = arith.constant 4 : i32
    %35 = vector.broadcast %c4_i32 : i32 to vector<8x8xi32>
    %36 = arith.cmpi eq, %34, %35 : vector<8x8xi32>
    %37 = arith.extui %36 : vector<8x8xi1> to vector<8x8xi32>
    %38 = arith.sitofp %37 : vector<8x8xi32> to vector<8x8xf32>
    %39 = vector.shape_cast %38 : vector<8x8xf32> to vector<1x8x8xf32>
    %40 = arith.subi %12, %13 : vector<8x8xi32>
    %c3_i32 = arith.constant 3 : i32
    %41 = vector.broadcast %c3_i32 : i32 to vector<8x8xi32>
    %42 = arith.cmpi eq, %40, %41 : vector<8x8xi32>
    %43 = arith.extui %42 : vector<8x8xi1> to vector<8x8xi32>
    %44 = arith.sitofp %43 : vector<8x8xi32> to vector<8x8xf32>
    %45 = vector.shape_cast %44 : vector<8x8xf32> to vector<1x8x8xf32>
    %46 = arith.subi %12, %13 : vector<8x8xi32>
    %c2_i32 = arith.constant 2 : i32
    %47 = vector.broadcast %c2_i32 : i32 to vector<8x8xi32>
    %48 = arith.cmpi eq, %46, %47 : vector<8x8xi32>
    %49 = arith.extui %48 : vector<8x8xi1> to vector<8x8xi32>
    %50 = arith.sitofp %49 : vector<8x8xi32> to vector<8x8xf32>
    %51 = vector.shape_cast %50 : vector<8x8xf32> to vector<1x8x8xf32>
    %52 = arith.subi %12, %13 : vector<8x8xi32>
    %c1_i32 = arith.constant 1 : i32
    %53 = vector.broadcast %c1_i32 : i32 to vector<8x8xi32>
    %54 = arith.cmpi eq, %52, %53 : vector<8x8xi32>
    %55 = arith.extui %54 : vector<8x8xi1> to vector<8x8xi32>
    %56 = arith.sitofp %55 : vector<8x8xi32> to vector<8x8xf32>
    %57 = vector.shape_cast %56 : vector<8x8xf32> to vector<1x8x8xf32>
    %58 = arith.subi %12, %13 : vector<8x8xi32>
    %c0_i32 = arith.constant 0 : i32
    %59 = vector.broadcast %c0_i32 : i32 to vector<8x8xi32>
    %60 = arith.cmpi eq, %58, %59 : vector<8x8xi32>
    %61 = arith.extui %60 : vector<8x8xi1> to vector<8x8xi32>
    %62 = arith.sitofp %61 : vector<8x8xi32> to vector<8x8xf32>
    %63 = vector.shape_cast %62 : vector<8x8xf32> to vector<1x8x8xf32>
    %c0_10 = arith.constant 0 : index
    %c0_11 = arith.constant 0 : index
    %64 = vector.load %arg5[%c0_10, %c0_11] : memref<8x8xf32, #tpu.memory_space<vmem>>, vector<8x8xf32>
    %c0_12 = arith.constant 0 : index
    %c0_13 = arith.constant 0 : index
    %65 = vector.load %arg7[%c0_12, %c0_13] : memref<1x128xf32, #tpu.memory_space<vmem>>, vector<1x128xf32>
    %66 = vector.shape_cast %65 : vector<1x128xf32> to vector<1x128xf32>
    %67 = vector.broadcast %66 : vector<1x128xf32> to vector<16x128xf32>
    %68 = vector.extract_strided_slice %11 {offsets = [0, 0, 0], sizes = [2, 8, 8], strides = [1, 1, 1]} : vector<2x8x96xf32> to vector<2x8x8xf32>
    %69 = vector.extract_strided_slice %11 {offsets = [0, 0, 32], sizes = [2, 8, 8], strides = [1, 1, 1]} : vector<2x8x96xf32> to vector<2x8x8xf32>
    %70 = vector.extract_strided_slice %11 {offsets = [0, 0, 64], sizes = [2, 8, 8], strides = [1, 1, 1]} : vector<2x8x96xf32> to vector<2x8x8xf32>
    "tpu.trace_start"() <{level = 10 : i32, message = "bqd,bkd->bqk"}> : () -> ()
    %cst_14 = arith.constant dense<0.000000e+00> : vector<2x8x8xf32>
    %71 = tpu.matmul %68, %69, %cst_14 {dimension_numbers = #tpu.dot_dimension_numbers<[2], [2], [1], [1], [0, 0, 0, 1, 1, 1], [0], [0]>} : vector<2x8x8xf32>, vector<2x8x8xf32>, vector<2x8x8xf32> -> vector<2x8x8xf32>
    "tpu.trace_stop"() : () -> ()
    %72 = vector.shape_cast %68 : vector<2x8x8xf32> to vector<16x8xf32>
    %cst_15 = arith.constant dense<0.000000e+00> : vector<16x8xf32>
    %73 = tpu.matmul %72, %64, %cst_15 {dimension_numbers = #tpu.dot_dimension_numbers<[1], [0], [0], [1], [0, 0, 1, 1], [], []>} : vector<16x8xf32>, vector<8x8xf32>, vector<16x8xf32> -> vector<16x8xf32>
    %74 = vector.shape_cast %73 : vector<16x8xf32> to vector<2x8x8xf32>
    %cst_16 = arith.constant 0.000000e+00 : f32
    %75 = vector.broadcast %cst_16 : f32 to vector<2x8x8xf32>
    %76 = vector.extract_strided_slice %74 {offsets = [0, 0, 0], sizes = [2, 8, 1], strides = [1, 1, 1]} : vector<2x8x8xf32> to vector<2x8x1xf32>
    %77 = vector.broadcast %76 : vector<2x8x1xf32> to vector<2x8x8xf32>
    %78 = vector.broadcast %21 : vector<1x8x8xf32> to vector<2x8x8xf32>
    %79 = arith.mulf %77, %78 : vector<2x8x8xf32>
    %80 = arith.addf %75, %79 : vector<2x8x8xf32>
    %81 = vector.extract_strided_slice %74 {offsets = [0, 0, 1], sizes = [2, 8, 1], strides = [1, 1, 1]} : vector<2x8x8xf32> to vector<2x8x1xf32>
    %82 = vector.broadcast %81 : vector<2x8x1xf32> to vector<2x8x8xf32>
    %83 = vector.broadcast %27 : vector<1x8x8xf32> to vector<2x8x8xf32>
    %84 = arith.mulf %82, %83 : vector<2x8x8xf32>
    %85 = arith.addf %80, %84 : vector<2x8x8xf32>
    %86 = vector.extract_strided_slice %74 {offsets = [0, 0, 2], sizes = [2, 8, 1], strides = [1, 1, 1]} : vector<2x8x8xf32> to vector<2x8x1xf32>
    %87 = vector.broadcast %86 : vector<2x8x1xf32> to vector<2x8x8xf32>
    %88 = vector.broadcast %33 : vector<1x8x8xf32> to vector<2x8x8xf32>
    %89 = arith.mulf %87, %88 : vector<2x8x8xf32>
    %90 = arith.addf %85, %89 : vector<2x8x8xf32>
    %91 = vector.extract_strided_slice %74 {offsets = [0, 0, 3], sizes = [2, 8, 1], strides = [1, 1, 1]} : vector<2x8x8xf32> to vector<2x8x1xf32>
    %92 = vector.broadcast %91 : vector<2x8x1xf32> to vector<2x8x8xf32>
    %93 = vector.broadcast %39 : vector<1x8x8xf32> to vector<2x8x8xf32>
    %94 = arith.mulf %92, %93 : vector<2x8x8xf32>
    %95 = arith.addf %90, %94 : vector<2x8x8xf32>
    %96 = vector.extract_strided_slice %74 {offsets = [0, 0, 4], sizes = [2, 8, 1], strides = [1, 1, 1]} : vector<2x8x8xf32> to vector<2x8x1xf32>
    %97 = vector.broadcast %96 : vector<2x8x1xf32> to vector<2x8x8xf32>
    %98 = vector.broadcast %45 : vector<1x8x8xf32> to vector<2x8x8xf32>
    %99 = arith.mulf %97, %98 : vector<2x8x8xf32>
    %100 = arith.addf %95, %99 : vector<2x8x8xf32>
    %101 = vector.extract_strided_slice %74 {offsets = [0, 0, 5], sizes = [2, 8, 1], strides = [1, 1, 1]} : vector<2x8x8xf32> to vector<2x8x1xf32>
    %102 = vector.broadcast %101 : vector<2x8x1xf32> to vector<2x8x8xf32>
    %103 = vector.broadcast %51 : vector<1x8x8xf32> to vector<2x8x8xf32>
    %104 = arith.mulf %102, %103 : vector<2x8x8xf32>
    %105 = arith.addf %100, %104 : vector<2x8x8xf32>
    %106 = vector.extract_strided_slice %74 {offsets = [0, 0, 6], sizes = [2, 8, 1], strides = [1, 1, 1]} : vector<2x8x8xf32> to vector<2x8x1xf32>
    %107 = vector.broadcast %106 : vector<2x8x1xf32> to vector<2x8x8xf32>
    %108 = vector.broadcast %57 : vector<1x8x8xf32> to vector<2x8x8xf32>
    %109 = arith.mulf %107, %108 : vector<2x8x8xf32>
    %110 = arith.addf %105, %109 : vector<2x8x8xf32>
    %111 = vector.extract_strided_slice %74 {offsets = [0, 0, 7], sizes = [2, 8, 1], strides = [1, 1, 1]} : vector<2x8x8xf32> to vector<2x8x1xf32>
    %112 = vector.broadcast %111 : vector<2x8x1xf32> to vector<2x8x8xf32>
    %113 = vector.broadcast %63 : vector<1x8x8xf32> to vector<2x8x8xf32>
    %114 = arith.mulf %112, %113 : vector<2x8x8xf32>
    %115 = arith.addf %110, %114 : vector<2x8x8xf32>
    %116 = arith.addf %71, %115 : vector<2x8x8xf32>
    %cst_17 = arith.constant -1.000000e+30 : f32
    %117 = vector.shape_cast %15 : vector<1x8x8xi1> to vector<1x8x8xi1>
    %118 = vector.broadcast %117 : vector<1x8x8xi1> to vector<2x8x8xi1>
    %119 = vector.broadcast %cst_17 : f32 to vector<2x8x8xf32>
    %120 = arith.select %118, %116, %119 : vector<2x8x8xi1>, vector<2x8x8xf32>
    %cst_18 = arith.constant dense<0xFF800000> : vector<2x8xf32>
    %121 = vector.multi_reduction <maximumf>, %120, %cst_18 [2] : vector<2x8x8xf32> to vector<2x8xf32>
    %122 = vector.shape_cast %121 : vector<2x8xf32> to vector<2x8x1xf32>
    %123 = vector.broadcast %122 : vector<2x8x1xf32> to vector<2x8x8xf32>
    %124 = arith.subf %120, %123 : vector<2x8x8xf32>
    %125 = math.exp %124 : vector<2x8x8xf32>
    %cst_19 = arith.constant dense<0.000000e+00> : vector<2x8xf32>
    %126 = vector.multi_reduction <add>, %125, %cst_19 [2] : vector<2x8x8xf32> to vector<2x8xf32>
    %127 = vector.shape_cast %126 : vector<2x8xf32> to vector<2x8x1xf32>
    %128 = vector.broadcast %127 : vector<2x8x1xf32> to vector<2x8x8xf32>
    %129 = arith.divf %125, %128 : vector<2x8x8xf32>
    "tpu.trace_start"() <{level = 10 : i32, message = "bqk,bkd->bqd"}> : () -> ()
    %cst_20 = arith.constant dense<0.000000e+00> : vector<2x8x8xf32>
    %130 = tpu.matmul %129, %70, %cst_20 {dimension_numbers = #tpu.dot_dimension_numbers<[2], [1], [1], [2], [0, 0, 0, 1, 1, 2], [0], [0]>} : vector<2x8x8xf32>, vector<2x8x8xf32>, vector<2x8x8xf32> -> vector<2x8x8xf32>
    "tpu.trace_stop"() : () -> ()
    %131 = vector.shape_cast %130 : vector<2x8x8xf32> to vector<16x8xf32>
    %c0_21 = arith.constant 0 : index
    %c0_22 = arith.constant 0 : index
    %132 = vector.load %arg6[%c0_21, %c0_22] : memref<32x128xf32, #tpu.memory_space<vmem>>, vector<8x128xf32>
    %cst_23 = arith.constant dense<0.000000e+00> : vector<16x128xf32>
    %133 = tpu.matmul %131, %132, %cst_23 {dimension_numbers = #tpu.dot_dimension_numbers<[1], [0], [0], [1], [0, 0, 1, 1], [], []>} : vector<16x8xf32>, vector<8x128xf32>, vector<16x128xf32> -> vector<16x128xf32>
    %134 = arith.addf %67, %133 : vector<16x128xf32>
    %135 = vector.extract_strided_slice %11 {offsets = [0, 0, 8], sizes = [2, 8, 8], strides = [1, 1, 1]} : vector<2x8x96xf32> to vector<2x8x8xf32>
    %136 = vector.extract_strided_slice %11 {offsets = [0, 0, 40], sizes = [2, 8, 8], strides = [1, 1, 1]} : vector<2x8x96xf32> to vector<2x8x8xf32>
    %137 = vector.extract_strided_slice %11 {offsets = [0, 0, 72], sizes = [2, 8, 8], strides = [1, 1, 1]} : vector<2x8x96xf32> to vector<2x8x8xf32>
    "tpu.trace_start"() <{level = 10 : i32, message = "bqd,bkd->bqk"}> : () -> ()
    %cst_24 = arith.constant dense<0.000000e+00> : vector<2x8x8xf32>
    %138 = tpu.matmul %135, %136, %cst_24 {dimension_numbers = #tpu.dot_dimension_numbers<[2], [2], [1], [1], [0, 0, 0, 1, 1, 1], [0], [0]>} : vector<2x8x8xf32>, vector<2x8x8xf32>, vector<2x8x8xf32> -> vector<2x8x8xf32>
    "tpu.trace_stop"() : () -> ()
    %139 = vector.shape_cast %135 : vector<2x8x8xf32> to vector<16x8xf32>
    %cst_25 = arith.constant dense<0.000000e+00> : vector<16x8xf32>
    %140 = tpu.matmul %139, %64, %cst_25 {dimension_numbers = #tpu.dot_dimension_numbers<[1], [0], [0], [1], [0, 0, 1, 1], [], []>} : vector<16x8xf32>, vector<8x8xf32>, vector<16x8xf32> -> vector<16x8xf32>
    %141 = vector.shape_cast %140 : vector<16x8xf32> to vector<2x8x8xf32>
    %cst_26 = arith.constant 0.000000e+00 : f32
    %142 = vector.broadcast %cst_26 : f32 to vector<2x8x8xf32>
    %143 = vector.extract_strided_slice %141 {offsets = [0, 0, 0], sizes = [2, 8, 1], strides = [1, 1, 1]} : vector<2x8x8xf32> to vector<2x8x1xf32>
    %144 = vector.broadcast %143 : vector<2x8x1xf32> to vector<2x8x8xf32>
    %145 = vector.broadcast %21 : vector<1x8x8xf32> to vector<2x8x8xf32>
    %146 = arith.mulf %144, %145 : vector<2x8x8xf32>
    %147 = arith.addf %142, %146 : vector<2x8x8xf32>
    %148 = vector.extract_strided_slice %141 {offsets = [0, 0, 1], sizes = [2, 8, 1], strides = [1, 1, 1]} : vector<2x8x8xf32> to vector<2x8x1xf32>
    %149 = vector.broadcast %148 : vector<2x8x1xf32> to vector<2x8x8xf32>
    %150 = vector.broadcast %27 : vector<1x8x8xf32> to vector<2x8x8xf32>
    %151 = arith.mulf %149, %150 : vector<2x8x8xf32>
    %152 = arith.addf %147, %151 : vector<2x8x8xf32>
    %153 = vector.extract_strided_slice %141 {offsets = [0, 0, 2], sizes = [2, 8, 1], strides = [1, 1, 1]} : vector<2x8x8xf32> to vector<2x8x1xf32>
    %154 = vector.broadcast %153 : vector<2x8x1xf32> to vector<2x8x8xf32>
    %155 = vector.broadcast %33 : vector<1x8x8xf32> to vector<2x8x8xf32>
    %156 = arith.mulf %154, %155 : vector<2x8x8xf32>
    %157 = arith.addf %152, %156 : vector<2x8x8xf32>
    %158 = vector.extract_strided_slice %141 {offsets = [0, 0, 3], sizes = [2, 8, 1], strides = [1, 1, 1]} : vector<2x8x8xf32> to vector<2x8x1xf32>
    %159 = vector.broadcast %158 : vector<2x8x1xf32> to vector<2x8x8xf32>
    %160 = vector.broadcast %39 : vector<1x8x8xf32> to vector<2x8x8xf32>
    %161 = arith.mulf %159, %160 : vector<2x8x8xf32>
    %162 = arith.addf %157, %161 : vector<2x8x8xf32>
    %163 = vector.extract_strided_slice %141 {offsets = [0, 0, 4], sizes = [2, 8, 1], strides = [1, 1, 1]} : vector<2x8x8xf32> to vector<2x8x1xf32>
    %164 = vector.broadcast %163 : vector<2x8x1xf32> to vector<2x8x8xf32>
    %165 = vector.broadcast %45 : vector<1x8x8xf32> to vector<2x8x8xf32>
    %166 = arith.mulf %164, %165 : vector<2x8x8xf32>
    %167 = arith.addf %162, %166 : vector<2x8x8xf32>
    %168 = vector.extract_strided_slice %141 {offsets = [0, 0, 5], sizes = [2, 8, 1], strides = [1, 1, 1]} : vector<2x8x8xf32> to vector<2x8x1xf32>
    %169 = vector.broadcast %168 : vector<2x8x1xf32> to vector<2x8x8xf32>
    %170 = vector.broadcast %51 : vector<1x8x8xf32> to vector<2x8x8xf32>
    %171 = arith.mulf %169, %170 : vector<2x8x8xf32>
    %172 = arith.addf %167, %171 : vector<2x8x8xf32>
    %173 = vector.extract_strided_slice %141 {offsets = [0, 0, 6], sizes = [2, 8, 1], strides = [1, 1, 1]} : vector<2x8x8xf32> to vector<2x8x1xf32>
    %174 = vector.broadcast %173 : vector<2x8x1xf32> to vector<2x8x8xf32>
    %175 = vector.broadcast %57 : vector<1x8x8xf32> to vector<2x8x8xf32>
    %176 = arith.mulf %174, %175 : vector<2x8x8xf32>
    %177 = arith.addf %172, %176 : vector<2x8x8xf32>
    %178 = vector.extract_strided_slice %141 {offsets = [0, 0, 7], sizes = [2, 8, 1], strides = [1, 1, 1]} : vector<2x8x8xf32> to vector<2x8x1xf32>
    %179 = vector.broadcast %178 : vector<2x8x1xf32> to vector<2x8x8xf32>
    %180 = vector.broadcast %63 : vector<1x8x8xf32> to vector<2x8x8xf32>
    %181 = arith.mulf %179, %180 : vector<2x8x8xf32>
    %182 = arith.addf %177, %181 : vector<2x8x8xf32>
    %183 = arith.addf %138, %182 : vector<2x8x8xf32>
    %cst_27 = arith.constant -1.000000e+30 : f32
    %184 = vector.shape_cast %15 : vector<1x8x8xi1> to vector<1x8x8xi1>
    %185 = vector.broadcast %184 : vector<1x8x8xi1> to vector<2x8x8xi1>
    %186 = vector.broadcast %cst_27 : f32 to vector<2x8x8xf32>
    %187 = arith.select %185, %183, %186 : vector<2x8x8xi1>, vector<2x8x8xf32>
    %cst_28 = arith.constant dense<0xFF800000> : vector<2x8xf32>
    %188 = vector.multi_reduction <maximumf>, %187, %cst_28 [2] : vector<2x8x8xf32> to vector<2x8xf32>
    %189 = vector.shape_cast %188 : vector<2x8xf32> to vector<2x8x1xf32>
    %190 = vector.broadcast %189 : vector<2x8x1xf32> to vector<2x8x8xf32>
    %191 = arith.subf %187, %190 : vector<2x8x8xf32>
    %192 = math.exp %191 : vector<2x8x8xf32>
    %cst_29 = arith.constant dense<0.000000e+00> : vector<2x8xf32>
    %193 = vector.multi_reduction <add>, %192, %cst_29 [2] : vector<2x8x8xf32> to vector<2x8xf32>
    %194 = vector.shape_cast %193 : vector<2x8xf32> to vector<2x8x1xf32>
    %195 = vector.broadcast %194 : vector<2x8x1xf32> to vector<2x8x8xf32>
    %196 = arith.divf %192, %195 : vector<2x8x8xf32>
    "tpu.trace_start"() <{level = 10 : i32, message = "bqk,bkd->bqd"}> : () -> ()
    %cst_30 = arith.constant dense<0.000000e+00> : vector<2x8x8xf32>
    %197 = tpu.matmul %196, %137, %cst_30 {dimension_numbers = #tpu.dot_dimension_numbers<[2], [1], [1], [2], [0, 0, 0, 1, 1, 2], [0], [0]>} : vector<2x8x8xf32>, vector<2x8x8xf32>, vector<2x8x8xf32> -> vector<2x8x8xf32>
    "tpu.trace_stop"() : () -> ()
    %198 = vector.shape_cast %197 : vector<2x8x8xf32> to vector<16x8xf32>
    %c8 = arith.constant 8 : index
    %c0_31 = arith.constant 0 : index
    %199 = vector.load %arg6[%c8, %c0_31] : memref<32x128xf32, #tpu.memory_space<vmem>>, vector<8x128xf32>
    %cst_32 = arith.constant dense<0.000000e+00> : vector<16x128xf32>
    %200 = tpu.matmul %198, %199, %cst_32 {dimension_numbers = #tpu.dot_dimension_numbers<[1], [0], [0], [1], [0, 0, 1, 1], [], []>} : vector<16x8xf32>, vector<8x128xf32>, vector<16x128xf32> -> vector<16x128xf32>
    %201 = arith.addf %134, %200 : vector<16x128xf32>
    %202 = vector.extract_strided_slice %11 {offsets = [0, 0, 16], sizes = [2, 8, 8], strides = [1, 1, 1]} : vector<2x8x96xf32> to vector<2x8x8xf32>
    %203 = vector.extract_strided_slice %11 {offsets = [0, 0, 48], sizes = [2, 8, 8], strides = [1, 1, 1]} : vector<2x8x96xf32> to vector<2x8x8xf32>
    %204 = vector.extract_strided_slice %11 {offsets = [0, 0, 80], sizes = [2, 8, 8], strides = [1, 1, 1]} : vector<2x8x96xf32> to vector<2x8x8xf32>
    "tpu.trace_start"() <{level = 10 : i32, message = "bqd,bkd->bqk"}> : () -> ()
    %cst_33 = arith.constant dense<0.000000e+00> : vector<2x8x8xf32>
    %205 = tpu.matmul %202, %203, %cst_33 {dimension_numbers = #tpu.dot_dimension_numbers<[2], [2], [1], [1], [0, 0, 0, 1, 1, 1], [0], [0]>} : vector<2x8x8xf32>, vector<2x8x8xf32>, vector<2x8x8xf32> -> vector<2x8x8xf32>
    "tpu.trace_stop"() : () -> ()
    %206 = vector.shape_cast %202 : vector<2x8x8xf32> to vector<16x8xf32>
    %cst_34 = arith.constant dense<0.000000e+00> : vector<16x8xf32>
    %207 = tpu.matmul %206, %64, %cst_34 {dimension_numbers = #tpu.dot_dimension_numbers<[1], [0], [0], [1], [0, 0, 1, 1], [], []>} : vector<16x8xf32>, vector<8x8xf32>, vector<16x8xf32> -> vector<16x8xf32>
    %208 = vector.shape_cast %207 : vector<16x8xf32> to vector<2x8x8xf32>
    %cst_35 = arith.constant 0.000000e+00 : f32
    %209 = vector.broadcast %cst_35 : f32 to vector<2x8x8xf32>
    %210 = vector.extract_strided_slice %208 {offsets = [0, 0, 0], sizes = [2, 8, 1], strides = [1, 1, 1]} : vector<2x8x8xf32> to vector<2x8x1xf32>
    %211 = vector.broadcast %210 : vector<2x8x1xf32> to vector<2x8x8xf32>
    %212 = vector.broadcast %21 : vector<1x8x8xf32> to vector<2x8x8xf32>
    %213 = arith.mulf %211, %212 : vector<2x8x8xf32>
    %214 = arith.addf %209, %213 : vector<2x8x8xf32>
    %215 = vector.extract_strided_slice %208 {offsets = [0, 0, 1], sizes = [2, 8, 1], strides = [1, 1, 1]} : vector<2x8x8xf32> to vector<2x8x1xf32>
    %216 = vector.broadcast %215 : vector<2x8x1xf32> to vector<2x8x8xf32>
    %217 = vector.broadcast %27 : vector<1x8x8xf32> to vector<2x8x8xf32>
    %218 = arith.mulf %216, %217 : vector<2x8x8xf32>
    %219 = arith.addf %214, %218 : vector<2x8x8xf32>
    %220 = vector.extract_strided_slice %208 {offsets = [0, 0, 2], sizes = [2, 8, 1], strides = [1, 1, 1]} : vector<2x8x8xf32> to vector<2x8x1xf32>
    %221 = vector.broadcast %220 : vector<2x8x1xf32> to vector<2x8x8xf32>
    %222 = vector.broadcast %33 : vector<1x8x8xf32> to vector<2x8x8xf32>
    %223 = arith.mulf %221, %222 : vector<2x8x8xf32>
    %224 = arith.addf %219, %223 : vector<2x8x8xf32>
    %225 = vector.extract_strided_slice %208 {offsets = [0, 0, 3], sizes = [2, 8, 1], strides = [1, 1, 1]} : vector<2x8x8xf32> to vector<2x8x1xf32>
    %226 = vector.broadcast %225 : vector<2x8x1xf32> to vector<2x8x8xf32>
    %227 = vector.broadcast %39 : vector<1x8x8xf32> to vector<2x8x8xf32>
    %228 = arith.mulf %226, %227 : vector<2x8x8xf32>
    %229 = arith.addf %224, %228 : vector<2x8x8xf32>
    %230 = vector.extract_strided_slice %208 {offsets = [0, 0, 4], sizes = [2, 8, 1], strides = [1, 1, 1]} : vector<2x8x8xf32> to vector<2x8x1xf32>
    %231 = vector.broadcast %230 : vector<2x8x1xf32> to vector<2x8x8xf32>
    %232 = vector.broadcast %45 : vector<1x8x8xf32> to vector<2x8x8xf32>
    %233 = arith.mulf %231, %232 : vector<2x8x8xf32>
    %234 = arith.addf %229, %233 : vector<2x8x8xf32>
    %235 = vector.extract_strided_slice %208 {offsets = [0, 0, 5], sizes = [2, 8, 1], strides = [1, 1, 1]} : vector<2x8x8xf32> to vector<2x8x1xf32>
    %236 = vector.broadcast %235 : vector<2x8x1xf32> to vector<2x8x8xf32>
    %237 = vector.broadcast %51 : vector<1x8x8xf32> to vector<2x8x8xf32>
    %238 = arith.mulf %236, %237 : vector<2x8x8xf32>
    %239 = arith.addf %234, %238 : vector<2x8x8xf32>
    %240 = vector.extract_strided_slice %208 {offsets = [0, 0, 6], sizes = [2, 8, 1], strides = [1, 1, 1]} : vector<2x8x8xf32> to vector<2x8x1xf32>
    %241 = vector.broadcast %240 : vector<2x8x1xf32> to vector<2x8x8xf32>
    %242 = vector.broadcast %57 : vector<1x8x8xf32> to vector<2x8x8xf32>
    %243 = arith.mulf %241, %242 : vector<2x8x8xf32>
    %244 = arith.addf %239, %243 : vector<2x8x8xf32>
    %245 = vector.extract_strided_slice %208 {offsets = [0, 0, 7], sizes = [2, 8, 1], strides = [1, 1, 1]} : vector<2x8x8xf32> to vector<2x8x1xf32>
    %246 = vector.broadcast %245 : vector<2x8x1xf32> to vector<2x8x8xf32>
    %247 = vector.broadcast %63 : vector<1x8x8xf32> to vector<2x8x8xf32>
    %248 = arith.mulf %246, %247 : vector<2x8x8xf32>
    %249 = arith.addf %244, %248 : vector<2x8x8xf32>
    %250 = arith.addf %205, %249 : vector<2x8x8xf32>
    %cst_36 = arith.constant -1.000000e+30 : f32
    %251 = vector.shape_cast %15 : vector<1x8x8xi1> to vector<1x8x8xi1>
    %252 = vector.broadcast %251 : vector<1x8x8xi1> to vector<2x8x8xi1>
    %253 = vector.broadcast %cst_36 : f32 to vector<2x8x8xf32>
    %254 = arith.select %252, %250, %253 : vector<2x8x8xi1>, vector<2x8x8xf32>
    %cst_37 = arith.constant dense<0xFF800000> : vector<2x8xf32>
    %255 = vector.multi_reduction <maximumf>, %254, %cst_37 [2] : vector<2x8x8xf32> to vector<2x8xf32>
    %256 = vector.shape_cast %255 : vector<2x8xf32> to vector<2x8x1xf32>
    %257 = vector.broadcast %256 : vector<2x8x1xf32> to vector<2x8x8xf32>
    %258 = arith.subf %254, %257 : vector<2x8x8xf32>
    %259 = math.exp %258 : vector<2x8x8xf32>
    %cst_38 = arith.constant dense<0.000000e+00> : vector<2x8xf32>
    %260 = vector.multi_reduction <add>, %259, %cst_38 [2] : vector<2x8x8xf32> to vector<2x8xf32>
    %261 = vector.shape_cast %260 : vector<2x8xf32> to vector<2x8x1xf32>
    %262 = vector.broadcast %261 : vector<2x8x1xf32> to vector<2x8x8xf32>
    %263 = arith.divf %259, %262 : vector<2x8x8xf32>
    "tpu.trace_start"() <{level = 10 : i32, message = "bqk,bkd->bqd"}> : () -> ()
    %cst_39 = arith.constant dense<0.000000e+00> : vector<2x8x8xf32>
    %264 = tpu.matmul %263, %204, %cst_39 {dimension_numbers = #tpu.dot_dimension_numbers<[2], [1], [1], [2], [0, 0, 0, 1, 1, 2], [0], [0]>} : vector<2x8x8xf32>, vector<2x8x8xf32>, vector<2x8x8xf32> -> vector<2x8x8xf32>
    "tpu.trace_stop"() : () -> ()
    %265 = vector.shape_cast %264 : vector<2x8x8xf32> to vector<16x8xf32>
    %c16 = arith.constant 16 : index
    %c0_40 = arith.constant 0 : index
    %266 = vector.load %arg6[%c16, %c0_40] : memref<32x128xf32, #tpu.memory_space<vmem>>, vector<8x128xf32>
    %cst_41 = arith.constant dense<0.000000e+00> : vector<16x128xf32>
    %267 = tpu.matmul %265, %266, %cst_41 {dimension_numbers = #tpu.dot_dimension_numbers<[1], [0], [0], [1], [0, 0, 1, 1], [], []>} : vector<16x8xf32>, vector<8x128xf32>, vector<16x128xf32> -> vector<16x128xf32>
    %268 = arith.addf %201, %267 : vector<16x128xf32>
    %269 = vector.extract_strided_slice %11 {offsets = [0, 0, 24], sizes = [2, 8, 8], strides = [1, 1, 1]} : vector<2x8x96xf32> to vector<2x8x8xf32>
    %270 = vector.extract_strided_slice %11 {offsets = [0, 0, 56], sizes = [2, 8, 8], strides = [1, 1, 1]} : vector<2x8x96xf32> to vector<2x8x8xf32>
    %271 = vector.extract_strided_slice %11 {offsets = [0, 0, 88], sizes = [2, 8, 8], strides = [1, 1, 1]} : vector<2x8x96xf32> to vector<2x8x8xf32>
    "tpu.trace_start"() <{level = 10 : i32, message = "bqd,bkd->bqk"}> : () -> ()
    %cst_42 = arith.constant dense<0.000000e+00> : vector<2x8x8xf32>
    %272 = tpu.matmul %269, %270, %cst_42 {dimension_numbers = #tpu.dot_dimension_numbers<[2], [2], [1], [1], [0, 0, 0, 1, 1, 1], [0], [0]>} : vector<2x8x8xf32>, vector<2x8x8xf32>, vector<2x8x8xf32> -> vector<2x8x8xf32>
    "tpu.trace_stop"() : () -> ()
    %273 = vector.shape_cast %269 : vector<2x8x8xf32> to vector<16x8xf32>
    %cst_43 = arith.constant dense<0.000000e+00> : vector<16x8xf32>
    %274 = tpu.matmul %273, %64, %cst_43 {dimension_numbers = #tpu.dot_dimension_numbers<[1], [0], [0], [1], [0, 0, 1, 1], [], []>} : vector<16x8xf32>, vector<8x8xf32>, vector<16x8xf32> -> vector<16x8xf32>
    %275 = vector.shape_cast %274 : vector<16x8xf32> to vector<2x8x8xf32>
    %cst_44 = arith.constant 0.000000e+00 : f32
    %276 = vector.broadcast %cst_44 : f32 to vector<2x8x8xf32>
    %277 = vector.extract_strided_slice %275 {offsets = [0, 0, 0], sizes = [2, 8, 1], strides = [1, 1, 1]} : vector<2x8x8xf32> to vector<2x8x1xf32>
    %278 = vector.broadcast %277 : vector<2x8x1xf32> to vector<2x8x8xf32>
    %279 = vector.broadcast %21 : vector<1x8x8xf32> to vector<2x8x8xf32>
    %280 = arith.mulf %278, %279 : vector<2x8x8xf32>
    %281 = arith.addf %276, %280 : vector<2x8x8xf32>
    %282 = vector.extract_strided_slice %275 {offsets = [0, 0, 1], sizes = [2, 8, 1], strides = [1, 1, 1]} : vector<2x8x8xf32> to vector<2x8x1xf32>
    %283 = vector.broadcast %282 : vector<2x8x1xf32> to vector<2x8x8xf32>
    %284 = vector.broadcast %27 : vector<1x8x8xf32> to vector<2x8x8xf32>
    %285 = arith.mulf %283, %284 : vector<2x8x8xf32>
    %286 = arith.addf %281, %285 : vector<2x8x8xf32>
    %287 = vector.extract_strided_slice %275 {offsets = [0, 0, 2], sizes = [2, 8, 1], strides = [1, 1, 1]} : vector<2x8x8xf32> to vector<2x8x1xf32>
    %288 = vector.broadcast %287 : vector<2x8x1xf32> to vector<2x8x8xf32>
    %289 = vector.broadcast %33 : vector<1x8x8xf32> to vector<2x8x8xf32>
    %290 = arith.mulf %288, %289 : vector<2x8x8xf32>
    %291 = arith.addf %286, %290 : vector<2x8x8xf32>
    %292 = vector.extract_strided_slice %275 {offsets = [0, 0, 3], sizes = [2, 8, 1], strides = [1, 1, 1]} : vector<2x8x8xf32> to vector<2x8x1xf32>
    %293 = vector.broadcast %292 : vector<2x8x1xf32> to vector<2x8x8xf32>
    %294 = vector.broadcast %39 : vector<1x8x8xf32> to vector<2x8x8xf32>
    %295 = arith.mulf %293, %294 : vector<2x8x8xf32>
    %296 = arith.addf %291, %295 : vector<2x8x8xf32>
    %297 = vector.extract_strided_slice %275 {offsets = [0, 0, 4], sizes = [2, 8, 1], strides = [1, 1, 1]} : vector<2x8x8xf32> to vector<2x8x1xf32>
    %298 = vector.broadcast %297 : vector<2x8x1xf32> to vector<2x8x8xf32>
    %299 = vector.broadcast %45 : vector<1x8x8xf32> to vector<2x8x8xf32>
    %300 = arith.mulf %298, %299 : vector<2x8x8xf32>
    %301 = arith.addf %296, %300 : vector<2x8x8xf32>
    %302 = vector.extract_strided_slice %275 {offsets = [0, 0, 5], sizes = [2, 8, 1], strides = [1, 1, 1]} : vector<2x8x8xf32> to vector<2x8x1xf32>
    %303 = vector.broadcast %302 : vector<2x8x1xf32> to vector<2x8x8xf32>
    %304 = vector.broadcast %51 : vector<1x8x8xf32> to vector<2x8x8xf32>
    %305 = arith.mulf %303, %304 : vector<2x8x8xf32>
    %306 = arith.addf %301, %305 : vector<2x8x8xf32>
    %307 = vector.extract_strided_slice %275 {offsets = [0, 0, 6], sizes = [2, 8, 1], strides = [1, 1, 1]} : vector<2x8x8xf32> to vector<2x8x1xf32>
    %308 = vector.broadcast %307 : vector<2x8x1xf32> to vector<2x8x8xf32>
    %309 = vector.broadcast %57 : vector<1x8x8xf32> to vector<2x8x8xf32>
    %310 = arith.mulf %308, %309 : vector<2x8x8xf32>
    %311 = arith.addf %306, %310 : vector<2x8x8xf32>
    %312 = vector.extract_strided_slice %275 {offsets = [0, 0, 7], sizes = [2, 8, 1], strides = [1, 1, 1]} : vector<2x8x8xf32> to vector<2x8x1xf32>
    %313 = vector.broadcast %312 : vector<2x8x1xf32> to vector<2x8x8xf32>
    %314 = vector.broadcast %63 : vector<1x8x8xf32> to vector<2x8x8xf32>
    %315 = arith.mulf %313, %314 : vector<2x8x8xf32>
    %316 = arith.addf %311, %315 : vector<2x8x8xf32>
    %317 = arith.addf %272, %316 : vector<2x8x8xf32>
    %cst_45 = arith.constant -1.000000e+30 : f32
    %318 = vector.shape_cast %15 : vector<1x8x8xi1> to vector<1x8x8xi1>
    %319 = vector.broadcast %318 : vector<1x8x8xi1> to vector<2x8x8xi1>
    %320 = vector.broadcast %cst_45 : f32 to vector<2x8x8xf32>
    %321 = arith.select %319, %317, %320 : vector<2x8x8xi1>, vector<2x8x8xf32>
    %cst_46 = arith.constant dense<0xFF800000> : vector<2x8xf32>
    %322 = vector.multi_reduction <maximumf>, %321, %cst_46 [2] : vector<2x8x8xf32> to vector<2x8xf32>
    %323 = vector.shape_cast %322 : vector<2x8xf32> to vector<2x8x1xf32>
    %324 = vector.broadcast %323 : vector<2x8x1xf32> to vector<2x8x8xf32>
    %325 = arith.subf %321, %324 : vector<2x8x8xf32>
    %326 = math.exp %325 : vector<2x8x8xf32>
    %cst_47 = arith.constant dense<0.000000e+00> : vector<2x8xf32>
    %327 = vector.multi_reduction <add>, %326, %cst_47 [2] : vector<2x8x8xf32> to vector<2x8xf32>
    %328 = vector.shape_cast %327 : vector<2x8xf32> to vector<2x8x1xf32>
    %329 = vector.broadcast %328 : vector<2x8x1xf32> to vector<2x8x8xf32>
    %330 = arith.divf %326, %329 : vector<2x8x8xf32>
    "tpu.trace_start"() <{level = 10 : i32, message = "bqk,bkd->bqd"}> : () -> ()
    %cst_48 = arith.constant dense<0.000000e+00> : vector<2x8x8xf32>
    %331 = tpu.matmul %330, %271, %cst_48 {dimension_numbers = #tpu.dot_dimension_numbers<[2], [1], [1], [2], [0, 0, 0, 1, 1, 2], [0], [0]>} : vector<2x8x8xf32>, vector<2x8x8xf32>, vector<2x8x8xf32> -> vector<2x8x8xf32>
    "tpu.trace_stop"() : () -> ()
    %332 = vector.shape_cast %331 : vector<2x8x8xf32> to vector<16x8xf32>
    %c24 = arith.constant 24 : index
    %c0_49 = arith.constant 0 : index
    %333 = vector.load %arg6[%c24, %c0_49] : memref<32x128xf32, #tpu.memory_space<vmem>>, vector<8x128xf32>
    %cst_50 = arith.constant dense<0.000000e+00> : vector<16x128xf32>
    %334 = tpu.matmul %332, %333, %cst_50 {dimension_numbers = #tpu.dot_dimension_numbers<[1], [0], [0], [1], [0, 0, 1, 1], [], []>} : vector<16x8xf32>, vector<8x128xf32>, vector<16x128xf32> -> vector<16x128xf32>
    %335 = arith.addf %268, %334 : vector<16x128xf32>
    %336 = vector.shape_cast %335 : vector<16x128xf32> to vector<2x8x128xf32>
    %c0_51 = arith.constant 0 : index
    %c0_52 = arith.constant 0 : index
    %337 = vector.load %arg8[%c0_51, %c0_52] : memref<32x128xf32, #tpu.memory_space<vmem>>, vector<32x128xf32>
    %cst_53 = arith.constant 0.000000e+00 : f32
    %338 = vector.broadcast %cst_53 : f32 to vector<2x32xf32>
    %cst_54 = arith.constant 0.000000e+00 : f32
    %339 = vector.broadcast %cst_54 : f32 to vector<2x32xf32>
    %340 = vector.extract_strided_slice %336 {offsets = [0, 0, 0], sizes = [2, 1, 128], strides = [1, 1, 1]} : vector<2x8x128xf32> to vector<2x1x128xf32>
    %341 = vector.shape_cast %340 : vector<2x1x128xf32> to vector<2x128xf32>
    %cst_55 = arith.constant dense<0.000000e+00> : vector<2x128xf32>
    %342 = tpu.matmul %338, %337, %cst_55 {dimension_numbers = #tpu.dot_dimension_numbers<[1], [0], [0], [1], [0, 0, 1, 1], [], []>} : vector<2x32xf32>, vector<32x128xf32>, vector<2x128xf32> -> vector<2x128xf32>
    %343 = arith.addf %341, %342 : vector<2x128xf32>
    %344 = vector.extract_strided_slice %343 {offsets = [0, 0], sizes = [2, 32], strides = [1, 1]} : vector<2x128xf32> to vector<2x32xf32>
    %345 = arith.negf %344 : vector<2x32xf32>
    %346 = math.exp %345 : vector<2x32xf32>
    %cst_56 = arith.constant 1.000000e+00 : f32
    %347 = vector.broadcast %cst_56 : f32 to vector<2x32xf32>
    %348 = arith.addf %347, %346 : vector<2x32xf32>
    %349 = arith.divf %347, %348 : vector<2x32xf32>
    %350 = vector.extract_strided_slice %343 {offsets = [0, 32], sizes = [2, 32], strides = [1, 1]} : vector<2x128xf32> to vector<2x32xf32>
    %351 = arith.negf %350 : vector<2x32xf32>
    %352 = math.exp %351 : vector<2x32xf32>
    %cst_57 = arith.constant 1.000000e+00 : f32
    %353 = vector.broadcast %cst_57 : f32 to vector<2x32xf32>
    %354 = arith.addf %353, %352 : vector<2x32xf32>
    %355 = arith.divf %353, %354 : vector<2x32xf32>
    %356 = vector.extract_strided_slice %343 {offsets = [0, 64], sizes = [2, 32], strides = [1, 1]} : vector<2x128xf32> to vector<2x32xf32>
    %357 = math.tanh %356 : vector<2x32xf32>
    %358 = vector.extract_strided_slice %343 {offsets = [0, 96], sizes = [2, 32], strides = [1, 1]} : vector<2x128xf32> to vector<2x32xf32>
    %359 = arith.negf %358 : vector<2x32xf32>
    %360 = math.exp %359 : vector<2x32xf32>
    %cst_58 = arith.constant 1.000000e+00 : f32
    %361 = vector.broadcast %cst_58 : f32 to vector<2x32xf32>
    %362 = arith.addf %361, %360 : vector<2x32xf32>
    %363 = arith.divf %361, %362 : vector<2x32xf32>
    %364 = arith.mulf %355, %339 : vector<2x32xf32>
    %365 = arith.mulf %349, %357 : vector<2x32xf32>
    %366 = arith.addf %364, %365 : vector<2x32xf32>
    %367 = math.tanh %366 : vector<2x32xf32>
    %368 = arith.mulf %363, %367 : vector<2x32xf32>
    %369 = vector.extract_strided_slice %336 {offsets = [0, 1, 0], sizes = [2, 1, 128], strides = [1, 1, 1]} : vector<2x8x128xf32> to vector<2x1x128xf32>
    %370 = vector.shape_cast %369 : vector<2x1x128xf32> to vector<2x128xf32>
    %cst_59 = arith.constant dense<0.000000e+00> : vector<2x128xf32>
    %371 = tpu.matmul %368, %337, %cst_59 {dimension_numbers = #tpu.dot_dimension_numbers<[1], [0], [0], [1], [0, 0, 1, 1], [], []>} : vector<2x32xf32>, vector<32x128xf32>, vector<2x128xf32> -> vector<2x128xf32>
    %372 = arith.addf %370, %371 : vector<2x128xf32>
    %373 = vector.extract_strided_slice %372 {offsets = [0, 0], sizes = [2, 32], strides = [1, 1]} : vector<2x128xf32> to vector<2x32xf32>
    %374 = arith.negf %373 : vector<2x32xf32>
    %375 = math.exp %374 : vector<2x32xf32>
    %cst_60 = arith.constant 1.000000e+00 : f32
    %376 = vector.broadcast %cst_60 : f32 to vector<2x32xf32>
    %377 = arith.addf %376, %375 : vector<2x32xf32>
    %378 = arith.divf %376, %377 : vector<2x32xf32>
    %379 = vector.extract_strided_slice %372 {offsets = [0, 32], sizes = [2, 32], strides = [1, 1]} : vector<2x128xf32> to vector<2x32xf32>
    %380 = arith.negf %379 : vector<2x32xf32>
    %381 = math.exp %380 : vector<2x32xf32>
    %cst_61 = arith.constant 1.000000e+00 : f32
    %382 = vector.broadcast %cst_61 : f32 to vector<2x32xf32>
    %383 = arith.addf %382, %381 : vector<2x32xf32>
    %384 = arith.divf %382, %383 : vector<2x32xf32>
    %385 = vector.extract_strided_slice %372 {offsets = [0, 64], sizes = [2, 32], strides = [1, 1]} : vector<2x128xf32> to vector<2x32xf32>
    %386 = math.tanh %385 : vector<2x32xf32>
    %387 = vector.extract_strided_slice %372 {offsets = [0, 96], sizes = [2, 32], strides = [1, 1]} : vector<2x128xf32> to vector<2x32xf32>
    %388 = arith.negf %387 : vector<2x32xf32>
    %389 = math.exp %388 : vector<2x32xf32>
    %cst_62 = arith.constant 1.000000e+00 : f32
    %390 = vector.broadcast %cst_62 : f32 to vector<2x32xf32>
    %391 = arith.addf %390, %389 : vector<2x32xf32>
    %392 = arith.divf %390, %391 : vector<2x32xf32>
    %393 = arith.mulf %384, %366 : vector<2x32xf32>
    %394 = arith.mulf %378, %386 : vector<2x32xf32>
    %395 = arith.addf %393, %394 : vector<2x32xf32>
    %396 = math.tanh %395 : vector<2x32xf32>
    %397 = arith.mulf %392, %396 : vector<2x32xf32>
    %398 = vector.extract_strided_slice %336 {offsets = [0, 2, 0], sizes = [2, 1, 128], strides = [1, 1, 1]} : vector<2x8x128xf32> to vector<2x1x128xf32>
    %399 = vector.shape_cast %398 : vector<2x1x128xf32> to vector<2x128xf32>
    %cst_63 = arith.constant dense<0.000000e+00> : vector<2x128xf32>
    %400 = tpu.matmul %397, %337, %cst_63 {dimension_numbers = #tpu.dot_dimension_numbers<[1], [0], [0], [1], [0, 0, 1, 1], [], []>} : vector<2x32xf32>, vector<32x128xf32>, vector<2x128xf32> -> vector<2x128xf32>
    %401 = arith.addf %399, %400 : vector<2x128xf32>
    %402 = vector.extract_strided_slice %401 {offsets = [0, 0], sizes = [2, 32], strides = [1, 1]} : vector<2x128xf32> to vector<2x32xf32>
    %403 = arith.negf %402 : vector<2x32xf32>
    %404 = math.exp %403 : vector<2x32xf32>
    %cst_64 = arith.constant 1.000000e+00 : f32
    %405 = vector.broadcast %cst_64 : f32 to vector<2x32xf32>
    %406 = arith.addf %405, %404 : vector<2x32xf32>
    %407 = arith.divf %405, %406 : vector<2x32xf32>
    %408 = vector.extract_strided_slice %401 {offsets = [0, 32], sizes = [2, 32], strides = [1, 1]} : vector<2x128xf32> to vector<2x32xf32>
    %409 = arith.negf %408 : vector<2x32xf32>
    %410 = math.exp %409 : vector<2x32xf32>
    %cst_65 = arith.constant 1.000000e+00 : f32
    %411 = vector.broadcast %cst_65 : f32 to vector<2x32xf32>
    %412 = arith.addf %411, %410 : vector<2x32xf32>
    %413 = arith.divf %411, %412 : vector<2x32xf32>
    %414 = vector.extract_strided_slice %401 {offsets = [0, 64], sizes = [2, 32], strides = [1, 1]} : vector<2x128xf32> to vector<2x32xf32>
    %415 = math.tanh %414 : vector<2x32xf32>
    %416 = vector.extract_strided_slice %401 {offsets = [0, 96], sizes = [2, 32], strides = [1, 1]} : vector<2x128xf32> to vector<2x32xf32>
    %417 = arith.negf %416 : vector<2x32xf32>
    %418 = math.exp %417 : vector<2x32xf32>
    %cst_66 = arith.constant 1.000000e+00 : f32
    %419 = vector.broadcast %cst_66 : f32 to vector<2x32xf32>
    %420 = arith.addf %419, %418 : vector<2x32xf32>
    %421 = arith.divf %419, %420 : vector<2x32xf32>
    %422 = arith.mulf %413, %395 : vector<2x32xf32>
    %423 = arith.mulf %407, %415 : vector<2x32xf32>
    %424 = arith.addf %422, %423 : vector<2x32xf32>
    %425 = math.tanh %424 : vector<2x32xf32>
    %426 = arith.mulf %421, %425 : vector<2x32xf32>
    %427 = vector.extract_strided_slice %336 {offsets = [0, 3, 0], sizes = [2, 1, 128], strides = [1, 1, 1]} : vector<2x8x128xf32> to vector<2x1x128xf32>
    %428 = vector.shape_cast %427 : vector<2x1x128xf32> to vector<2x128xf32>
    %cst_67 = arith.constant dense<0.000000e+00> : vector<2x128xf32>
    %429 = tpu.matmul %426, %337, %cst_67 {dimension_numbers = #tpu.dot_dimension_numbers<[1], [0], [0], [1], [0, 0, 1, 1], [], []>} : vector<2x32xf32>, vector<32x128xf32>, vector<2x128xf32> -> vector<2x128xf32>
    %430 = arith.addf %428, %429 : vector<2x128xf32>
    %431 = vector.extract_strided_slice %430 {offsets = [0, 0], sizes = [2, 32], strides = [1, 1]} : vector<2x128xf32> to vector<2x32xf32>
    %432 = arith.negf %431 : vector<2x32xf32>
    %433 = math.exp %432 : vector<2x32xf32>
    %cst_68 = arith.constant 1.000000e+00 : f32
    %434 = vector.broadcast %cst_68 : f32 to vector<2x32xf32>
    %435 = arith.addf %434, %433 : vector<2x32xf32>
    %436 = arith.divf %434, %435 : vector<2x32xf32>
    %437 = vector.extract_strided_slice %430 {offsets = [0, 32], sizes = [2, 32], strides = [1, 1]} : vector<2x128xf32> to vector<2x32xf32>
    %438 = arith.negf %437 : vector<2x32xf32>
    %439 = math.exp %438 : vector<2x32xf32>
    %cst_69 = arith.constant 1.000000e+00 : f32
    %440 = vector.broadcast %cst_69 : f32 to vector<2x32xf32>
    %441 = arith.addf %440, %439 : vector<2x32xf32>
    %442 = arith.divf %440, %441 : vector<2x32xf32>
    %443 = vector.extract_strided_slice %430 {offsets = [0, 64], sizes = [2, 32], strides = [1, 1]} : vector<2x128xf32> to vector<2x32xf32>
    %444 = math.tanh %443 : vector<2x32xf32>
    %445 = vector.extract_strided_slice %430 {offsets = [0, 96], sizes = [2, 32], strides = [1, 1]} : vector<2x128xf32> to vector<2x32xf32>
    %446 = arith.negf %445 : vector<2x32xf32>
    %447 = math.exp %446 : vector<2x32xf32>
    %cst_70 = arith.constant 1.000000e+00 : f32
    %448 = vector.broadcast %cst_70 : f32 to vector<2x32xf32>
    %449 = arith.addf %448, %447 : vector<2x32xf32>
    %450 = arith.divf %448, %449 : vector<2x32xf32>
    %451 = arith.mulf %442, %424 : vector<2x32xf32>
    %452 = arith.mulf %436, %444 : vector<2x32xf32>
    %453 = arith.addf %451, %452 : vector<2x32xf32>
    %454 = math.tanh %453 : vector<2x32xf32>
    %455 = arith.mulf %450, %454 : vector<2x32xf32>
    %456 = vector.extract_strided_slice %336 {offsets = [0, 4, 0], sizes = [2, 1, 128], strides = [1, 1, 1]} : vector<2x8x128xf32> to vector<2x1x128xf32>
    %457 = vector.shape_cast %456 : vector<2x1x128xf32> to vector<2x128xf32>
    %cst_71 = arith.constant dense<0.000000e+00> : vector<2x128xf32>
    %458 = tpu.matmul %455, %337, %cst_71 {dimension_numbers = #tpu.dot_dimension_numbers<[1], [0], [0], [1], [0, 0, 1, 1], [], []>} : vector<2x32xf32>, vector<32x128xf32>, vector<2x128xf32> -> vector<2x128xf32>
    %459 = arith.addf %457, %458 : vector<2x128xf32>
    %460 = vector.extract_strided_slice %459 {offsets = [0, 0], sizes = [2, 32], strides = [1, 1]} : vector<2x128xf32> to vector<2x32xf32>
    %461 = arith.negf %460 : vector<2x32xf32>
    %462 = math.exp %461 : vector<2x32xf32>
    %cst_72 = arith.constant 1.000000e+00 : f32
    %463 = vector.broadcast %cst_72 : f32 to vector<2x32xf32>
    %464 = arith.addf %463, %462 : vector<2x32xf32>
    %465 = arith.divf %463, %464 : vector<2x32xf32>
    %466 = vector.extract_strided_slice %459 {offsets = [0, 32], sizes = [2, 32], strides = [1, 1]} : vector<2x128xf32> to vector<2x32xf32>
    %467 = arith.negf %466 : vector<2x32xf32>
    %468 = math.exp %467 : vector<2x32xf32>
    %cst_73 = arith.constant 1.000000e+00 : f32
    %469 = vector.broadcast %cst_73 : f32 to vector<2x32xf32>
    %470 = arith.addf %469, %468 : vector<2x32xf32>
    %471 = arith.divf %469, %470 : vector<2x32xf32>
    %472 = vector.extract_strided_slice %459 {offsets = [0, 64], sizes = [2, 32], strides = [1, 1]} : vector<2x128xf32> to vector<2x32xf32>
    %473 = math.tanh %472 : vector<2x32xf32>
    %474 = vector.extract_strided_slice %459 {offsets = [0, 96], sizes = [2, 32], strides = [1, 1]} : vector<2x128xf32> to vector<2x32xf32>
    %475 = arith.negf %474 : vector<2x32xf32>
    %476 = math.exp %475 : vector<2x32xf32>
    %cst_74 = arith.constant 1.000000e+00 : f32
    %477 = vector.broadcast %cst_74 : f32 to vector<2x32xf32>
    %478 = arith.addf %477, %476 : vector<2x32xf32>
    %479 = arith.divf %477, %478 : vector<2x32xf32>
    %480 = arith.mulf %471, %453 : vector<2x32xf32>
    %481 = arith.mulf %465, %473 : vector<2x32xf32>
    %482 = arith.addf %480, %481 : vector<2x32xf32>
    %483 = math.tanh %482 : vector<2x32xf32>
    %484 = arith.mulf %479, %483 : vector<2x32xf32>
    %485 = vector.extract_strided_slice %336 {offsets = [0, 5, 0], sizes = [2, 1, 128], strides = [1, 1, 1]} : vector<2x8x128xf32> to vector<2x1x128xf32>
    %486 = vector.shape_cast %485 : vector<2x1x128xf32> to vector<2x128xf32>
    %cst_75 = arith.constant dense<0.000000e+00> : vector<2x128xf32>
    %487 = tpu.matmul %484, %337, %cst_75 {dimension_numbers = #tpu.dot_dimension_numbers<[1], [0], [0], [1], [0, 0, 1, 1], [], []>} : vector<2x32xf32>, vector<32x128xf32>, vector<2x128xf32> -> vector<2x128xf32>
    %488 = arith.addf %486, %487 : vector<2x128xf32>
    %489 = vector.extract_strided_slice %488 {offsets = [0, 0], sizes = [2, 32], strides = [1, 1]} : vector<2x128xf32> to vector<2x32xf32>
    %490 = arith.negf %489 : vector<2x32xf32>
    %491 = math.exp %490 : vector<2x32xf32>
    %cst_76 = arith.constant 1.000000e+00 : f32
    %492 = vector.broadcast %cst_76 : f32 to vector<2x32xf32>
    %493 = arith.addf %492, %491 : vector<2x32xf32>
    %494 = arith.divf %492, %493 : vector<2x32xf32>
    %495 = vector.extract_strided_slice %488 {offsets = [0, 32], sizes = [2, 32], strides = [1, 1]} : vector<2x128xf32> to vector<2x32xf32>
    %496 = arith.negf %495 : vector<2x32xf32>
    %497 = math.exp %496 : vector<2x32xf32>
    %cst_77 = arith.constant 1.000000e+00 : f32
    %498 = vector.broadcast %cst_77 : f32 to vector<2x32xf32>
    %499 = arith.addf %498, %497 : vector<2x32xf32>
    %500 = arith.divf %498, %499 : vector<2x32xf32>
    %501 = vector.extract_strided_slice %488 {offsets = [0, 64], sizes = [2, 32], strides = [1, 1]} : vector<2x128xf32> to vector<2x32xf32>
    %502 = math.tanh %501 : vector<2x32xf32>
    %503 = vector.extract_strided_slice %488 {offsets = [0, 96], sizes = [2, 32], strides = [1, 1]} : vector<2x128xf32> to vector<2x32xf32>
    %504 = arith.negf %503 : vector<2x32xf32>
    %505 = math.exp %504 : vector<2x32xf32>
    %cst_78 = arith.constant 1.000000e+00 : f32
    %506 = vector.broadcast %cst_78 : f32 to vector<2x32xf32>
    %507 = arith.addf %506, %505 : vector<2x32xf32>
    %508 = arith.divf %506, %507 : vector<2x32xf32>
    %509 = arith.mulf %500, %482 : vector<2x32xf32>
    %510 = arith.mulf %494, %502 : vector<2x32xf32>
    %511 = arith.addf %509, %510 : vector<2x32xf32>
    %512 = math.tanh %511 : vector<2x32xf32>
    %513 = arith.mulf %508, %512 : vector<2x32xf32>
    %514 = vector.extract_strided_slice %336 {offsets = [0, 6, 0], sizes = [2, 1, 128], strides = [1, 1, 1]} : vector<2x8x128xf32> to vector<2x1x128xf32>
    %515 = vector.shape_cast %514 : vector<2x1x128xf32> to vector<2x128xf32>
    %cst_79 = arith.constant dense<0.000000e+00> : vector<2x128xf32>
    %516 = tpu.matmul %513, %337, %cst_79 {dimension_numbers = #tpu.dot_dimension_numbers<[1], [0], [0], [1], [0, 0, 1, 1], [], []>} : vector<2x32xf32>, vector<32x128xf32>, vector<2x128xf32> -> vector<2x128xf32>
    %517 = arith.addf %515, %516 : vector<2x128xf32>
    %518 = vector.extract_strided_slice %517 {offsets = [0, 0], sizes = [2, 32], strides = [1, 1]} : vector<2x128xf32> to vector<2x32xf32>
    %519 = arith.negf %518 : vector<2x32xf32>
    %520 = math.exp %519 : vector<2x32xf32>
    %cst_80 = arith.constant 1.000000e+00 : f32
    %521 = vector.broadcast %cst_80 : f32 to vector<2x32xf32>
    %522 = arith.addf %521, %520 : vector<2x32xf32>
    %523 = arith.divf %521, %522 : vector<2x32xf32>
    %524 = vector.extract_strided_slice %517 {offsets = [0, 32], sizes = [2, 32], strides = [1, 1]} : vector<2x128xf32> to vector<2x32xf32>
    %525 = arith.negf %524 : vector<2x32xf32>
    %526 = math.exp %525 : vector<2x32xf32>
    %cst_81 = arith.constant 1.000000e+00 : f32
    %527 = vector.broadcast %cst_81 : f32 to vector<2x32xf32>
    %528 = arith.addf %527, %526 : vector<2x32xf32>
    %529 = arith.divf %527, %528 : vector<2x32xf32>
    %530 = vector.extract_strided_slice %517 {offsets = [0, 64], sizes = [2, 32], strides = [1, 1]} : vector<2x128xf32> to vector<2x32xf32>
    %531 = math.tanh %530 : vector<2x32xf32>
    %532 = vector.extract_strided_slice %517 {offsets = [0, 96], sizes = [2, 32], strides = [1, 1]} : vector<2x128xf32> to vector<2x32xf32>
    %533 = arith.negf %532 : vector<2x32xf32>
    %534 = math.exp %533 : vector<2x32xf32>
    %cst_82 = arith.constant 1.000000e+00 : f32
    %535 = vector.broadcast %cst_82 : f32 to vector<2x32xf32>
    %536 = arith.addf %535, %534 : vector<2x32xf32>
    %537 = arith.divf %535, %536 : vector<2x32xf32>
    %538 = arith.mulf %529, %511 : vector<2x32xf32>
    %539 = arith.mulf %523, %531 : vector<2x32xf32>
    %540 = arith.addf %538, %539 : vector<2x32xf32>
    %541 = math.tanh %540 : vector<2x32xf32>
    %542 = arith.mulf %537, %541 : vector<2x32xf32>
    %543 = vector.extract_strided_slice %336 {offsets = [0, 7, 0], sizes = [2, 1, 128], strides = [1, 1, 1]} : vector<2x8x128xf32> to vector<2x1x128xf32>
    %544 = vector.shape_cast %543 : vector<2x1x128xf32> to vector<2x128xf32>
    %cst_83 = arith.constant dense<0.000000e+00> : vector<2x128xf32>
    %545 = tpu.matmul %542, %337, %cst_83 {dimension_numbers = #tpu.dot_dimension_numbers<[1], [0], [0], [1], [0, 0, 1, 1], [], []>} : vector<2x32xf32>, vector<32x128xf32>, vector<2x128xf32> -> vector<2x128xf32>
    %546 = arith.addf %544, %545 : vector<2x128xf32>
    %547 = vector.extract_strided_slice %546 {offsets = [0, 0], sizes = [2, 32], strides = [1, 1]} : vector<2x128xf32> to vector<2x32xf32>
    %548 = arith.negf %547 : vector<2x32xf32>
    %549 = math.exp %548 : vector<2x32xf32>
    %cst_84 = arith.constant 1.000000e+00 : f32
    %550 = vector.broadcast %cst_84 : f32 to vector<2x32xf32>
    %551 = arith.addf %550, %549 : vector<2x32xf32>
    %552 = arith.divf %550, %551 : vector<2x32xf32>
    %553 = vector.extract_strided_slice %546 {offsets = [0, 32], sizes = [2, 32], strides = [1, 1]} : vector<2x128xf32> to vector<2x32xf32>
    %554 = arith.negf %553 : vector<2x32xf32>
    %555 = math.exp %554 : vector<2x32xf32>
    %cst_85 = arith.constant 1.000000e+00 : f32
    %556 = vector.broadcast %cst_85 : f32 to vector<2x32xf32>
    %557 = arith.addf %556, %555 : vector<2x32xf32>
    %558 = arith.divf %556, %557 : vector<2x32xf32>
    %559 = vector.extract_strided_slice %546 {offsets = [0, 64], sizes = [2, 32], strides = [1, 1]} : vector<2x128xf32> to vector<2x32xf32>
    %560 = math.tanh %559 : vector<2x32xf32>
    %561 = vector.extract_strided_slice %546 {offsets = [0, 96], sizes = [2, 32], strides = [1, 1]} : vector<2x128xf32> to vector<2x32xf32>
    %562 = arith.negf %561 : vector<2x32xf32>
    %563 = math.exp %562 : vector<2x32xf32>
    %cst_86 = arith.constant 1.000000e+00 : f32
    %564 = vector.broadcast %cst_86 : f32 to vector<2x32xf32>
    %565 = arith.addf %564, %563 : vector<2x32xf32>
    %566 = arith.divf %564, %565 : vector<2x32xf32>
    %567 = arith.mulf %558, %540 : vector<2x32xf32>
    %568 = arith.mulf %552, %560 : vector<2x32xf32>
    %569 = arith.addf %567, %568 : vector<2x32xf32>
    %570 = math.tanh %569 : vector<2x32xf32>
    %571 = arith.mulf %566, %570 : vector<2x32xf32>
    %c0_87 = arith.constant 0 : index
    %c0_88 = arith.constant 0 : index
    %572 = vector.load %arg9[%c0_87, %c0_88] : memref<12x32xf32, #tpu.memory_space<vmem>>, vector<12x32xf32>
    %cst_89 = arith.constant dense<0.000000e+00> : vector<2x12xf32>
    %573 = tpu.matmul %571, %572, %cst_89 {dimension_numbers = #tpu.dot_dimension_numbers<[1], [1], [0], [0], [0, 0, 1, 0], [], []>} : vector<2x32xf32>, vector<12x32xf32>, vector<2x12xf32> -> vector<2x12xf32>
    %c0_90 = arith.constant 0 : index
    %c0_91 = arith.constant 0 : index
    %574 = vector.load %arg10[%c0_90, %c0_91] : memref<2x12xf32, #tpu.memory_space<vmem>>, vector<2x12xf32>
    tpu.vector_store %arg10[%c0_90, %c0_91], %573 {strides = array<i32>} : memref<2x12xf32, #tpu.memory_space<vmem>>, vector<2x12xf32>,
    %cst_92 = arith.constant dense<0.000000e+00> : vector<2x32xf32>
    %575 = tpu.matmul %573, %572, %cst_92 {dimension_numbers = #tpu.dot_dimension_numbers<[1], [0], [0], [1], [0, 0, 1, 1], [], []>} : vector<2x12xf32>, vector<12x32xf32>, vector<2x32xf32> -> vector<2x32xf32>
    %c0_93 = arith.constant 0 : index
    %c0_94 = arith.constant 0 : index
    %576 = vector.load %arg11[%c0_93, %c0_94] : memref<2x32xf32, #tpu.memory_space<vmem>>, vector<2x32xf32>
    tpu.vector_store %arg11[%c0_93, %c0_94], %575 {strides = array<i32>} : memref<2x32xf32, #tpu.memory_space<vmem>>, vector<2x32xf32>,
    return
  }
}

</mosaic_0001>

<llo_original>
// kernel: zslhar_forward.1
$region0: #{zslhar_forward.1}
  #allocation0 [shape = 'u32[]', space=smem, size = 0x4, offset = 0x4, fixed_abs, tag = 'smem constant byte address 0x4 - core index']
  #allocation1 [shape = 'u32[144,128]{1,0:T(1,128)}', space=vmem, size = 0x12000, scoped, tag = 'internal scratch']
  %s0 = inlined_call_operand.vmem [shape: f32[16,6], index: 0, kind: input, shape index: {}]
  %s1 = inlined_call_operand.hbm [shape: f32[6,32], index: 1, kind: input, shape index: {}]
  %s2 = inlined_call_operand.vmem [shape: f32[1,32], index: 2, kind: input, shape index: {}]
  %s3 = inlined_call_operand.vmem [shape: f32[32,96], index: 3, kind: input, shape index: {}]
  %s4 = inlined_call_operand.hbm [shape: f32[1,96], index: 4, kind: input, shape index: {}]
  %s5 = inlined_call_operand.hbm [shape: f32[8,8], index: 5, kind: input, shape index: {}]
  %s6 = inlined_call_operand.vmem [shape: f32[32,128], index: 6, kind: input, shape index: {}]
  %s7 = inlined_call_operand.hbm [shape: f32[1,128], index: 7, kind: input, shape index: {}]
  %s8 = inlined_call_operand.hbm [shape: f32[32,128], index: 8, kind: input, shape index: {}]
  %s9 = inlined_call_operand.hbm [shape: f32[12,32], index: 9, kind: input, shape index: {}]
  %s10 = inlined_call_operand.hbm [shape: f32[2,12], index: 10, kind: output, shape index: {0}]
  %s11 = inlined_call_operand.hbm [shape: f32[2,32], index: 11, kind: output, shape index: {1}]
  %12 = xla_tuple %s10, %s11
  %s13 = sld [smem:[#allocation0]]
  $region82: #{zslhar_forward.1} parent=0
    _
  %s15 = ssub.s32 1, %s13
  %s16 = scalar_select 0, %s15, %s13
  $region1: #{zslhar_forward.1} parent=0
    #allocation2 [shape = 'u8[4096]{0}', space=vmem, size = 0x1000, scoped, tag = 'input window, operand 1, single buffered']
    #allocation3 [shape = 's32[1]{0}', space=sflag, size = 0x4, scoped, tag = 'scoped memory for zslhar_forward.1']
    #allocation4 [shape = 's32[1]{0}', space=sflag, size = 0x4, scoped, tag = 'scoped memory for zslhar_forward.1']
    #allocation5 [shape = 'u8[512]{0}', space=vmem, size = 0x400, scoped, tag = 'input window, operand 4, single buffered']
    #allocation6 [shape = 's32[1]{0}', space=sflag, size = 0x4, scoped, tag = 'scoped memory for zslhar_forward.1']
    #allocation7 [shape = 'u8[4096]{0}', space=vmem, size = 0x1000, scoped, tag = 'input window, operand 5, single buffered']
    #allocation8 [shape = 'u8[512]{0}', space=vmem, size = 0x400, scoped, tag = 'input window, operand 7, single buffered']
    #allocation9 [shape = 's32[1]{0}', space=sflag, size = 0x4, scoped, tag = 'scoped memory for zslhar_forward.1']
    #allocation10 [shape = 'u8[16384]{0}', space=vmem, size = 0x4000, scoped, tag = 'input window, operand 8, single buffered']
    #allocation11 [shape = 'u8[8192]{0}', space=vmem, size = 0x2000, scoped, tag = 'input window, operand 9, single buffered']
    #allocation12 [shape = 's32[1]{0}', space=sflag, size = 0x4, scoped, tag = 'scoped memory for zslhar_forward.1']
    #allocation13 [shape = 'u8[1024]{0}', space=vmem, size = 0x400, scoped, tag = 'output window, operand 0, single buffered']
    #allocation14 [shape = 'u8[1024]{0}', space=vmem, size = 0x400, scoped, tag = 'output window, operand 1, single buffered']
    #allocation15 [shape = 's32[1]{0}', space=sflag, size = 0x4, scoped, tag = 'scoped memory for zslhar_forward.1']
    %17 = vsyncpa [#allocation3], 0
    %18 = vsyncpa [#allocation6], 0
    %19 = vsyncpa [#allocation9], 0
    %20 = vsyncpa [#allocation12], 0
    %21 = vsyncpa [#allocation4], 0
    %22 = vsyncpa [#allocation15], 0
    // Predicated region
    $region2: #{zslhar_forward.1} parent=1 // pred_check
      _
    $region3: #{zslhar_forward.1} parent=1 // pred_check_branch
      %24 = sbr.rel (0) target = $region5
    $region4: #{zslhar_forward.1} parent=1 // pred_region
      _
    $region5: #{zslhar_forward.1} parent=1 // pred_fallthru
      _
    // Predicated region
    $region6: #{zslhar_forward.1} parent=1 // pred_check
      _
    $region7: #{zslhar_forward.1} parent=1 // pred_check_branch
      %26 = sbr.rel (0) target = $region9
    $region8: #{zslhar_forward.1} parent=1 // pred_region
      %s28 = ssub.s32 128, 128
      %29 = vsyncadd [#allocation3], %s28
      %s31 = sshll.u32 [#allocation2], 4
      %s32 = int_to_ptr.vmem [resolvable:$true] %s31
      %34 = dma.hbm_to_vmem [thread:$0]  %s1, 128, %s32, [#allocation3]
    $region9: #{zslhar_forward.1} parent=1 // pred_fallthru
      _
    // Predicated region
    $region10: #{zslhar_forward.1} parent=1 // pred_check
      _
    $region11: #{zslhar_forward.1} parent=1 // pred_check_branch
      %36 = sbr.rel (0) target = $region13
    $region12: #{zslhar_forward.1} parent=1 // pred_region
      _
    $region13: #{zslhar_forward.1} parent=1 // pred_fallthru
      _
    // Predicated region
    $region14: #{zslhar_forward.1} parent=1 // pred_check
      _
    $region15: #{zslhar_forward.1} parent=1 // pred_check_branch
      %38 = sbr.rel (0) target = $region17
    $region16: #{zslhar_forward.1} parent=1 // pred_region
      _
    $region17: #{zslhar_forward.1} parent=1 // pred_fallthru
      _
    // Predicated region
    $region18: #{zslhar_forward.1} parent=1 // pred_check
      _
    $region19: #{zslhar_forward.1} parent=1 // pred_check_branch
      %40 = sbr.rel (0) target = $region21
    $region20: #{zslhar_forward.1} parent=1 // pred_region
      %s42 = ssub.s32 16, 16
      %43 = vsyncadd [#allocation6], %s42
      %s45 = sshll.u32 [#allocation5], 4
      %s46 = int_to_ptr.vmem [resolvable:$true] %s45
      %48 = dma.hbm_to_vmem [thread:$0]  %s4, 16, %s46, [#allocation6]
    $region21: #{zslhar_forward.1} parent=1 // pred_fallthru
      _
    // Predicated region
    $region22: #{zslhar_forward.1} parent=1 // pred_check
      _
    $region23: #{zslhar_forward.1} parent=1 // pred_check_branch
      %50 = sbr.rel (0) target = $region25
    $region24: #{zslhar_forward.1} parent=1 // pred_region
      %s52 = ssub.s32 128, 128
      %53 = vsyncadd [#allocation6], %s52
      %s55 = sshll.u32 [#allocation7], 4
      %s56 = int_to_ptr.vmem [resolvable:$true] %s55
      %58 = dma.hbm_to_vmem [thread:$0]  %s5, 128, %s56, [#allocation6]
    $region25: #{zslhar_forward.1} parent=1 // pred_fallthru
      _
    // Predicated region
    $region26: #{zslhar_forward.1} parent=1 // pred_check
      _
    $region27: #{zslhar_forward.1} parent=1 // pred_check_branch
      %60 = sbr.rel (0) target = $region29
    $region28: #{zslhar_forward.1} parent=1 // pred_region
      _
    $region29: #{zslhar_forward.1} parent=1 // pred_fallthru
      _
    // Predicated region
    $region30: #{zslhar_forward.1} parent=1 // pred_check
      _
    $region31: #{zslhar_forward.1} parent=1 // pred_check_branch
      %62 = sbr.rel (0) target = $region33
    $region32: #{zslhar_forward.1} parent=1 // pred_region
      %s64 = ssub.s32 16, 16
      %65 = vsyncadd [#allocation9], %s64
      %s67 = sshll.u32 [#allocation8], 4
      %s68 = int_to_ptr.vmem [resolvable:$true] %s67
      %70 = dma.hbm_to_vmem [thread:$0]  %s7, 16, %s68, [#allocation9]
    $region33: #{zslhar_forward.1} parent=1 // pred_fallthru
      _
    // Predicated region
    $region34: #{zslhar_forward.1} parent=1 // pred_check
      _
    $region35: #{zslhar_forward.1} parent=1 // pred_check_branch
      %72 = sbr.rel (0) target = $region37
    $region36: #{zslhar_forward.1} parent=1 // pred_region
      %s74 = ssub.s32 512, 512
      %75 = vsyncadd [#allocation9], %s74
      %s76 = sshll.u32 [#allocation10], 4
      %s77 = int_to_ptr.vmem [resolvable:$true] %s76
      %82 = dma.hbm_to_vmem [thread:$0]  %s8, 512, %s77, [#allocation9], 128, 128, 8
    $region37: #{zslhar_forward.1} parent=1 // pred_fallthru
      _
    // Predicated region
    $region38: #{zslhar_forward.1} parent=1 // pred_check
      _
    $region39: #{zslhar_forward.1} parent=1 // pred_check_branch
      %84 = sbr.rel (0) target = $region41
    $region40: #{zslhar_forward.1} parent=1 // pred_region
      %s86 = ssub.s32 256, 256
      %87 = vsyncadd [#allocation12], %s86
      %s88 = sshll.u32 [#allocation11], 4
      %s89 = int_to_ptr.vmem [resolvable:$true] %s88
      %94 = dma.hbm_to_vmem [thread:$0]  %s9, 256, %s89, [#allocation12], 128, 128, 8
    $region41: #{zslhar_forward.1} parent=1 // pred_fallthru
      _
    // Predicated region
    $region42: #{zslhar_forward.1} parent=1 // pred_check
      _
    $region43: #{zslhar_forward.1} parent=1 // pred_check_branch
      %96 = sbr.rel (0) target = $region45
    $region44: #{zslhar_forward.1} parent=1 // pred_region
      %97 = dma.done [#allocation3], 128
    $region45: #{zslhar_forward.1} parent=1 // pred_fallthru
      _
    // Predicated region
    $region46: #{zslhar_forward.1} parent=1 // pred_check
      _
    $region47: #{zslhar_forward.1} parent=1 // pred_check_branch
      %99 = sbr.rel (0) target = $region49
    $region48: #{zslhar_forward.1} parent=1 // pred_region
      %100 = dma.done [#allocation6], 16
    $region49: #{zslhar_forward.1} parent=1 // pred_fallthru
      _
    // Predicated region
    $region50: #{zslhar_forward.1} parent=1 // pred_check
      _
    $region51: #{zslhar_forward.1} parent=1 // pred_check_branch
      %102 = sbr.rel (0) target = $region53
    $region52: #{zslhar_forward.1} parent=1 // pred_region
      %103 = dma.done [#allocation6], 128
    $region53: #{zslhar_forward.1} parent=1 // pred_fallthru
      _
    // Predicated region
    $region54: #{zslhar_forward.1} parent=1 // pred_check
      _
    $region55: #{zslhar_forward.1} parent=1 // pred_check_branch
      %105 = sbr.rel (0) target = $region57
    $region56: #{zslhar_forward.1} parent=1 // pred_region
      %106 = dma.done [#allocation9], 16
    $region57: #{zslhar_forward.1} parent=1 // pred_fallthru
      _
    // Predicated region
    $region58: #{zslhar_forward.1} parent=1 // pred_check
      _
    $region59: #{zslhar_forward.1} parent=1 // pred_check_branch
      %108 = sbr.rel (0) target = $region61
    $region60: #{zslhar_forward.1} parent=1 // pred_region
      %109 = dma.done [#allocation9], 512
    $region61: #{zslhar_forward.1} parent=1 // pred_fallthru
      _
    // Predicated region
    $region62: #{zslhar_forward.1} parent=1 // pred_check
      _
    $region63: #{zslhar_forward.1} parent=1 // pred_check_branch
      %111 = sbr.rel (0) target = $region65
    $region64: #{zslhar_forward.1} parent=1 // pred_region
      %112 = dma.done [#allocation12], 256
    $region65: #{zslhar_forward.1} parent=1 // pred_fallthru
      _
    %v113 = vld [vmem:[%s0] sm:$0xff]
    %v114 = vld [vmem:[%s0 + $0x8] sm:$0xff]
    %v115 = vld [vmem:[#allocation2] sm:$0x3f]
    %v116 = vld [vmem:[%s2] sm:$0x1]
    %v118 = vlaneseq
    %v119 = vshrl.u32 %v118, 7
    %v120 = vsub.s32 0, %v119
    %v121 = vrot.slane %v116, %v120
    %vm123 = vcmask 48128
    %v125 = vsel %vm123, %v113, 0
    %v128 = vsel %vm123, %v114, 0
    %vm130 = vcmask 1045504
    %v132 = vsel %vm130, %v115, 0
    %134 = vmatprep.subr.mxu0 0.0
    %135 = vmatpush1.msra.mxu0 %v132
    %136 = vmatprep.subr.mxu0 0.0
    %137 = vmatpush1.msra.mxu0 0.0
    %138 = vmatprep.subr.mxu0 0.0
    %139 = vmatpush1.msra.mxu0 0.0
    %140 = vmatprep.subr.mxu0 0.0
    %141 = vmatpush1.msra.mxu0 0.0
    %142 = vmatprep.subr.mxu0 0.0
    %143 = vmatpush1.msra.mxu0 0.0
    %144 = vmatprep.subr.mxu0 0.0
    %145 = vmatpush1.msra.mxu0 0.0
    %146 = vmatprep.subr.mxu0 0.0
    %147 = vmatpush1.msra.mxu0 0.0
    %148 = vmatprep.subr.mxu0 0.0
    %149 = vmatpush1.msra.mxu0 0.0
    %150 = vmatprep.subr.mxu0 0.0
    %151 = vmatpush1.msra.mxu0 0.0
    %152 = vmatprep.subr.mxu0 0.0
    %153 = vmatpush1.msra.mxu0 0.0
    %154 = vmatprep.subr.mxu0 0.0
    %155 = vmatpush1.msra.mxu0 0.0
    %156 = vmatprep.subr.mxu0 0.0
    %157 = vmatpush1.msra.mxu0 0.0
    %158 = vmatprep.subr.mxu0 0.0
    %159 = vmatpush1.msra.mxu0 0.0
    %160 = vmatprep.subr.mxu0 0.0
    %161 = vmatpush1.msra.mxu0 0.0
    %162 = vmatprep.subr.mxu0 0.0
    %163 = vmatpush1.msra.mxu0 0.0
    %164 = vmatprep.subr.mxu0 0.0
    %165 = vmatpush1.msra.mxu0 0.0
    %166 = vmatprep.subr.mxu0 0.0
    %167 = vmatpush1.msra.mxu0 0.0
    %168 = vmatprep.subr.mxu0 0.0
    %169 = vmatpush1.msra.mxu0 0.0
    %170 = vmatprep.subr.mxu0 0.0
    %171 = vmatpush1.msra.mxu0 0.0
    %172 = vmatprep.subr.mxu0 0.0
    %173 = vmatpush1.msra.mxu0 0.0
    %174 = vmatprep.subr.mxu0 0.0
    %175 = vmatpush1.msra.mxu0 0.0
    %176 = vmatprep.subr.mxu0 0.0
    %177 = vmatpush1.msra.mxu0 0.0
    %178 = vmatprep.subr.mxu0 0.0
    %179 = vmatpush1.msra.mxu0 0.0
    %180 = vmatprep.subr.mxu0 0.0
    %181 = vmatpush1.msra.mxu0 0.0
    %182 = vmatprep.subr.mxu0 0.0
    %183 = vmatpush1.msra.mxu0 0.0
    %184 = vmatprep.subr.mxu0 0.0
    %185 = vmatpush1.msra.mxu0 0.0
    %186 = vmatprep.subr.mxu0 0.0
    %187 = vmatpush1.msra.mxu0 0.0
    %188 = vmatprep.subr.mxu0 0.0
    %189 = vmatpush1.msra.mxu0 0.0
    %190 = vmatprep.subr.mxu0 0.0
    %191 = vmatpush1.msra.mxu0 0.0
    %192 = vmatprep.subr.mxu0 0.0
    %193 = vmatpush1.msra.mxu0 0.0
    %194 = vmatprep.subr.mxu0 0.0
    %195 = vmatpush1.msra.mxu0 0.0
    %196 = vmatprep.subr.mxu0 0.0
    %197 = vmatpush1.msra.mxu0 0.0
    %198 = vmatprep.mubr.f32.mxu0 0.0
    %199 = vmatmul.mubr.f32.gmra.mrb[0].mxu0 %v125
    %v200 = vpop.f32.mrb[0].mxu0
    %v201 = vadd.f32 %v121, %v200
    %v202 = vpop.f32.mrb[0].mxu0
    %203 = vmatprep.mubr.f32.mxu0 0.0
    %204 = vmatmul.mubr.f32.gmra.mrb[0].mxu0 %v128
    %v205 = vpop.f32.mrb[0].mxu0
    %v206 = vadd.f32 %v121, %v205
    %v207 = vpop.f32.mrb[0].mxu0
    %208 = vdwg.mxu0
    %v209 = vld [vmem:[%s3] sm:$0xff]
    %v210 = vld [vmem:[%s3 + $0x8] sm:$0xff]
    %v211 = vld [vmem:[%s3 + $0x10] sm:$0xff]
    %v212 = vld [vmem:[%s3 + $0x18] sm:$0xff]
    %v213 = vld [vmem:[#allocation5] sm:$0x1]
    %v215 = vlaneseq
    %v216 = vshrl.u32 %v215, 7
    %v217 = vsub.s32 0, %v216
    %v218 = vrot.slane %v213, %v217
    %vm220 = vcmask 261120
    %v222 = vsel %vm220, %v201, 0
    %v225 = vsel %vm220, %v206, 0
    %227 = vmatprep.subr.mxu0 0.0
    %228 = vmatpush1.msra.mxu0 %v209
    %229 = vmatprep.subr.mxu0 0.0
    %230 = vmatpush1.msra.mxu0 %v210
    %231 = vmatprep.subr.mxu0 0.0
    %232 = vmatpush1.msra.mxu0 %v211
    %233 = vmatprep.subr.mxu0 0.0
    %234 = vmatpush1.msra.mxu0 %v212
    %235 = vmatprep.subr.mxu0 0.0
    %236 = vmatpush1.msra.mxu0 0.0
    %237 = vmatprep.subr.mxu0 0.0
    %238 = vmatpush1.msra.mxu0 0.0
    %239 = vmatprep.subr.mxu0 0.0
    %240 = vmatpush1.msra.mxu0 0.0
    %241 = vmatprep.subr.mxu0 0.0
    %242 = vmatpush1.msra.mxu0 0.0
    %243 = vmatprep.subr.mxu0 0.0
    %244 = vmatpush1.msra.mxu0 0.0
    %245 = vmatprep.subr.mxu0 0.0
    %246 = vmatpush1.msra.mxu0 0.0
    %247 = vmatprep.subr.mxu0 0.0
    %248 = vmatpush1.msra.mxu0 0.0
    %249 = vmatprep.subr.mxu0 0.0
    %250 = vmatpush1.msra.mxu0 0.0
    %251 = vmatprep.subr.mxu0 0.0
    %252 = vmatpush1.msra.mxu0 0.0
    %253 = vmatprep.subr.mxu0 0.0
    %254 = vmatpush1.msra.mxu0 0.0
    %255 = vmatprep.subr.mxu0 0.0
    %256 = vmatpush1.msra.mxu0 0.0
    %257 = vmatprep.subr.mxu0 0.0
    %258 = vmatpush1.msra.mxu0 0.0
    %259 = vmatprep.subr.mxu0 0.0
    %260 = vmatpush1.msra.mxu0 0.0
    %261 = vmatprep.subr.mxu0 0.0
    %262 = vmatpush1.msra.mxu0 0.0
    %263 = vmatprep.subr.mxu0 0.0
    %264 = vmatpush1.msra.mxu0 0.0
    %265 = vmatprep.subr.mxu0 0.0
    %266 = vmatpush1.msra.mxu0 0.0
    %267 = vmatprep.subr.mxu0 0.0
    %268 = vmatpush1.msra.mxu0 0.0
    %269 = vmatprep.subr.mxu0 0.0
    %270 = vmatpush1.msra.mxu0 0.0
    %271 = vmatprep.subr.mxu0 0.0
    %272 = vmatpush1.msra.mxu0 0.0
    %273 = vmatprep.subr.mxu0 0.0
    %274 = vmatpush1.msra.mxu0 0.0
    %275 = vmatprep.subr.mxu0 0.0
    %276 = vmatpush1.msra.mxu0 0.0
    %277 = vmatprep.subr.mxu0 0.0
    %278 = vmatpush1.msra.mxu0 0.0
    %279 = vmatprep.subr.mxu0 0.0
    %280 = vmatpush1.msra.mxu0 0.0
    %281 = vmatprep.subr.mxu0 0.0
    %282 = vmatpush1.msra.mxu0 0.0
    %283 = vmatprep.subr.mxu0 0.0
    %284 = vmatpush1.msra.mxu0 0.0
    %285 = vmatprep.subr.mxu0 0.0
    %286 = vmatpush1.msra.mxu0 0.0
    %287 = vmatprep.subr.mxu0 0.0
    %288 = vmatpush1.msra.mxu0 0.0
    %289 = vmatprep.subr.mxu0 0.0
    %290 = vmatpush1.msra.mxu0 0.0
    %291 = vmatprep.mubr.f32.mxu0 0.0
    %292 = vmatmul.mubr.f32.gmra.mrb[0].mxu0 %v222
    %v293 = vpop.f32.mrb[0].mxu0
    %v294 = vadd.f32 %v218, %v293
    %v295 = vpop.f32.mrb[0].mxu0
    %296 = vmatprep.mubr.f32.mxu0 0.0
    %297 = vmatmul.mubr.f32.gmra.mrb[0].mxu0 %v225
    %v298 = vpop.f32.mrb[0].mxu0
    %v299 = vadd.f32 %v218, %v298
    %v300 = vpop.f32.mrb[0].mxu0
    %301 = vdwg.mxu0
    %v302 = vlaneseq
    %v303 = vshrl.u32 %v302, 7
    %v304 = vlaneseq
    %v305 = vand.u32 %v304, 127
    %vm306 = vcmp.ge.s32.totalorder %v303, %v305
    %v307 = vsub.s32 %v303, %v305
    %vm308 = vcmp.eq.s32.totalorder %v307, 7
    %v309 = vsel %vm308, 1, 0
    %v310 = vcvt.s32.f32 %v309
    %vm311 = vcmp.eq.s32.totalorder %v307, 6
    %v312 = vsel %vm311, 1, 0
    %v313 = vcvt.s32.f32 %v312
    %vm314 = vcmp.eq.s32.totalorder %v307, 5
    %v315 = vsel %vm314, 1, 0
    %v316 = vcvt.s32.f32 %v315
    %vm317 = vcmp.eq.s32.totalorder %v307, 4
    %v318 = vsel %vm317, 1, 0
    %v319 = vcvt.s32.f32 %v318
    %vm320 = vcmp.eq.s32.totalorder %v307, 3
    %v321 = vsel %vm320, 1, 0
    %v322 = vcvt.s32.f32 %v321
    %vm323 = vcmp.eq.s32.totalorder %v307, 2
    %v324 = vsel %vm323, 1, 0
    %v325 = vcvt.s32.f32 %v324
    %vm326 = vcmp.eq.s32.totalorder %v307, 1
    %v327 = vsel %vm326, 1, 0
    %v328 = vcvt.s32.f32 %v327
    %vm329 = vcmp.eq.s32.totalorder %v307, 0
    %v330 = vsel %vm329, 1, 0
    %v331 = vcvt.s32.f32 %v330
    %v332 = vld [vmem:[#allocation7] sm:$0xff]
    %v333 = vld [vmem:[#allocation8] sm:$0x1]
    %v335 = vlaneseq
    %v336 = vshrl.u32 %v335, 7
    %v337 = vsub.s32 0, %v336
    %v338 = vrot.slane %v333, %v337
    %vm340 = vcmask 64512
    %v342 = vsel %vm340, %v294, 0
    %v345 = vsel %vm340, %v299, 0
    %347 = vmatprep.subr.mxu0 0.0
    %348 = vmatpush1.msra.mxu0 %v332
    %349 = vmatprep.subr.mxu0 0.0
    %350 = vmatpush1.msra.mxu0 0.0
    %351 = vmatprep.subr.mxu0 0.0
    %352 = vmatpush1.msra.mxu0 0.0
    %353 = vmatprep.subr.mxu0 0.0
    %354 = vmatpush1.msra.mxu0 0.0
    %355 = vmatprep.subr.mxu0 0.0
    %356 = vmatpush1.msra.mxu0 0.0
    %357 = vmatprep.subr.mxu0 0.0
    %358 = vmatpush1.msra.mxu0 0.0
    %359 = vmatprep.subr.mxu0 0.0
    %360 = vmatpush1.msra.mxu0 0.0
    %361 = vmatprep.subr.mxu0 0.0
    %362 = vmatpush1.msra.mxu0 0.0
    %363 = vmatprep.subr.mxu0 0.0
    %364 = vmatpush1.msra.mxu0 0.0
    %365 = vmatprep.subr.mxu0 0.0
    %366 = vmatpush1.msra.mxu0 0.0
    %367 = vmatprep.subr.mxu0 0.0
    %368 = vmatpush1.msra.mxu0 0.0
    %369 = vmatprep.subr.mxu0 0.0
    %370 = vmatpush1.msra.mxu0 0.0
    %371 = vmatprep.subr.mxu0 0.0
    %372 = vmatpush1.msra.mxu0 0.0
    %373 = vmatprep.subr.mxu0 0.0
    %374 = vmatpush1.msra.mxu0 0.0
    %375 = vmatprep.subr.mxu0 0.0
    %376 = vmatpush1.msra.mxu0 0.0
    %377 = vmatprep.subr.mxu0 0.0
    %378 = vmatpush1.msra.mxu0 0.0
    %379 = vmatprep.subr.mxu0 0.0
    %380 = vmatpush1.msra.mxu0 0.0
    %381 = vmatprep.subr.mxu0 0.0
    %382 = vmatpush1.msra.mxu0 0.0
    %383 = vmatprep.subr.mxu0 0.0
    %384 = vmatpush1.msra.mxu0 0.0
    %385 = vmatprep.subr.mxu0 0.0
    %386 = vmatpush1.msra.mxu0 0.0
    %387 = vmatprep.subr.mxu0 0.0
    %388 = vmatpush1.msra.mxu0 0.0
    %389 = vmatprep.subr.mxu0 0.0
    %390 = vmatpush1.msra.mxu0 0.0
    %391 = vmatprep.subr.mxu0 0.0
    %392 = vmatpush1.msra.mxu0 0.0
    %393 = vmatprep.subr.mxu0 0.0
    %394 = vmatpush1.msra.mxu0 0.0
    %395 = vmatprep.subr.mxu0 0.0
    %396 = vmatpush1.msra.mxu0 0.0
    %397 = vmatprep.subr.mxu0 0.0
    %398 = vmatpush1.msra.mxu0 0.0
    %399 = vmatprep.subr.mxu0 0.0
    %400 = vmatpush1.msra.mxu0 0.0
    %401 = vmatprep.subr.mxu0 0.0
    %402 = vmatpush1.msra.mxu0 0.0
    %403 = vmatprep.subr.mxu0 0.0
    %404 = vmatpush1.msra.mxu0 0.0
    %405 = vmatprep.subr.mxu0 0.0
    %406 = vmatpush1.msra.mxu0 0.0
    %407 = vmatprep.subr.mxu0 0.0
    %408 = vmatpush1.msra.mxu0 0.0
    %409 = vmatprep.subr.mxu0 0.0
    %410 = vmatpush1.msra.mxu0 0.0
    %411 = vmatprep.mubr.f32.mxu0 0.0
    %412 = vmatmul.mubr.f32.gmra.mrb[0].mxu0 %v342
    %v413 = vpop.f32.mrb[0].mxu0
    %v414 = vadd.f32 0.0, %v413
    %v415 = vpop.f32.mrb[0].mxu0
    %416 = vmatprep.mubr.f32.mxu0 0.0
    %417 = vmatmul.mubr.f32.gmra.mrb[0].mxu0 %v345
    %v418 = vpop.f32.mrb[0].mxu0
    %v419 = vadd.f32 0.0, %v418
    %v420 = vpop.f32.mrb[0].mxu0
    %421 = vdwg.mxu0
    %423 = vset.pattern.permute.xlu0 0
    %424 = vperm.xlu0 %423, %v414
    %v425 = vpop.permute.xlu0 %424
    %428 = vset.pattern.permute.xlu0 0
    %429 = vperm.xlu0 %428, %v419
    %v430 = vpop.permute.xlu0 %429
    %v432 = vmul.f32 %v425, %v310
    %v433 = vmul.f32 %v430, %v310
    %v434 = vadd.f32 %v432, 0.0
    %v435 = vadd.f32 %v433, 0.0
    %436 = vset.pattern.permute.xlu0 1
    %437 = vperm.xlu0 %436, %v414
    %v438 = vpop.permute.xlu0 %437
    %440 = vset.pattern.permute.xlu0 1
    %441 = vperm.xlu0 %440, %v419
    %v442 = vpop.permute.xlu0 %441
    %v444 = vmul.f32 %v438, %v313
    %v445 = vmul.f32 %v442, %v313
    %v446 = vadd.f32 %v434, %v444
    %v447 = vadd.f32 %v435, %v445
    %448 = vset.pattern.permute.xlu0 2
    %449 = vperm.xlu0 %448, %v414
    %v450 = vpop.permute.xlu0 %449
    %452 = vset.pattern.permute.xlu0 2
    %453 = vperm.xlu0 %452, %v419
    %v454 = vpop.permute.xlu0 %453
    %v456 = vmul.f32 %v450, %v316
    %v457 = vmul.f32 %v454, %v316
    %v458 = vadd.f32 %v446, %v456
    %v459 = vadd.f32 %v447, %v457
    %460 = vset.pattern.permute.xlu0 3
    %461 = vperm.xlu0 %460, %v414
    %v462 = vpop.permute.xlu0 %461
    %464 = vset.pattern.permute.xlu0 3
    %465 = vperm.xlu0 %464, %v419
    %v466 = vpop.permute.xlu0 %465
    %v468 = vmul.f32 %v462, %v319
    %v469 = vmul.f32 %v466, %v319
    %v470 = vadd.f32 %v458, %v468
    %v471 = vadd.f32 %v459, %v469
    %472 = vset.pattern.permute.xlu0 4
    %473 = vperm.xlu0 %472, %v414
    %v474 = vpop.permute.xlu0 %473
    %476 = vset.pattern.permute.xlu0 4
    %477 = vperm.xlu0 %476, %v419
    %v478 = vpop.permute.xlu0 %477
    %v480 = vmul.f32 %v474, %v322
    %v481 = vmul.f32 %v478, %v322
    %v482 = vadd.f32 %v470, %v480
    %v483 = vadd.f32 %v471, %v481
    %484 = vset.pattern.permute.xlu0 5
    %485 = vperm.xlu0 %484, %v414
    %v486 = vpop.permute.xlu0 %485
    %488 = vset.pattern.permute.xlu0 5
    %489 = vperm.xlu0 %488, %v419
    %v490 = vpop.permute.xlu0 %489
    %v492 = vmul.f32 %v486, %v325
    %v493 = vmul.f32 %v490, %v325
    %v494 = vadd.f32 %v482, %v492
    %v495 = vadd.f32 %v483, %v493
    %496 = vset.pattern.permute.xlu0 6
    %497 = vperm.xlu0 %496, %v414
    %v498 = vpop.permute.xlu0 %497
    %500 = vset.pattern.permute.xlu0 6
    %501 = vperm.xlu0 %500, %v419
    %v502 = vpop.permute.xlu0 %501
    %v504 = vmul.f32 %v498, %v328
    %v505 = vmul.f32 %v502, %v328
    %v506 = vadd.f32 %v494, %v504
    %v507 = vadd.f32 %v495, %v505
    %508 = vset.pattern.permute.xlu0 7
    %509 = vperm.xlu0 %508, %v414
    %v510 = vpop.permute.xlu0 %509
    %512 = vset.pattern.permute.xlu0 7
    %513 = vperm.xlu0 %512, %v419
    %v514 = vpop.permute.xlu0 %513
    %v516 = vmul.f32 %v510, %v331
    %v517 = vmul.f32 %v514, %v331
    %v518 = vadd.f32 %v506, %v516
    %v519 = vadd.f32 %v507, %v517
    %520 = vrot.lane.b32.xlu0 %v294, 96
    %v521 = vpop.permute.xlu0 %520
    %v522 = vsel %vm340, %v521, 0
    %524 = vmatprep.subr.mxu0 0.0
    %525 = vmatpush1.xpose.msra.mxu0 %v522
    %526 = vmatprep.subr.mxu0 0.0
    %527 = vmatpush1.xpose.msra.mxu0 0.0
    %528 = vmatprep.subr.mxu0 0.0
    %529 = vmatpush1.xpose.msra.mxu0 0.0
    %530 = vmatprep.subr.mxu0 0.0
    %531 = vmatpush1.xpose.msra.mxu0 0.0
    %532 = vmatprep.subr.mxu0 0.0
    %533 = vmatpush1.xpose.msra.mxu0 0.0
    %534 = vmatprep.subr.mxu0 0.0
    %535 = vmatpush1.xpose.msra.mxu0 0.0
    %536 = vmatprep.subr.mxu0 0.0
    %537 = vmatpush1.xpose.msra.mxu0 0.0
    %538 = vmatprep.subr.mxu0 0.0
    %539 = vmatpush1.xpose.msra.mxu0 0.0
    %540 = vmatprep.subr.mxu0 0.0
    %541 = vmatpush1.xpose.msra.mxu0 0.0
    %542 = vmatprep.subr.mxu0 0.0
    %543 = vmatpush1.xpose.msra.mxu0 0.0
    %544 = vmatprep.subr.mxu0 0.0
    %545 = vmatpush1.xpose.msra.mxu0 0.0
    %546 = vmatprep.subr.mxu0 0.0
    %547 = vmatpush1.xpose.msra.mxu0 0.0
    %548 = vmatprep.subr.mxu0 0.0
    %549 = vmatpush1.xpose.msra.mxu0 0.0
    %550 = vmatprep.subr.mxu0 0.0
    %551 = vmatpush1.xpose.msra.mxu0 0.0
    %552 = vmatprep.subr.mxu0 0.0
    %553 = vmatpush1.xpose.msra.mxu0 0.0
    %554 = vmatprep.subr.mxu0 0.0
    %555 = vmatpush1.xpose.msra.mxu0 0.0
    %556 = vmatprep.subr.mxu0 0.0
    %557 = vmatpush1.xpose.msra.mxu0 0.0
    %558 = vmatprep.subr.mxu0 0.0
    %559 = vmatpush1.xpose.msra.mxu0 0.0
    %560 = vmatprep.subr.mxu0 0.0
    %561 = vmatpush1.xpose.msra.mxu0 0.0
    %562 = vmatprep.subr.mxu0 0.0
    %563 = vmatpush1.xpose.msra.mxu0 0.0
    %564 = vmatprep.subr.mxu0 0.0
    %565 = vmatpush1.xpose.msra.mxu0 0.0
    %566 = vmatprep.subr.mxu0 0.0
    %567 = vmatpush1.xpose.msra.mxu0 0.0
    %568 = vmatprep.subr.mxu0 0.0
    %569 = vmatpush1.xpose.msra.mxu0 0.0
    %570 = vmatprep.subr.mxu0 0.0
    %571 = vmatpush1.xpose.msra.mxu0 0.0
    %572 = vmatprep.subr.mxu0 0.0
    %573 = vmatpush1.xpose.msra.mxu0 0.0
    %574 = vmatprep.subr.mxu0 0.0
    %575 = vmatpush1.xpose.msra.mxu0 0.0
    %576 = vmatprep.subr.mxu0 0.0
    %577 = vmatpush1.xpose.msra.mxu0 0.0
    %578 = vmatprep.subr.mxu0 0.0
    %579 = vmatpush1.xpose.msra.mxu0 0.0
    %580 = vmatprep.subr.mxu0 0.0
    %581 = vmatpush1.xpose.msra.mxu0 0.0
    %582 = vmatprep.subr.mxu0 0.0
    %583 = vmatpush1.xpose.msra.mxu0 0.0
    %584 = vmatprep.subr.mxu0 0.0
    %585 = vmatpush1.xpose.msra.mxu0 0.0
    %586 = vmatprep.subr.mxu0 0.0
    %587 = vmatpush1.xpose.msra.mxu0 0.0
    %588 = vmatprep.mubr.f32.mxu0 0.0
    %589 = vmatmul.mubr.f32.gmra.mrb[0].mxu0 %v342
    %v590 = vpop.f32.mrb[0].mxu0
    %v591 = vadd.f32 %v518, %v590
    %v592 = vpop.f32.mrb[0].mxu0
    %593 = vdwg.mxu0
    %594 = vrot.lane.b32.xlu0 %v299, 96
    %v595 = vpop.permute.xlu0 %594
    %v596 = vsel %vm340, %v595, 0
    %598 = vmatprep.subr.mxu0 0.0
    %599 = vmatpush1.xpose.msra.mxu0 %v596
    %600 = vmatprep.subr.mxu0 0.0
    %601 = vmatpush1.xpose.msra.mxu0 0.0
    %602 = vmatprep.subr.mxu0 0.0
    %603 = vmatpush1.xpose.msra.mxu0 0.0
    %604 = vmatprep.subr.mxu0 0.0
    %605 = vmatpush1.xpose.msra.mxu0 0.0
    %606 = vmatprep.subr.mxu0 0.0
    %607 = vmatpush1.xpose.msra.mxu0 0.0
    %608 = vmatprep.subr.mxu0 0.0
    %609 = vmatpush1.xpose.msra.mxu0 0.0
    %610 = vmatprep.subr.mxu0 0.0
    %611 = vmatpush1.xpose.msra.mxu0 0.0
    %612 = vmatprep.subr.mxu0 0.0
    %613 = vmatpush1.xpose.msra.mxu0 0.0
    %614 = vmatprep.subr.mxu0 0.0
    %615 = vmatpush1.xpose.msra.mxu0 0.0
    %616 = vmatprep.subr.mxu0 0.0
    %617 = vmatpush1.xpose.msra.mxu0 0.0
    %618 = vmatprep.subr.mxu0 0.0
    %619 = vmatpush1.xpose.msra.mxu0 0.0
    %620 = vmatprep.subr.mxu0 0.0
    %621 = vmatpush1.xpose.msra.mxu0 0.0
    %622 = vmatprep.subr.mxu0 0.0
    %623 = vmatpush1.xpose.msra.mxu0 0.0
    %624 = vmatprep.subr.mxu0 0.0
    %625 = vmatpush1.xpose.msra.mxu0 0.0
    %626 = vmatprep.subr.mxu0 0.0
    %627 = vmatpush1.xpose.msra.mxu0 0.0
    %628 = vmatprep.subr.mxu0 0.0
    %629 = vmatpush1.xpose.msra.mxu0 0.0
    %630 = vmatprep.subr.mxu0 0.0
    %631 = vmatpush1.xpose.msra.mxu0 0.0
    %632 = vmatprep.subr.mxu0 0.0
    %633 = vmatpush1.xpose.msra.mxu0 0.0
    %634 = vmatprep.subr.mxu0 0.0
    %635 = vmatpush1.xpose.msra.mxu0 0.0
    %636 = vmatprep.subr.mxu0 0.0
    %637 = vmatpush1.xpose.msra.mxu0 0.0
    %638 = vmatprep.subr.mxu0 0.0
    %639 = vmatpush1.xpose.msra.mxu0 0.0
    %640 = vmatprep.subr.mxu0 0.0
    %641 = vmatpush1.xpose.msra.mxu0 0.0
    %642 = vmatprep.subr.mxu0 0.0
    %643 = vmatpush1.xpose.msra.mxu0 0.0
    %644 = vmatprep.subr.mxu0 0.0
    %645 = vmatpush1.xpose.msra.mxu0 0.0
    %646 = vmatprep.subr.mxu0 0.0
    %647 = vmatpush1.xpose.msra.mxu0 0.0
    %648 = vmatprep.subr.mxu0 0.0
    %649 = vmatpush1.xpose.msra.mxu0 0.0
    %650 = vmatprep.subr.mxu0 0.0
    %651 = vmatpush1.xpose.msra.mxu0 0.0
    %652 = vmatprep.subr.mxu0 0.0
    %653 = vmatpush1.xpose.msra.mxu0 0.0
    %654 = vmatprep.subr.mxu0 0.0
    %655 = vmatpush1.xpose.msra.mxu0 0.0
    %656 = vmatprep.subr.mxu0 0.0
    %657 = vmatpush1.xpose.msra.mxu0 0.0
    %658 = vmatprep.subr.mxu0 0.0
    %659 = vmatpush1.xpose.msra.mxu0 0.0
    %660 = vmatprep.subr.mxu0 0.0
    %661 = vmatpush1.xpose.msra.mxu0 0.0
    %662 = vmatprep.mubr.f32.mxu0 0.0
    %663 = vmatmul.mubr.f32.gmra.mrb[0].mxu0 %v345
    %v664 = vpop.f32.mrb[0].mxu0
    %v665 = vadd.f32 %v519, %v664
    %v666 = vpop.f32.mrb[0].mxu0
    %667 = vdwg.mxu0
    %v668 = vsel %vm306, 1, 0
    %vm669 = vcmp.eq.s32.totalorder %v668, 1
    %v670 = vsel %vm669, %v591, -1e+30
    %v671 = vsel %vm669, %v665, -1e+30
    %v672 = vsel %vm340, %v670, -inf
    %673 = vmax.xlane.f32.xlu0 %v672
    %v674 = vpop.xlane.xlu0 %673
    %v675 = vsel %vm340, %v671, -inf
    %676 = vmax.xlane.f32.xlu0 %v675
    %v677 = vpop.xlane.xlu0 %676
    %v678 = vsub.f32 %v670, %v674
    %v679 = vsub.f32 %v671, %v677
    %v680 = vmul.f32 %v678, 1.442695
    %v681 = vpow.pop %v680
    %v682 = vmul.f32 %v679, 1.442695
    %v683 = vpow.pop %v682
    %v684 = vsel %vm340, %v681, 0.0
    %685 = vadd.xlane.f32.xlu0 %v684
    %v686 = vpop.xlane.xlu0 %685
    %v687 = vsel %vm340, %v683, 0.0
    %688 = vadd.xlane.f32.xlu0 %v687
    %v689 = vpop.xlane.xlu0 %688
    %v690 = vrcp.pop %v686
    %v691 = vmul.f32 %v681, %v690
    %v692 = vrcp.pop %v689
    %v693 = vmul.f32 %v683, %v692
    %694 = vrot.lane.b32.xlu0 %v294, 64
    %v695 = vpop.permute.xlu0 %694
    %v698 = vsel %vm340, %v691, 0
    %700 = vmatprep.subr.mxu0 0.0
    %701 = vmatpush1.msra.mxu0 %v695
    %702 = vmatprep.subr.mxu0 0.0
    %703 = vmatpush1.msra.mxu0 0.0
    %704 = vmatprep.subr.mxu0 0.0
    %705 = vmatpush1.msra.mxu0 0.0
    %706 = vmatprep.subr.mxu0 0.0
    %707 = vmatpush1.msra.mxu0 0.0
    %708 = vmatprep.subr.mxu0 0.0
    %709 = vmatpush1.msra.mxu0 0.0
    %710 = vmatprep.subr.mxu0 0.0
    %711 = vmatpush1.msra.mxu0 0.0
    %712 = vmatprep.subr.mxu0 0.0
    %713 = vmatpush1.msra.mxu0 0.0
    %714 = vmatprep.subr.mxu0 0.0
    %715 = vmatpush1.msra.mxu0 0.0
    %716 = vmatprep.subr.mxu0 0.0
    %717 = vmatpush1.msra.mxu0 0.0
    %718 = vmatprep.subr.mxu0 0.0
    %719 = vmatpush1.msra.mxu0 0.0
    %720 = vmatprep.subr.mxu0 0.0
    %721 = vmatpush1.msra.mxu0 0.0
    %722 = vmatprep.subr.mxu0 0.0
    %723 = vmatpush1.msra.mxu0 0.0
    %724 = vmatprep.subr.mxu0 0.0
    %725 = vmatpush1.msra.mxu0 0.0
    %726 = vmatprep.subr.mxu0 0.0
    %727 = vmatpush1.msra.mxu0 0.0
    %728 = vmatprep.subr.mxu0 0.0
    %729 = vmatpush1.msra.mxu0 0.0
    %730 = vmatprep.subr.mxu0 0.0
    %731 = vmatpush1.msra.mxu0 0.0
    %732 = vmatprep.subr.mxu0 0.0
    %733 = vmatpush1.msra.mxu0 0.0
    %734 = vmatprep.subr.mxu0 0.0
    %735 = vmatpush1.msra.mxu0 0.0
    %736 = vmatprep.subr.mxu0 0.0
    %737 = vmatpush1.msra.mxu0 0.0
    %738 = vmatprep.subr.mxu0 0.0
    %739 = vmatpush1.msra.mxu0 0.0
    %740 = vmatprep.subr.mxu0 0.0
    %741 = vmatpush1.msra.mxu0 0.0
    %742 = vmatprep.subr.mxu0 0.0
    %743 = vmatpush1.msra.mxu0 0.0
    %744 = vmatprep.subr.mxu0 0.0
    %745 = vmatpush1.msra.mxu0 0.0
    %746 = vmatprep.subr.mxu0 0.0
    %747 = vmatpush1.msra.mxu0 0.0
    %748 = vmatprep.subr.mxu0 0.0
    %749 = vmatpush1.msra.mxu0 0.0
    %750 = vmatprep.subr.mxu0 0.0
    %751 = vmatpush1.msra.mxu0 0.0
    %752 = vmatprep.subr.mxu0 0.0
    %753 = vmatpush1.msra.mxu0 0.0
    %754 = vmatprep.subr.mxu0 0.0
    %755 = vmatpush1.msra.mxu0 0.0
    %756 = vmatprep.subr.mxu0 0.0
    %757 = vmatpush1.msra.mxu0 0.0
    %758 = vmatprep.subr.mxu0 0.0
    %759 = vmatpush1.msra.mxu0 0.0
    %760 = vmatprep.subr.mxu0 0.0
    %761 = vmatpush1.msra.mxu0 0.0
    %762 = vmatprep.subr.mxu0 0.0
    %763 = vmatpush1.msra.mxu0 0.0
    %764 = vmatprep.mubr.f32.mxu0 0.0
    %765 = vmatmul.mubr.f32.gmra.mrb[0].mxu0 %v698
    %v766 = vpop.f32.mrb[0].mxu0
    %v767 = vadd.f32 0.0, %v766
    %v768 = vpop.f32.mrb[0].mxu0
    %769 = vdwg.mxu0
    %770 = vrot.lane.b32.xlu0 %v299, 64
    %v771 = vpop.permute.xlu0 %770
    %v774 = vsel %vm340, %v693, 0
    %776 = vmatprep.subr.mxu0 0.0
    %777 = vmatpush1.msra.mxu0 %v771
    %778 = vmatprep.subr.mxu0 0.0
    %779 = vmatpush1.msra.mxu0 0.0
    %780 = vmatprep.subr.mxu0 0.0
    %781 = vmatpush1.msra.mxu0 0.0
    %782 = vmatprep.subr.mxu0 0.0
    %783 = vmatpush1.msra.mxu0 0.0
    %784 = vmatprep.subr.mxu0 0.0
    %785 = vmatpush1.msra.mxu0 0.0
    %786 = vmatprep.subr.mxu0 0.0
    %787 = vmatpush1.msra.mxu0 0.0
    %788 = vmatprep.subr.mxu0 0.0
    %789 = vmatpush1.msra.mxu0 0.0
    %790 = vmatprep.subr.mxu0 0.0
    %791 = vmatpush1.msra.mxu0 0.0
    %792 = vmatprep.subr.mxu0 0.0
    %793 = vmatpush1.msra.mxu0 0.0
    %794 = vmatprep.subr.mxu0 0.0
    %795 = vmatpush1.msra.mxu0 0.0
    %796 = vmatprep.subr.mxu0 0.0
    %797 = vmatpush1.msra.mxu0 0.0
    %798 = vmatprep.subr.mxu0 0.0
    %799 = vmatpush1.msra.mxu0 0.0
    %800 = vmatprep.subr.mxu0 0.0
    %801 = vmatpush1.msra.mxu0 0.0
    %802 = vmatprep.subr.mxu0 0.0
    %803 = vmatpush1.msra.mxu0 0.0
    %804 = vmatprep.subr.mxu0 0.0
    %805 = vmatpush1.msra.mxu0 0.0
    %806 = vmatprep.subr.mxu0 0.0
    %807 = vmatpush1.msra.mxu0 0.0
    %808 = vmatprep.subr.mxu0 0.0
    %809 = vmatpush1.msra.mxu0 0.0
    %810 = vmatprep.subr.mxu0 0.0
    %811 = vmatpush1.msra.mxu0 0.0
    %812 = vmatprep.subr.mxu0 0.0
    %813 = vmatpush1.msra.mxu0 0.0
    %814 = vmatprep.subr.mxu0 0.0
    %815 = vmatpush1.msra.mxu0 0.0
    %816 = vmatprep.subr.mxu0 0.0
    %817 = vmatpush1.msra.mxu0 0.0
    %818 = vmatprep.subr.mxu0 0.0
    %819 = vmatpush1.msra.mxu0 0.0
    %820 = vmatprep.subr.mxu0 0.0
    %821 = vmatpush1.msra.mxu0 0.0
    %822 = vmatprep.subr.mxu0 0.0
    %823 = vmatpush1.msra.mxu0 0.0
    %824 = vmatprep.subr.mxu0 0.0
    %825 = vmatpush1.msra.mxu0 0.0
    %826 = vmatprep.subr.mxu0 0.0
    %827 = vmatpush1.msra.mxu0 0.0
    %828 = vmatprep.subr.mxu0 0.0
    %829 = vmatpush1.msra.mxu0 0.0
    %830 = vmatprep.subr.mxu0 0.0
    %831 = vmatpush1.msra.mxu0 0.0
    %832 = vmatprep.subr.mxu0 0.0
    %833 = vmatpush1.msra.mxu0 0.0
    %834 = vmatprep.subr.mxu0 0.0
    %835 = vmatpush1.msra.mxu0 0.0
    %836 = vmatprep.subr.mxu0 0.0
    %837 = vmatpush1.msra.mxu0 0.0
    %838 = vmatprep.subr.mxu0 0.0
    %839 = vmatpush1.msra.mxu0 0.0
    %840 = vmatprep.mubr.f32.mxu0 0.0
    %841 = vmatmul.mubr.f32.gmra.mrb[0].mxu0 %v774
    %v842 = vpop.f32.mrb[0].mxu0
    %v843 = vadd.f32 0.0, %v842
    %v844 = vpop.f32.mrb[0].mxu0
    %845 = vdwg.mxu0
    %v846 = vld [vmem:[%s6] sm:$0xff]
    %v848 = vsel %vm340, %v767, 0
    %v851 = vsel %vm340, %v843, 0
    %853 = vmatprep.subr.mxu0 0.0
    %854 = vmatpush1.msra.mxu0 %v846
    %855 = vmatprep.subr.mxu0 0.0
    %856 = vmatpush1.msra.mxu0 0.0
    %857 = vmatprep.subr.mxu0 0.0
    %858 = vmatpush1.msra.mxu0 0.0
    %859 = vmatprep.subr.mxu0 0.0
    %860 = vmatpush1.msra.mxu0 0.0
    %861 = vmatprep.subr.mxu0 0.0
    %862 = vmatpush1.msra.mxu0 0.0
    %863 = vmatprep.subr.mxu0 0.0
    %864 = vmatpush1.msra.mxu0 0.0
    %865 = vmatprep.subr.mxu0 0.0
    %866 = vmatpush1.msra.mxu0 0.0
    %867 = vmatprep.subr.mxu0 0.0
    %868 = vmatpush1.msra.mxu0 0.0
    %869 = vmatprep.subr.mxu0 0.0
    %870 = vmatpush1.msra.mxu0 0.0
    %871 = vmatprep.subr.mxu0 0.0
    %872 = vmatpush1.msra.mxu0 0.0
    %873 = vmatprep.subr.mxu0 0.0
    %874 = vmatpush1.msra.mxu0 0.0
    %875 = vmatprep.subr.mxu0 0.0
    %876 = vmatpush1.msra.mxu0 0.0
    %877 = vmatprep.subr.mxu0 0.0
    %878 = vmatpush1.msra.mxu0 0.0
    %879 = vmatprep.subr.mxu0 0.0
    %880 = vmatpush1.msra.mxu0 0.0
    %881 = vmatprep.subr.mxu0 0.0
    %882 = vmatpush1.msra.mxu0 0.0
    %883 = vmatprep.subr.mxu0 0.0
    %884 = vmatpush1.msra.mxu0 0.0
    %885 = vmatprep.subr.mxu0 0.0
    %886 = vmatpush1.msra.mxu0 0.0
    %887 = vmatprep.subr.mxu0 0.0
    %888 = vmatpush1.msra.mxu0 0.0
    %889 = vmatprep.subr.mxu0 0.0
    %890 = vmatpush1.msra.mxu0 0.0
    %891 = vmatprep.subr.mxu0 0.0
    %892 = vmatpush1.msra.mxu0 0.0
    %893 = vmatprep.subr.mxu0 0.0
    %894 = vmatpush1.msra.mxu0 0.0
    %895 = vmatprep.subr.mxu0 0.0
    %896 = vmatpush1.msra.mxu0 0.0
    %897 = vmatprep.subr.mxu0 0.0
    %898 = vmatpush1.msra.mxu0 0.0
    %899 = vmatprep.subr.mxu0 0.0
    %900 = vmatpush1.msra.mxu0 0.0
    %901 = vmatprep.subr.mxu0 0.0
    %902 = vmatpush1.msra.mxu0 0.0
    %903 = vmatprep.subr.mxu0 0.0
    %904 = vmatpush1.msra.mxu0 0.0
    %905 = vmatprep.subr.mxu0 0.0
    %906 = vmatpush1.msra.mxu0 0.0
    %907 = vmatprep.subr.mxu0 0.0
    %908 = vmatpush1.msra.mxu0 0.0
    %909 = vmatprep.subr.mxu0 0.0
    %910 = vmatpush1.msra.mxu0 0.0
    %911 = vmatprep.subr.mxu0 0.0
    %912 = vmatpush1.msra.mxu0 0.0
    %913 = vmatprep.subr.mxu0 0.0
    %914 = vmatpush1.msra.mxu0 0.0
    %915 = vmatprep.subr.mxu0 0.0
    %916 = vmatpush1.msra.mxu0 0.0
    %917 = vmatprep.mubr.f32.mxu0 0.0
    %918 = vmatmul.mubr.f32.gmra.mrb[0].mxu0 %v848
    %v919 = vpop.f32.mrb[0].mxu0
    %v920 = vadd.f32 0.0, %v919
    %v921 = vpop.f32.mrb[0].mxu0
    %922 = vmatprep.mubr.f32.mxu0 0.0
    %923 = vmatmul.mubr.f32.gmra.mrb[0].mxu0 %v851
    %v924 = vpop.f32.mrb[0].mxu0
    %v925 = vadd.f32 0.0, %v924
    %v926 = vpop.f32.mrb[0].mxu0
    %927 = vdwg.mxu0
    %v928 = vadd.f32 %v338, %v920
    %v929 = vadd.f32 %v338, %v925
    %930 = vrot.lane.b32.xlu0 %v294, 120
    %v931 = vpop.permute.xlu0 %930
    %932 = vrot.lane.b32.xlu0 %v299, 120
    %v933 = vpop.permute.xlu0 %932
    %v934 = vsel %vm340, %v931, 0
    %v936 = vsel %vm340, %v933, 0
    %938 = vmatprep.subr.mxu0 0.0
    %939 = vmatpush1.msra.mxu0 %v332
    %940 = vmatprep.subr.mxu0 0.0
    %941 = vmatpush1.msra.mxu0 0.0
    %942 = vmatprep.subr.mxu0 0.0
    %943 = vmatpush1.msra.mxu0 0.0
    %944 = vmatprep.subr.mxu0 0.0
    %945 = vmatpush1.msra.mxu0 0.0
    %946 = vmatprep.subr.mxu0 0.0
    %947 = vmatpush1.msra.mxu0 0.0
    %948 = vmatprep.subr.mxu0 0.0
    %949 = vmatpush1.msra.mxu0 0.0
    %950 = vmatprep.subr.mxu0 0.0
    %951 = vmatpush1.msra.mxu0 0.0
    %952 = vmatprep.subr.mxu0 0.0
    %953 = vmatpush1.msra.mxu0 0.0
    %954 = vmatprep.subr.mxu0 0.0
    %955 = vmatpush1.msra.mxu0 0.0
    %956 = vmatprep.subr.mxu0 0.0
    %957 = vmatpush1.msra.mxu0 0.0
    %958 = vmatprep.subr.mxu0 0.0
    %959 = vmatpush1.msra.mxu0 0.0
    %960 = vmatprep.subr.mxu0 0.0
    %961 = vmatpush1.msra.mxu0 0.0
    %962 = vmatprep.subr.mxu0 0.0
    %963 = vmatpush1.msra.mxu0 0.0
    %964 = vmatprep.subr.mxu0 0.0
    %965 = vmatpush1.msra.mxu0 0.0
    %966 = vmatprep.subr.mxu0 0.0
    %967 = vmatpush1.msra.mxu0 0.0
    %968 = vmatprep.subr.mxu0 0.0
    %969 = vmatpush1.msra.mxu0 0.0
    %970 = vmatprep.subr.mxu0 0.0
    %971 = vmatpush1.msra.mxu0 0.0
    %972 = vmatprep.subr.mxu0 0.0
    %973 = vmatpush1.msra.mxu0 0.0
    %974 = vmatprep.subr.mxu0 0.0
    %975 = vmatpush1.msra.mxu0 0.0
    %976 = vmatprep.subr.mxu0 0.0
    %977 = vmatpush1.msra.mxu0 0.0
    %978 = vmatprep.subr.mxu0 0.0
    %979 = vmatpush1.msra.mxu0 0.0
    %980 = vmatprep.subr.mxu0 0.0
    %981 = vmatpush1.msra.mxu0 0.0
    %982 = vmatprep.subr.mxu0 0.0
    %983 = vmatpush1.msra.mxu0 0.0
    %984 = vmatprep.subr.mxu0 0.0
    %985 = vmatpush1.msra.mxu0 0.0
    %986 = vmatprep.subr.mxu0 0.0
    %987 = vmatpush1.msra.mxu0 0.0
    %988 = vmatprep.subr.mxu0 0.0
    %989 = vmatpush1.msra.mxu0 0.0
    %990 = vmatprep.subr.mxu0 0.0
    %991 = vmatpush1.msra.mxu0 0.0
    %992 = vmatprep.subr.mxu0 0.0
    %993 = vmatpush1.msra.mxu0 0.0
    %994 = vmatprep.subr.mxu0 0.0
    %995 = vmatpush1.msra.mxu0 0.0
    %996 = vmatprep.subr.mxu0 0.0
    %997 = vmatpush1.msra.mxu0 0.0
    %998 = vmatprep.subr.mxu0 0.0
    %999 = vmatpush1.msra.mxu0 0.0
    %1000 = vmatprep.subr.mxu0 0.0
    %1001 = vmatpush1.msra.mxu0 0.0
    %1002 = vmatprep.mubr.f32.mxu0 0.0
    %1003 = vmatmul.mubr.f32.gmra.mrb[0].mxu0 %v934
    %v1004 = vpop.f32.mrb[0].mxu0
    %v1005 = vadd.f32 0.0, %v1004
    %v1006 = vpop.f32.mrb[0].mxu0
    %1007 = vmatprep.mubr.f32.mxu0 0.0
    %1008 = vmatmul.mubr.f32.gmra.mrb[0].mxu0 %v936
    %v1009 = vpop.f32.mrb[0].mxu0
    %v1010 = vadd.f32 0.0, %v1009
    %v1011 = vpop.f32.mrb[0].mxu0
    %1012 = vdwg.mxu0
    %1014 = vset.pattern.permute.xlu0 0
    %1015 = vperm.xlu0 %1014, %v1005
    %v1016 = vpop.permute.xlu0 %1015
    %1019 = vset.pattern.permute.xlu0 0
    %1020 = vperm.xlu0 %1019, %v1010
    %v1021 = vpop.permute.xlu0 %1020
    %v1023 = vmul.f32 %v1016, %v310
    %v1024 = vmul.f32 %v1021, %v310
    %v1025 = vadd.f32 %v1023, 0.0
    %v1026 = vadd.f32 %v1024, 0.0
    %1027 = vset.pattern.permute.xlu0 1
    %1028 = vperm.xlu0 %1027, %v1005
    %v1029 = vpop.permute.xlu0 %1028
    %1031 = vset.pattern.permute.xlu0 1
    %1032 = vperm.xlu0 %1031, %v1010
    %v1033 = vpop.permute.xlu0 %1032
    %v1035 = vmul.f32 %v1029, %v313
    %v1036 = vmul.f32 %v1033, %v313
    %v1037 = vadd.f32 %v1025, %v1035
    %v1038 = vadd.f32 %v1026, %v1036
    %1039 = vset.pattern.permute.xlu0 2
    %1040 = vperm.xlu0 %1039, %v1005
    %v1041 = vpop.permute.xlu0 %1040
    %1043 = vset.pattern.permute.xlu0 2
    %1044 = vperm.xlu0 %1043, %v1010
    %v1045 = vpop.permute.xlu0 %1044
    %v1047 = vmul.f32 %v1041, %v316
    %v1048 = vmul.f32 %v1045, %v316
    %v1049 = vadd.f32 %v1037, %v1047
    %v1050 = vadd.f32 %v1038, %v1048
    %1051 = vset.pattern.permute.xlu0 3
    %1052 = vperm.xlu0 %1051, %v1005
    %v1053 = vpop.permute.xlu0 %1052
    %1055 = vset.pattern.permute.xlu0 3
    %1056 = vperm.xlu0 %1055, %v1010
    %v1057 = vpop.permute.xlu0 %1056
    %v1059 = vmul.f32 %v1053, %v319
    %v1060 = vmul.f32 %v1057, %v319
    %v1061 = vadd.f32 %v1049, %v1059
    %v1062 = vadd.f32 %v1050, %v1060
    %1063 = vset.pattern.permute.xlu0 4
    %1064 = vperm.xlu0 %1063, %v1005
    %v1065 = vpop.permute.xlu0 %1064
    %1067 = vset.pattern.permute.xlu0 4
    %1068 = vperm.xlu0 %1067, %v1010
    %v1069 = vpop.permute.xlu0 %1068
    %v1071 = vmul.f32 %v1065, %v322
    %v1072 = vmul.f32 %v1069, %v322
    %v1073 = vadd.f32 %v1061, %v1071
    %v1074 = vadd.f32 %v1062, %v1072
    %1075 = vset.pattern.permute.xlu0 5
    %1076 = vperm.xlu0 %1075, %v1005
    %v1077 = vpop.permute.xlu0 %1076
    %1079 = vset.pattern.permute.xlu0 5
    %1080 = vperm.xlu0 %1079, %v1010
    %v1081 = vpop.permute.xlu0 %1080
    %v1083 = vmul.f32 %v1077, %v325
    %v1084 = vmul.f32 %v1081, %v325
    %v1085 = vadd.f32 %v1073, %v1083
    %v1086 = vadd.f32 %v1074, %v1084
    %1087 = vset.pattern.permute.xlu0 6
    %1088 = vperm.xlu0 %1087, %v1005
    %v1089 = vpop.permute.xlu0 %1088
    %1091 = vset.pattern.permute.xlu0 6
    %1092 = vperm.xlu0 %1091, %v1010
    %v1093 = vpop.permute.xlu0 %1092
    %v1095 = vmul.f32 %v1089, %v328
    %v1096 = vmul.f32 %v1093, %v328
    %v1097 = vadd.f32 %v1085, %v1095
    %v1098 = vadd.f32 %v1086, %v1096
    %1099 = vset.pattern.permute.xlu0 7
    %1100 = vperm.xlu0 %1099, %v1005
    %v1101 = vpop.permute.xlu0 %1100
    %1103 = vset.pattern.permute.xlu0 7
    %1104 = vperm.xlu0 %1103, %v1010
    %v1105 = vpop.permute.xlu0 %1104
    %v1107 = vmul.f32 %v1101, %v331
    %v1108 = vmul.f32 %v1105, %v331
    %v1109 = vadd.f32 %v1097, %v1107
    %v1110 = vadd.f32 %v1098, %v1108
    %1111 = vrot.lane.b32.xlu0 %v294, 88
    %v1112 = vpop.permute.xlu0 %1111
    %v1113 = vsel %vm340, %v1112, 0
    %1115 = vmatprep.subr.mxu0 0.0
    %1116 = vmatpush1.xpose.msra.mxu0 %v1113
    %1117 = vmatprep.subr.mxu0 0.0
    %1118 = vmatpush1.xpose.msra.mxu0 0.0
    %1119 = vmatprep.subr.mxu0 0.0
    %1120 = vmatpush1.xpose.msra.mxu0 0.0
    %1121 = vmatprep.subr.mxu0 0.0
    %1122 = vmatpush1.xpose.msra.mxu0 0.0
    %1123 = vmatprep.subr.mxu0 0.0
    %1124 = vmatpush1.xpose.msra.mxu0 0.0
    %1125 = vmatprep.subr.mxu0 0.0
    %1126 = vmatpush1.xpose.msra.mxu0 0.0
    %1127 = vmatprep.subr.mxu0 0.0
    %1128 = vmatpush1.xpose.msra.mxu0 0.0
    %1129 = vmatprep.subr.mxu0 0.0
    %1130 = vmatpush1.xpose.msra.mxu0 0.0
    %1131 = vmatprep.subr.mxu0 0.0
    %1132 = vmatpush1.xpose.msra.mxu0 0.0
    %1133 = vmatprep.subr.mxu0 0.0
    %1134 = vmatpush1.xpose.msra.mxu0 0.0
    %1135 = vmatprep.subr.mxu0 0.0
    %1136 = vmatpush1.xpose.msra.mxu0 0.0
    %1137 = vmatprep.subr.mxu0 0.0
    %1138 = vmatpush1.xpose.msra.mxu0 0.0
    %1139 = vmatprep.subr.mxu0 0.0
    %1140 = vmatpush1.xpose.msra.mxu0 0.0
    %1141 = vmatprep.subr.mxu0 0.0
    %1142 = vmatpush1.xpose.msra.mxu0 0.0
    %1143 = vmatprep.subr.mxu0 0.0
    %1144 = vmatpush1.xpose.msra.mxu0 0.0
    %1145 = vmatprep.subr.mxu0 0.0
    %1146 = vmatpush1.xpose.msra.mxu0 0.0
    %1147 = vmatprep.subr.mxu0 0.0
    %1148 = vmatpush1.xpose.msra.mxu0 0.0
    %1149 = vmatprep.subr.mxu0 0.0
    %1150 = vmatpush1.xpose.msra.mxu0 0.0
    %1151 = vmatprep.subr.mxu0 0.0
    %1152 = vmatpush1.xpose.msra.mxu0 0.0
    %1153 = vmatprep.subr.mxu0 0.0
    %1154 = vmatpush1.xpose.msra.mxu0 0.0
    %1155 = vmatprep.subr.mxu0 0.0
    %1156 = vmatpush1.xpose.msra.mxu0 0.0
    %1157 = vmatprep.subr.mxu0 0.0
    %1158 = vmatpush1.xpose.msra.mxu0 0.0
    %1159 = vmatprep.subr.mxu0 0.0
    %1160 = vmatpush1.xpose.msra.mxu0 0.0
    %1161 = vmatprep.subr.mxu0 0.0
    %1162 = vmatpush1.xpose.msra.mxu0 0.0
    %1163 = vmatprep.subr.mxu0 0.0
    %1164 = vmatpush1.xpose.msra.mxu0 0.0
    %1165 = vmatprep.subr.mxu0 0.0
    %1166 = vmatpush1.xpose.msra.mxu0 0.0
    %1167 = vmatprep.subr.mxu0 0.0
    %1168 = vmatpush1.xpose.msra.mxu0 0.0
    %1169 = vmatprep.subr.mxu0 0.0
    %1170 = vmatpush1.xpose.msra.mxu0 0.0
    %1171 = vmatprep.subr.mxu0 0.0
    %1172 = vmatpush1.xpose.msra.mxu0 0.0
    %1173 = vmatprep.subr.mxu0 0.0
    %1174 = vmatpush1.xpose.msra.mxu0 0.0
    %1175 = vmatprep.subr.mxu0 0.0
    %1176 = vmatpush1.xpose.msra.mxu0 0.0
    %1177 = vmatprep.subr.mxu0 0.0
    %1178 = vmatpush1.xpose.msra.mxu0 0.0
    %1179 = vmatprep.mubr.f32.mxu0 0.0
    %1180 = vmatmul.mubr.f32.gmra.mrb[0].mxu0 %v934
    %v1181 = vpop.f32.mrb[0].mxu0
    %v1182 = vadd.f32 %v1109, %v1181
    %v1183 = vpop.f32.mrb[0].mxu0
    %1184 = vdwg.mxu0
    %1185 = vrot.lane.b32.xlu0 %v299, 88
    %v1186 = vpop.permute.xlu0 %1185
    %v1187 = vsel %vm340, %v1186, 0
    %1189 = vmatprep.subr.mxu0 0.0
    %1190 = vmatpush1.xpose.msra.mxu0 %v1187
    %1191 = vmatprep.subr.mxu0 0.0
    %1192 = vmatpush1.xpose.msra.mxu0 0.0
    %1193 = vmatprep.subr.mxu0 0.0
    %1194 = vmatpush1.xpose.msra.mxu0 0.0
    %1195 = vmatprep.subr.mxu0 0.0
    %1196 = vmatpush1.xpose.msra.mxu0 0.0
    %1197 = vmatprep.subr.mxu0 0.0
    %1198 = vmatpush1.xpose.msra.mxu0 0.0
    %1199 = vmatprep.subr.mxu0 0.0
    %1200 = vmatpush1.xpose.msra.mxu0 0.0
    %1201 = vmatprep.subr.mxu0 0.0
    %1202 = vmatpush1.xpose.msra.mxu0 0.0
    %1203 = vmatprep.subr.mxu0 0.0
    %1204 = vmatpush1.xpose.msra.mxu0 0.0
    %1205 = vmatprep.subr.mxu0 0.0
    %1206 = vmatpush1.xpose.msra.mxu0 0.0
    %1207 = vmatprep.subr.mxu0 0.0
    %1208 = vmatpush1.xpose.msra.mxu0 0.0
    %1209 = vmatprep.subr.mxu0 0.0
    %1210 = vmatpush1.xpose.msra.mxu0 0.0
    %1211 = vmatprep.subr.mxu0 0.0
    %1212 = vmatpush1.xpose.msra.mxu0 0.0
    %1213 = vmatprep.subr.mxu0 0.0
    %1214 = vmatpush1.xpose.msra.mxu0 0.0
    %1215 = vmatprep.subr.mxu0 0.0
    %1216 = vmatpush1.xpose.msra.mxu0 0.0
    %1217 = vmatprep.subr.mxu0 0.0
    %1218 = vmatpush1.xpose.msra.mxu0 0.0
    %1219 = vmatprep.subr.mxu0 0.0
    %1220 = vmatpush1.xpose.msra.mxu0 0.0
    %1221 = vmatprep.subr.mxu0 0.0
    %1222 = vmatpush1.xpose.msra.mxu0 0.0
    %1223 = vmatprep.subr.mxu0 0.0
    %1224 = vmatpush1.xpose.msra.mxu0 0.0
    %1225 = vmatprep.subr.mxu0 0.0
    %1226 = vmatpush1.xpose.msra.mxu0 0.0
    %1227 = vmatprep.subr.mxu0 0.0
    %1228 = vmatpush1.xpose.msra.mxu0 0.0
    %1229 = vmatprep.subr.mxu0 0.0
    %1230 = vmatpush1.xpose.msra.mxu0 0.0
    %1231 = vmatprep.subr.mxu0 0.0
    %1232 = vmatpush1.xpose.msra.mxu0 0.0
    %1233 = vmatprep.subr.mxu0 0.0
    %1234 = vmatpush1.xpose.msra.mxu0 0.0
    %1235 = vmatprep.subr.mxu0 0.0
    %1236 = vmatpush1.xpose.msra.mxu0 0.0
    %1237 = vmatprep.subr.mxu0 0.0
    %1238 = vmatpush1.xpose.msra.mxu0 0.0
    %1239 = vmatprep.subr.mxu0 0.0
    %1240 = vmatpush1.xpose.msra.mxu0 0.0
    %1241 = vmatprep.subr.mxu0 0.0
    %1242 = vmatpush1.xpose.msra.mxu0 0.0
    %1243 = vmatprep.subr.mxu0 0.0
    %1244 = vmatpush1.xpose.msra.mxu0 0.0
    %1245 = vmatprep.subr.mxu0 0.0
    %1246 = vmatpush1.xpose.msra.mxu0 0.0
    %1247 = vmatprep.subr.mxu0 0.0
    %1248 = vmatpush1.xpose.msra.mxu0 0.0
    %1249 = vmatprep.subr.mxu0 0.0
    %1250 = vmatpush1.xpose.msra.mxu0 0.0
    %1251 = vmatprep.subr.mxu0 0.0
    %1252 = vmatpush1.xpose.msra.mxu0 0.0
    %1253 = vmatprep.mubr.f32.mxu0 0.0
    %1254 = vmatmul.mubr.f32.gmra.mrb[0].mxu0 %v936
    %v1255 = vpop.f32.mrb[0].mxu0
    %v1256 = vadd.f32 %v1110, %v1255
    %v1257 = vpop.f32.mrb[0].mxu0
    %1258 = vdwg.mxu0
    %v1259 = vsel %vm669, %v1182, -1e+30
    %v1260 = vsel %vm669, %v1256, -1e+30
    %v1261 = vsel %vm340, %v1259, -inf
    %1262 = vmax.xlane.f32.xlu0 %v1261
    %v1263 = vpop.xlane.xlu0 %1262
    %v1264 = vsel %vm340, %v1260, -inf
    %1265 = vmax.xlane.f32.xlu0 %v1264
    %v1266 = vpop.xlane.xlu0 %1265
    %v1267 = vsub.f32 %v1259, %v1263
    %v1268 = vsub.f32 %v1260, %v1266
    %v1269 = vmul.f32 %v1267, 1.442695
    %v1270 = vpow.pop %v1269
    %v1271 = vmul.f32 %v1268, 1.442695
    %v1272 = vpow.pop %v1271
    %v1273 = vsel %vm340, %v1270, 0.0
    %1274 = vadd.xlane.f32.xlu0 %v1273
    %v1275 = vpop.xlane.xlu0 %1274
    %v1276 = vsel %vm340, %v1272, 0.0
    %1277 = vadd.xlane.f32.xlu0 %v1276
    %v1278 = vpop.xlane.xlu0 %1277
    %v1279 = vrcp.pop %v1275
    %v1280 = vmul.f32 %v1270, %v1279
    %v1281 = vrcp.pop %v1278
    %v1282 = vmul.f32 %v1272, %v1281
    %1283 = vrot.lane.b32.xlu0 %v294, 56
    %v1284 = vpop.permute.xlu0 %1283
    %v1287 = vsel %vm340, %v1280, 0
    %1289 = vmatprep.subr.mxu0 0.0
    %1290 = vmatpush1.msra.mxu0 %v1284
    %1291 = vmatprep.subr.mxu0 0.0
    %1292 = vmatpush1.msra.mxu0 0.0
    %1293 = vmatprep.subr.mxu0 0.0
    %1294 = vmatpush1.msra.mxu0 0.0
    %1295 = vmatprep.subr.mxu0 0.0
    %1296 = vmatpush1.msra.mxu0 0.0
    %1297 = vmatprep.subr.mxu0 0.0
    %1298 = vmatpush1.msra.mxu0 0.0
    %1299 = vmatprep.subr.mxu0 0.0
    %1300 = vmatpush1.msra.mxu0 0.0
    %1301 = vmatprep.subr.mxu0 0.0
    %1302 = vmatpush1.msra.mxu0 0.0
    %1303 = vmatprep.subr.mxu0 0.0
    %1304 = vmatpush1.msra.mxu0 0.0
    %1305 = vmatprep.subr.mxu0 0.0
    %1306 = vmatpush1.msra.mxu0 0.0
    %1307 = vmatprep.subr.mxu0 0.0
    %1308 = vmatpush1.msra.mxu0 0.0
    %1309 = vmatprep.subr.mxu0 0.0
    %1310 = vmatpush1.msra.mxu0 0.0
    %1311 = vmatprep.subr.mxu0 0.0
    %1312 = vmatpush1.msra.mxu0 0.0
    %1313 = vmatprep.subr.mxu0 0.0
    %1314 = vmatpush1.msra.mxu0 0.0
    %1315 = vmatprep.subr.mxu0 0.0
    %1316 = vmatpush1.msra.mxu0 0.0
    %1317 = vmatprep.subr.mxu0 0.0
    %1318 = vmatpush1.msra.mxu0 0.0
    %1319 = vmatprep.subr.mxu0 0.0
    %1320 = vmatpush1.msra.mxu0 0.0
    %1321 = vmatprep.subr.mxu0 0.0
    %1322 = vmatpush1.msra.mxu0 0.0
    %1323 = vmatprep.subr.mxu0 0.0
    %1324 = vmatpush1.msra.mxu0 0.0
    %1325 = vmatprep.subr.mxu0 0.0
    %1326 = vmatpush1.msra.mxu0 0.0
    %1327 = vmatprep.subr.mxu0 0.0
    %1328 = vmatpush1.msra.mxu0 0.0
    %1329 = vmatprep.subr.mxu0 0.0
    %1330 = vmatpush1.msra.mxu0 0.0
    %1331 = vmatprep.subr.mxu0 0.0
    %1332 = vmatpush1.msra.mxu0 0.0
    %1333 = vmatprep.subr.mxu0 0.0
    %1334 = vmatpush1.msra.mxu0 0.0
    %1335 = vmatprep.subr.mxu0 0.0
    %1336 = vmatpush1.msra.mxu0 0.0
    %1337 = vmatprep.subr.mxu0 0.0
    %1338 = vmatpush1.msra.mxu0 0.0
    %1339 = vmatprep.subr.mxu0 0.0
    %1340 = vmatpush1.msra.mxu0 0.0
    %1341 = vmatprep.subr.mxu0 0.0
    %1342 = vmatpush1.msra.mxu0 0.0
    %1343 = vmatprep.subr.mxu0 0.0
    %1344 = vmatpush1.msra.mxu0 0.0
    %1345 = vmatprep.subr.mxu0 0.0
    %1346 = vmatpush1.msra.mxu0 0.0
    %1347 = vmatprep.subr.mxu0 0.0
    %1348 = vmatpush1.msra.mxu0 0.0
    %1349 = vmatprep.subr.mxu0 0.0
    %1350 = vmatpush1.msra.mxu0 0.0
    %1351 = vmatprep.subr.mxu0 0.0
    %1352 = vmatpush1.msra.mxu0 0.0
    %1353 = vmatprep.mubr.f32.mxu0 0.0
    %1354 = vmatmul.mubr.f32.gmra.mrb[0].mxu0 %v1287
    %v1355 = vpop.f32.mrb[0].mxu0
    %v1356 = vadd.f32 0.0, %v1355
    %v1357 = vpop.f32.mrb[0].mxu0
    %1358 = vdwg.mxu0
    %1359 = vrot.lane.b32.xlu0 %v299, 56
    %v1360 = vpop.permute.xlu0 %1359
    %v1363 = vsel %vm340, %v1282, 0
    %1365 = vmatprep.subr.mxu0 0.0
    %1366 = vmatpush1.msra.mxu0 %v1360
    %1367 = vmatprep.subr.mxu0 0.0
    %1368 = vmatpush1.msra.mxu0 0.0
    %1369 = vmatprep.subr.mxu0 0.0
    %1370 = vmatpush1.msra.mxu0 0.0
    %1371 = vmatprep.subr.mxu0 0.0
    %1372 = vmatpush1.msra.mxu0 0.0
    %1373 = vmatprep.subr.mxu0 0.0
    %1374 = vmatpush1.msra.mxu0 0.0
    %1375 = vmatprep.subr.mxu0 0.0
    %1376 = vmatpush1.msra.mxu0 0.0
    %1377 = vmatprep.subr.mxu0 0.0
    %1378 = vmatpush1.msra.mxu0 0.0
    %1379 = vmatprep.subr.mxu0 0.0
    %1380 = vmatpush1.msra.mxu0 0.0
    %1381 = vmatprep.subr.mxu0 0.0
    %1382 = vmatpush1.msra.mxu0 0.0
    %1383 = vmatprep.subr.mxu0 0.0
    %1384 = vmatpush1.msra.mxu0 0.0
    %1385 = vmatprep.subr.mxu0 0.0
    %1386 = vmatpush1.msra.mxu0 0.0
    %1387 = vmatprep.subr.mxu0 0.0
    %1388 = vmatpush1.msra.mxu0 0.0
    %1389 = vmatprep.subr.mxu0 0.0
    %1390 = vmatpush1.msra.mxu0 0.0
    %1391 = vmatprep.subr.mxu0 0.0
    %1392 = vmatpush1.msra.mxu0 0.0
    %1393 = vmatprep.subr.mxu0 0.0
    %1394 = vmatpush1.msra.mxu0 0.0
    %1395 = vmatprep.subr.mxu0 0.0
    %1396 = vmatpush1.msra.mxu0 0.0
    %1397 = vmatprep.subr.mxu0 0.0
    %1398 = vmatpush1.msra.mxu0 0.0
    %1399 = vmatprep.subr.mxu0 0.0
    %1400 = vmatpush1.msra.mxu0 0.0
    %1401 = vmatprep.subr.mxu0 0.0
    %1402 = vmatpush1.msra.mxu0 0.0
    %1403 = vmatprep.subr.mxu0 0.0
    %1404 = vmatpush1.msra.mxu0 0.0
    %1405 = vmatprep.subr.mxu0 0.0
    %1406 = vmatpush1.msra.mxu0 0.0
    %1407 = vmatprep.subr.mxu0 0.0
    %1408 = vmatpush1.msra.mxu0 0.0
    %1409 = vmatprep.subr.mxu0 0.0
    %1410 = vmatpush1.msra.mxu0 0.0
    %1411 = vmatprep.subr.mxu0 0.0
    %1412 = vmatpush1.msra.mxu0 0.0
    %1413 = vmatprep.subr.mxu0 0.0
    %1414 = vmatpush1.msra.mxu0 0.0
    %1415 = vmatprep.subr.mxu0 0.0
    %1416 = vmatpush1.msra.mxu0 0.0
    %1417 = vmatprep.subr.mxu0 0.0
    %1418 = vmatpush1.msra.mxu0 0.0
    %1419 = vmatprep.subr.mxu0 0.0
    %1420 = vmatpush1.msra.mxu0 0.0
    %1421 = vmatprep.subr.mxu0 0.0
    %1422 = vmatpush1.msra.mxu0 0.0
    %1423 = vmatprep.subr.mxu0 0.0
    %1424 = vmatpush1.msra.mxu0 0.0
    %1425 = vmatprep.subr.mxu0 0.0
    %1426 = vmatpush1.msra.mxu0 0.0
    %1427 = vmatprep.subr.mxu0 0.0
    %1428 = vmatpush1.msra.mxu0 0.0
    %1429 = vmatprep.mubr.f32.mxu0 0.0
    %1430 = vmatmul.mubr.f32.gmra.mrb[0].mxu0 %v1363
    %v1431 = vpop.f32.mrb[0].mxu0
    %v1432 = vadd.f32 0.0, %v1431
    %v1433 = vpop.f32.mrb[0].mxu0
    %1434 = vdwg.mxu0
    %v1435 = vld [vmem:[%s6 + $0x8] sm:$0xff]
    %v1437 = vsel %vm340, %v1356, 0
    %v1440 = vsel %vm340, %v1432, 0
    %1442 = vmatprep.subr.mxu0 0.0
    %1443 = vmatpush1.msra.mxu0 %v1435
    %1444 = vmatprep.subr.mxu0 0.0
    %1445 = vmatpush1.msra.mxu0 0.0
    %1446 = vmatprep.subr.mxu0 0.0
    %1447 = vmatpush1.msra.mxu0 0.0
    %1448 = vmatprep.subr.mxu0 0.0
    %1449 = vmatpush1.msra.mxu0 0.0
    %1450 = vmatprep.subr.mxu0 0.0
    %1451 = vmatpush1.msra.mxu0 0.0
    %1452 = vmatprep.subr.mxu0 0.0
    %1453 = vmatpush1.msra.mxu0 0.0
    %1454 = vmatprep.subr.mxu0 0.0
    %1455 = vmatpush1.msra.mxu0 0.0
    %1456 = vmatprep.subr.mxu0 0.0
    %1457 = vmatpush1.msra.mxu0 0.0
    %1458 = vmatprep.subr.mxu0 0.0
    %1459 = vmatpush1.msra.mxu0 0.0
    %1460 = vmatprep.subr.mxu0 0.0
    %1461 = vmatpush1.msra.mxu0 0.0
    %1462 = vmatprep.subr.mxu0 0.0
    %1463 = vmatpush1.msra.mxu0 0.0
    %1464 = vmatprep.subr.mxu0 0.0
    %1465 = vmatpush1.msra.mxu0 0.0
    %1466 = vmatprep.subr.mxu0 0.0
    %1467 = vmatpush1.msra.mxu0 0.0
    %1468 = vmatprep.subr.mxu0 0.0
    %1469 = vmatpush1.msra.mxu0 0.0
    %1470 = vmatprep.subr.mxu0 0.0
    %1471 = vmatpush1.msra.mxu0 0.0
    %1472 = vmatprep.subr.mxu0 0.0
    %1473 = vmatpush1.msra.mxu0 0.0
    %1474 = vmatprep.subr.mxu0 0.0
    %1475 = vmatpush1.msra.mxu0 0.0
    %1476 = vmatprep.subr.mxu0 0.0
    %1477 = vmatpush1.msra.mxu0 0.0
    %1478 = vmatprep.subr.mxu0 0.0
    %1479 = vmatpush1.msra.mxu0 0.0
    %1480 = vmatprep.subr.mxu0 0.0
    %1481 = vmatpush1.msra.mxu0 0.0
    %1482 = vmatprep.subr.mxu0 0.0
    %1483 = vmatpush1.msra.mxu0 0.0
    %1484 = vmatprep.subr.mxu0 0.0
    %1485 = vmatpush1.msra.mxu0 0.0
    %1486 = vmatprep.subr.mxu0 0.0
    %1487 = vmatpush1.msra.mxu0 0.0
    %1488 = vmatprep.subr.mxu0 0.0
    %1489 = vmatpush1.msra.mxu0 0.0
    %1490 = vmatprep.subr.mxu0 0.0
    %1491 = vmatpush1.msra.mxu0 0.0
    %1492 = vmatprep.subr.mxu0 0.0
    %1493 = vmatpush1.msra.mxu0 0.0
    %1494 = vmatprep.subr.mxu0 0.0
    %1495 = vmatpush1.msra.mxu0 0.0
    %1496 = vmatprep.subr.mxu0 0.0
    %1497 = vmatpush1.msra.mxu0 0.0
    %1498 = vmatprep.subr.mxu0 0.0
    %1499 = vmatpush1.msra.mxu0 0.0
    %1500 = vmatprep.subr.mxu0 0.0
    %1501 = vmatpush1.msra.mxu0 0.0
    %1502 = vmatprep.subr.mxu0 0.0
    %1503 = vmatpush1.msra.mxu0 0.0
    %1504 = vmatprep.subr.mxu0 0.0
    %1505 = vmatpush1.msra.mxu0 0.0
    %1506 = vmatprep.mubr.f32.mxu0 0.0
    %1507 = vmatmul.mubr.f32.gmra.mrb[0].mxu0 %v1437
    %v1508 = vpop.f32.mrb[0].mxu0
    %v1509 = vadd.f32 0.0, %v1508
    %v1510 = vpop.f32.mrb[0].mxu0
    %1511 = vmatprep.mubr.f32.mxu0 0.0
    %1512 = vmatmul.mubr.f32.gmra.mrb[0].mxu0 %v1440
    %v1513 = vpop.f32.mrb[0].mxu0
    %v1514 = vadd.f32 0.0, %v1513
    %v1515 = vpop.f32.mrb[0].mxu0
    %1516 = vdwg.mxu0
    %v1517 = vadd.f32 %v928, %v1509
    %v1518 = vadd.f32 %v929, %v1514
    %1519 = vrot.lane.b32.xlu0 %v294, 112
    %v1520 = vpop.permute.xlu0 %1519
    %1521 = vrot.lane.b32.xlu0 %v299, 112
    %v1522 = vpop.permute.xlu0 %1521
    %v1523 = vsel %vm340, %v1520, 0
    %v1525 = vsel %vm340, %v1522, 0
    %1527 = vmatprep.subr.mxu0 0.0
    %1528 = vmatpush1.msra.mxu0 %v332
    %1529 = vmatprep.subr.mxu0 0.0
    %1530 = vmatpush1.msra.mxu0 0.0
    %1531 = vmatprep.subr.mxu0 0.0
    %1532 = vmatpush1.msra.mxu0 0.0
    %1533 = vmatprep.subr.mxu0 0.0
    %1534 = vmatpush1.msra.mxu0 0.0
    %1535 = vmatprep.subr.mxu0 0.0
    %1536 = vmatpush1.msra.mxu0 0.0
    %1537 = vmatprep.subr.mxu0 0.0
    %1538 = vmatpush1.msra.mxu0 0.0
    %1539 = vmatprep.subr.mxu0 0.0
    %1540 = vmatpush1.msra.mxu0 0.0
    %1541 = vmatprep.subr.mxu0 0.0
    %1542 = vmatpush1.msra.mxu0 0.0
    %1543 = vmatprep.subr.mxu0 0.0
    %1544 = vmatpush1.msra.mxu0 0.0
    %1545 = vmatprep.subr.mxu0 0.0
    %1546 = vmatpush1.msra.mxu0 0.0
    %1547 = vmatprep.subr.mxu0 0.0
    %1548 = vmatpush1.msra.mxu0 0.0
    %1549 = vmatprep.subr.mxu0 0.0
    %1550 = vmatpush1.msra.mxu0 0.0
    %1551 = vmatprep.subr.mxu0 0.0
    %1552 = vmatpush1.msra.mxu0 0.0
    %1553 = vmatprep.subr.mxu0 0.0
    %1554 = vmatpush1.msra.mxu0 0.0
    %1555 = vmatprep.subr.mxu0 0.0
    %1556 = vmatpush1.msra.mxu0 0.0
    %1557 = vmatprep.subr.mxu0 0.0
    %1558 = vmatpush1.msra.mxu0 0.0
    %1559 = vmatprep.subr.mxu0 0.0
    %1560 = vmatpush1.msra.mxu0 0.0
    %1561 = vmatprep.subr.mxu0 0.0
    %1562 = vmatpush1.msra.mxu0 0.0
    %1563 = vmatprep.subr.mxu0 0.0
    %1564 = vmatpush1.msra.mxu0 0.0
    %1565 = vmatprep.subr.mxu0 0.0
    %1566 = vmatpush1.msra.mxu0 0.0
    %1567 = vmatprep.subr.mxu0 0.0
    %1568 = vmatpush1.msra.mxu0 0.0
    %1569 = vmatprep.subr.mxu0 0.0
    %1570 = vmatpush1.msra.mxu0 0.0
    %1571 = vmatprep.subr.mxu0 0.0
    %1572 = vmatpush1.msra.mxu0 0.0
    %1573 = vmatprep.subr.mxu0 0.0
    %1574 = vmatpush1.msra.mxu0 0.0
    %1575 = vmatprep.subr.mxu0 0.0
    %1576 = vmatpush1.msra.mxu0 0.0
    %1577 = vmatprep.subr.mxu0 0.0
    %1578 = vmatpush1.msra.mxu0 0.0
    %1579 = vmatprep.subr.mxu0 0.0
    %1580 = vmatpush1.msra.mxu0 0.0
    %1581 = vmatprep.subr.mxu0 0.0
    %1582 = vmatpush1.msra.mxu0 0.0
    %1583 = vmatprep.subr.mxu0 0.0
    %1584 = vmatpush1.msra.mxu0 0.0
    %1585 = vmatprep.subr.mxu0 0.0
    %1586 = vmatpush1.msra.mxu0 0.0
    %1587 = vmatprep.subr.mxu0 0.0
    %1588 = vmatpush1.msra.mxu0 0.0
    %1589 = vmatprep.subr.mxu0 0.0
    %1590 = vmatpush1.msra.mxu0 0.0
    %1591 = vmatprep.mubr.f32.mxu0 0.0
    %1592 = vmatmul.mubr.f32.gmra.mrb[0].mxu0 %v1523
    %v1593 = vpop.f32.mrb[0].mxu0
    %v1594 = vadd.f32 0.0, %v1593
    %v1595 = vpop.f32.mrb[0].mxu0
    %1596 = vmatprep.mubr.f32.mxu0 0.0
    %1597 = vmatmul.mubr.f32.gmra.mrb[0].mxu0 %v1525
    %v1598 = vpop.f32.mrb[0].mxu0
    %v1599 = vadd.f32 0.0, %v1598
    %v1600 = vpop.f32.mrb[0].mxu0
    %1601 = vdwg.mxu0
    %1603 = vset.pattern.permute.xlu0 0
    %1604 = vperm.xlu0 %1603, %v1594
    %v1605 = vpop.permute.xlu0 %1604
    %1608 = vset.pattern.permute.xlu0 0
    %1609 = vperm.xlu0 %1608, %v1599
    %v1610 = vpop.permute.xlu0 %1609
    %v1612 = vmul.f32 %v1605, %v310
    %v1613 = vmul.f32 %v1610, %v310
    %v1614 = vadd.f32 %v1612, 0.0
    %v1615 = vadd.f32 %v1613, 0.0
    %1616 = vset.pattern.permute.xlu0 1
    %1617 = vperm.xlu0 %1616, %v1594
    %v1618 = vpop.permute.xlu0 %1617
    %1620 = vset.pattern.permute.xlu0 1
    %1621 = vperm.xlu0 %1620, %v1599
    %v1622 = vpop.permute.xlu0 %1621
    %v1624 = vmul.f32 %v1618, %v313
    %v1625 = vmul.f32 %v1622, %v313
    %v1626 = vadd.f32 %v1614, %v1624
    %v1627 = vadd.f32 %v1615, %v1625
    %1628 = vset.pattern.permute.xlu0 2
    %1629 = vperm.xlu0 %1628, %v1594
    %v1630 = vpop.permute.xlu0 %1629
    %1632 = vset.pattern.permute.xlu0 2
    %1633 = vperm.xlu0 %1632, %v1599
    %v1634 = vpop.permute.xlu0 %1633
    %v1636 = vmul.f32 %v1630, %v316
    %v1637 = vmul.f32 %v1634, %v316
    %v1638 = vadd.f32 %v1626, %v1636
    %v1639 = vadd.f32 %v1627, %v1637
    %1640 = vset.pattern.permute.xlu0 3
    %1641 = vperm.xlu0 %1640, %v1594
    %v1642 = vpop.permute.xlu0 %1641
    %1644 = vset.pattern.permute.xlu0 3
    %1645 = vperm.xlu0 %1644, %v1599
    %v1646 = vpop.permute.xlu0 %1645
    %v1648 = vmul.f32 %v1642, %v319
    %v1649 = vmul.f32 %v1646, %v319
    %v1650 = vadd.f32 %v1638, %v1648
    %v1651 = vadd.f32 %v1639, %v1649
    %1652 = vset.pattern.permute.xlu0 4
    %1653 = vperm.xlu0 %1652, %v1594
    %v1654 = vpop.permute.xlu0 %1653
    %1656 = vset.pattern.permute.xlu0 4
    %1657 = vperm.xlu0 %1656, %v1599
    %v1658 = vpop.permute.xlu0 %1657
    %v1660 = vmul.f32 %v1654, %v322
    %v1661 = vmul.f32 %v1658, %v322
    %v1662 = vadd.f32 %v1650, %v1660
    %v1663 = vadd.f32 %v1651, %v1661
    %1664 = vset.pattern.permute.xlu0 5
    %1665 = vperm.xlu0 %1664, %v1594
    %v1666 = vpop.permute.xlu0 %1665
    %1668 = vset.pattern.permute.xlu0 5
    %1669 = vperm.xlu0 %1668, %v1599
    %v1670 = vpop.permute.xlu0 %1669
    %v1672 = vmul.f32 %v1666, %v325
    %v1673 = vmul.f32 %v1670, %v325
    %v1674 = vadd.f32 %v1662, %v1672
    %v1675 = vadd.f32 %v1663, %v1673
    %1676 = vset.pattern.permute.xlu0 6
    %1677 = vperm.xlu0 %1676, %v1594
    %v1678 = vpop.permute.xlu0 %1677
    %1680 = vset.pattern.permute.xlu0 6
    %1681 = vperm.xlu0 %1680, %v1599
    %v1682 = vpop.permute.xlu0 %1681
    %v1684 = vmul.f32 %v1678, %v328
    %v1685 = vmul.f32 %v1682, %v328
    %v1686 = vadd.f32 %v1674, %v1684
    %v1687 = vadd.f32 %v1675, %v1685
    %1688 = vset.pattern.permute.xlu0 7
    %1689 = vperm.xlu0 %1688, %v1594
    %v1690 = vpop.permute.xlu0 %1689
    %1692 = vset.pattern.permute.xlu0 7
    %1693 = vperm.xlu0 %1692, %v1599
    %v1694 = vpop.permute.xlu0 %1693
    %v1696 = vmul.f32 %v1690, %v331
    %v1697 = vmul.f32 %v1694, %v331
    %v1698 = vadd.f32 %v1686, %v1696
    %v1699 = vadd.f32 %v1687, %v1697
    %1700 = vrot.lane.b32.xlu0 %v294, 80
    %v1701 = vpop.permute.xlu0 %1700
    %v1702 = vsel %vm340, %v1701, 0
    %1704 = vmatprep.subr.mxu0 0.0
    %1705 = vmatpush1.xpose.msra.mxu0 %v1702
    %1706 = vmatprep.subr.mxu0 0.0
    %1707 = vmatpush1.xpose.msra.mxu0 0.0
    %1708 = vmatprep.subr.mxu0 0.0
    %1709 = vmatpush1.xpose.msra.mxu0 0.0
    %1710 = vmatprep.subr.mxu0 0.0
    %1711 = vmatpush1.xpose.msra.mxu0 0.0
    %1712 = vmatprep.subr.mxu0 0.0
    %1713 = vmatpush1.xpose.msra.mxu0 0.0
    %1714 = vmatprep.subr.mxu0 0.0
    %1715 = vmatpush1.xpose.msra.mxu0 0.0
    %1716 = vmatprep.subr.mxu0 0.0
    %1717 = vmatpush1.xpose.msra.mxu0 0.0
    %1718 = vmatprep.subr.mxu0 0.0
    %1719 = vmatpush1.xpose.msra.mxu0 0.0
    %1720 = vmatprep.subr.mxu0 0.0
    %1721 = vmatpush1.xpose.msra.mxu0 0.0
    %1722 = vmatprep.subr.mxu0 0.0
    %1723 = vmatpush1.xpose.msra.mxu0 0.0
    %1724 = vmatprep.subr.mxu0 0.0
    %1725 = vmatpush1.xpose.msra.mxu0 0.0
    %1726 = vmatprep.subr.mxu0 0.0
    %1727 = vmatpush1.xpose.msra.mxu0 0.0
    %1728 = vmatprep.subr.mxu0 0.0
    %1729 = vmatpush1.xpose.msra.mxu0 0.0
    %1730 = vmatprep.subr.mxu0 0.0
    %1731 = vmatpush1.xpose.msra.mxu0 0.0
    %1732 = vmatprep.subr.mxu0 0.0
    %1733 = vmatpush1.xpose.msra.mxu0 0.0
    %1734 = vmatprep.subr.mxu0 0.0
    %1735 = vmatpush1.xpose.msra.mxu0 0.0
    %1736 = vmatprep.subr.mxu0 0.0
    %1737 = vmatpush1.xpose.msra.mxu0 0.0
    %1738 = vmatprep.subr.mxu0 0.0
    %1739 = vmatpush1.xpose.msra.mxu0 0.0
    %1740 = vmatprep.subr.mxu0 0.0
    %1741 = vmatpush1.xpose.msra.mxu0 0.0
    %1742 = vmatprep.subr.mxu0 0.0
    %1743 = vmatpush1.xpose.msra.mxu0 0.0
    %1744 = vmatprep.subr.mxu0 0.0
    %1745 = vmatpush1.xpose.msra.mxu0 0.0
    %1746 = vmatprep.subr.mxu0 0.0
    %1747 = vmatpush1.xpose.msra.mxu0 0.0
    %1748 = vmatprep.subr.mxu0 0.0
    %1749 = vmatpush1.xpose.msra.mxu0 0.0
    %1750 = vmatprep.subr.mxu0 0.0
    %1751 = vmatpush1.xpose.msra.mxu0 0.0
    %1752 = vmatprep.subr.mxu0 0.0
    %1753 = vmatpush1.xpose.msra.mxu0 0.0
    %1754 = vmatprep.subr.mxu0 0.0
    %1755 = vmatpush1.xpose.msra.mxu0 0.0
    %1756 = vmatprep.subr.mxu0 0.0
    %1757 = vmatpush1.xpose.msra.mxu0 0.0
    %1758 = vmatprep.subr.mxu0 0.0
    %1759 = vmatpush1.xpose.msra.mxu0 0.0
    %1760 = vmatprep.subr.mxu0 0.0
    %1761 = vmatpush1.xpose.msra.mxu0 0.0
    %1762 = vmatprep.subr.mxu0 0.0
    %1763 = vmatpush1.xpose.msra.mxu0 0.0
    %1764 = vmatprep.subr.mxu0 0.0
    %1765 = vmatpush1.xpose.msra.mxu0 0.0
    %1766 = vmatprep.subr.mxu0 0.0
    %1767 = vmatpush1.xpose.msra.mxu0 0.0
    %1768 = vmatprep.mubr.f32.mxu0 0.0
    %1769 = vmatmul.mubr.f32.gmra.mrb[0].mxu0 %v1523
    %v1770 = vpop.f32.mrb[0].mxu0
    %v1771 = vadd.f32 %v1698, %v1770
    %v1772 = vpop.f32.mrb[0].mxu0
    %1773 = vdwg.mxu0
    %1774 = vrot.lane.b32.xlu0 %v299, 80
    %v1775 = vpop.permute.xlu0 %1774
    %v1776 = vsel %vm340, %v1775, 0
    %1778 = vmatprep.subr.mxu0 0.0
    %1779 = vmatpush1.xpose.msra.mxu0 %v1776
    %1780 = vmatprep.subr.mxu0 0.0
    %1781 = vmatpush1.xpose.msra.mxu0 0.0
    %1782 = vmatprep.subr.mxu0 0.0
    %1783 = vmatpush1.xpose.msra.mxu0 0.0
    %1784 = vmatprep.subr.mxu0 0.0
    %1785 = vmatpush1.xpose.msra.mxu0 0.0
    %1786 = vmatprep.subr.mxu0 0.0
    %1787 = vmatpush1.xpose.msra.mxu0 0.0
    %1788 = vmatprep.subr.mxu0 0.0
    %1789 = vmatpush1.xpose.msra.mxu0 0.0
    %1790 = vmatprep.subr.mxu0 0.0
    %1791 = vmatpush1.xpose.msra.mxu0 0.0
    %1792 = vmatprep.subr.mxu0 0.0
    %1793 = vmatpush1.xpose.msra.mxu0 0.0
    %1794 = vmatprep.subr.mxu0 0.0
    %1795 = vmatpush1.xpose.msra.mxu0 0.0
    %1796 = vmatprep.subr.mxu0 0.0
    %1797 = vmatpush1.xpose.msra.mxu0 0.0
    %1798 = vmatprep.subr.mxu0 0.0
    %1799 = vmatpush1.xpose.msra.mxu0 0.0
    %1800 = vmatprep.subr.mxu0 0.0
    %1801 = vmatpush1.xpose.msra.mxu0 0.0
    %1802 = vmatprep.subr.mxu0 0.0
    %1803 = vmatpush1.xpose.msra.mxu0 0.0
    %1804 = vmatprep.subr.mxu0 0.0
    %1805 = vmatpush1.xpose.msra.mxu0 0.0
    %1806 = vmatprep.subr.mxu0 0.0
    %1807 = vmatpush1.xpose.msra.mxu0 0.0
    %1808 = vmatprep.subr.mxu0 0.0
    %1809 = vmatpush1.xpose.msra.mxu0 0.0
    %1810 = vmatprep.subr.mxu0 0.0
    %1811 = vmatpush1.xpose.msra.mxu0 0.0
    %1812 = vmatprep.subr.mxu0 0.0
    %1813 = vmatpush1.xpose.msra.mxu0 0.0
    %1814 = vmatprep.subr.mxu0 0.0
    %1815 = vmatpush1.xpose.msra.mxu0 0.0
    %1816 = vmatprep.subr.mxu0 0.0
    %1817 = vmatpush1.xpose.msra.mxu0 0.0
    %1818 = vmatprep.subr.mxu0 0.0
    %1819 = vmatpush1.xpose.msra.mxu0 0.0
    %1820 = vmatprep.subr.mxu0 0.0
    %1821 = vmatpush1.xpose.msra.mxu0 0.0
    %1822 = vmatprep.subr.mxu0 0.0
    %1823 = vmatpush1.xpose.msra.mxu0 0.0
    %1824 = vmatprep.subr.mxu0 0.0
    %1825 = vmatpush1.xpose.msra.mxu0 0.0
    %1826 = vmatprep.subr.mxu0 0.0
    %1827 = vmatpush1.xpose.msra.mxu0 0.0
    %1828 = vmatprep.subr.mxu0 0.0
    %1829 = vmatpush1.xpose.msra.mxu0 0.0
    %1830 = vmatprep.subr.mxu0 0.0
    %1831 = vmatpush1.xpose.msra.mxu0 0.0
    %1832 = vmatprep.subr.mxu0 0.0
    %1833 = vmatpush1.xpose.msra.mxu0 0.0
    %1834 = vmatprep.subr.mxu0 0.0
    %1835 = vmatpush1.xpose.msra.mxu0 0.0
    %1836 = vmatprep.subr.mxu0 0.0
    %1837 = vmatpush1.xpose.msra.mxu0 0.0
    %1838 = vmatprep.subr.mxu0 0.0
    %1839 = vmatpush1.xpose.msra.mxu0 0.0
    %1840 = vmatprep.subr.mxu0 0.0
    %1841 = vmatpush1.xpose.msra.mxu0 0.0
    %1842 = vmatprep.mubr.f32.mxu0 0.0
    %1843 = vmatmul.mubr.f32.gmra.mrb[0].mxu0 %v1525
    %v1844 = vpop.f32.mrb[0].mxu0
    %v1845 = vadd.f32 %v1699, %v1844
    %v1846 = vpop.f32.mrb[0].mxu0
    %1847 = vdwg.mxu0
    %v1848 = vsel %vm669, %v1771, -1e+30
    %v1849 = vsel %vm669, %v1845, -1e+30
    %v1850 = vsel %vm340, %v1848, -inf
    %1851 = vmax.xlane.f32.xlu0 %v1850
    %v1852 = vpop.xlane.xlu0 %1851
    %v1853 = vsel %vm340, %v1849, -inf
    %1854 = vmax.xlane.f32.xlu0 %v1853
    %v1855 = vpop.xlane.xlu0 %1854
    %v1856 = vsub.f32 %v1848, %v1852
    %v1857 = vsub.f32 %v1849, %v1855
    %v1858 = vmul.f32 %v1856, 1.442695
    %v1859 = vpow.pop %v1858
    %v1860 = vmul.f32 %v1857, 1.442695
    %v1861 = vpow.pop %v1860
    %v1862 = vsel %vm340, %v1859, 0.0
    %1863 = vadd.xlane.f32.xlu0 %v1862
    %v1864 = vpop.xlane.xlu0 %1863
    %v1865 = vsel %vm340, %v1861, 0.0
    %1866 = vadd.xlane.f32.xlu0 %v1865
    %v1867 = vpop.xlane.xlu0 %1866
    %v1868 = vrcp.pop %v1864
    %v1869 = vmul.f32 %v1859, %v1868
    %v1870 = vrcp.pop %v1867
    %v1871 = vmul.f32 %v1861, %v1870
    %1872 = vrot.lane.b32.xlu0 %v294, 48
    %v1873 = vpop.permute.xlu0 %1872
    %v1876 = vsel %vm340, %v1869, 0
    %1878 = vmatprep.subr.mxu0 0.0
    %1879 = vmatpush1.msra.mxu0 %v1873
    %1880 = vmatprep.subr.mxu0 0.0
    %1881 = vmatpush1.msra.mxu0 0.0
    %1882 = vmatprep.subr.mxu0 0.0
    %1883 = vmatpush1.msra.mxu0 0.0
    %1884 = vmatprep.subr.mxu0 0.0
    %1885 = vmatpush1.msra.mxu0 0.0
    %1886 = vmatprep.subr.mxu0 0.0
    %1887 = vmatpush1.msra.mxu0 0.0
    %1888 = vmatprep.subr.mxu0 0.0
    %1889 = vmatpush1.msra.mxu0 0.0
    %1890 = vmatprep.subr.mxu0 0.0
    %1891 = vmatpush1.msra.mxu0 0.0
    %1892 = vmatprep.subr.mxu0 0.0
    %1893 = vmatpush1.msra.mxu0 0.0
    %1894 = vmatprep.subr.mxu0 0.0
    %1895 = vmatpush1.msra.mxu0 0.0
    %1896 = vmatprep.subr.mxu0 0.0
    %1897 = vmatpush1.msra.mxu0 0.0
    %1898 = vmatprep.subr.mxu0 0.0
    %1899 = vmatpush1.msra.mxu0 0.0
    %1900 = vmatprep.subr.mxu0 0.0
    %1901 = vmatpush1.msra.mxu0 0.0
    %1902 = vmatprep.subr.mxu0 0.0
    %1903 = vmatpush1.msra.mxu0 0.0
    %1904 = vmatprep.subr.mxu0 0.0
    %1905 = vmatpush1.msra.mxu0 0.0
    %1906 = vmatprep.subr.mxu0 0.0
    %1907 = vmatpush1.msra.mxu0 0.0
    %1908 = vmatprep.subr.mxu0 0.0
    %1909 = vmatpush1.msra.mxu0 0.0
    %1910 = vmatprep.subr.mxu0 0.0
    %1911 = vmatpush1.msra.mxu0 0.0
    %1912 = vmatprep.subr.mxu0 0.0
    %1913 = vmatpush1.msra.mxu0 0.0
    %1914 = vmatprep.subr.mxu0 0.0
    %1915 = vmatpush1.msra.mxu0 0.0
    %1916 = vmatprep.subr.mxu0 0.0
    %1917 = vmatpush1.msra.mxu0 0.0
    %1918 = vmatprep.subr.mxu0 0.0
    %1919 = vmatpush1.msra.mxu0 0.0
    %1920 = vmatprep.subr.mxu0 0.0
    %1921 = vmatpush1.msra.mxu0 0.0
    %1922 = vmatprep.subr.mxu0 0.0
    %1923 = vmatpush1.msra.mxu0 0.0
    %1924 = vmatprep.subr.mxu0 0.0
    %1925 = vmatpush1.msra.mxu0 0.0
    %1926 = vmatprep.subr.mxu0 0.0
    %1927 = vmatpush1.msra.mxu0 0.0
    %1928 = vmatprep.subr.mxu0 0.0
    %1929 = vmatpush1.msra.mxu0 0.0
    %1930 = vmatprep.subr.mxu0 0.0
    %1931 = vmatpush1.msra.mxu0 0.0
    %1932 = vmatprep.subr.mxu0 0.0
    %1933 = vmatpush1.msra.mxu0 0.0
    %1934 = vmatprep.subr.mxu0 0.0
    %1935 = vmatpush1.msra.mxu0 0.0
    %1936 = vmatprep.subr.mxu0 0.0
    %1937 = vmatpush1.msra.mxu0 0.0
    %1938 = vmatprep.subr.mxu0 0.0
    %1939 = vmatpush1.msra.mxu0 0.0
    %1940 = vmatprep.subr.mxu0 0.0
    %1941 = vmatpush1.msra.mxu0 0.0
    %1942 = vmatprep.mubr.f32.mxu0 0.0
    %1943 = vmatmul.mubr.f32.gmra.mrb[0].mxu0 %v1876
    %v1944 = vpop.f32.mrb[0].mxu0
    %v1945 = vadd.f32 0.0, %v1944
    %v1946 = vpop.f32.mrb[0].mxu0
    %1947 = vdwg.mxu0
    %1948 = vrot.lane.b32.xlu0 %v299, 48
    %v1949 = vpop.permute.xlu0 %1948
    %v1952 = vsel %vm340, %v1871, 0
    %1954 = vmatprep.subr.mxu0 0.0
    %1955 = vmatpush1.msra.mxu0 %v1949
    %1956 = vmatprep.subr.mxu0 0.0
    %1957 = vmatpush1.msra.mxu0 0.0
    %1958 = vmatprep.subr.mxu0 0.0
    %1959 = vmatpush1.msra.mxu0 0.0
    %1960 = vmatprep.subr.mxu0 0.0
    %1961 = vmatpush1.msra.mxu0 0.0
    %1962 = vmatprep.subr.mxu0 0.0
    %1963 = vmatpush1.msra.mxu0 0.0
    %1964 = vmatprep.subr.mxu0 0.0
    %1965 = vmatpush1.msra.mxu0 0.0
    %1966 = vmatprep.subr.mxu0 0.0
    %1967 = vmatpush1.msra.mxu0 0.0
    %1968 = vmatprep.subr.mxu0 0.0
    %1969 = vmatpush1.msra.mxu0 0.0
    %1970 = vmatprep.subr.mxu0 0.0
    %1971 = vmatpush1.msra.mxu0 0.0
    %1972 = vmatprep.subr.mxu0 0.0
    %1973 = vmatpush1.msra.mxu0 0.0
    %1974 = vmatprep.subr.mxu0 0.0
    %1975 = vmatpush1.msra.mxu0 0.0
    %1976 = vmatprep.subr.mxu0 0.0
    %1977 = vmatpush1.msra.mxu0 0.0
    %1978 = vmatprep.subr.mxu0 0.0
    %1979 = vmatpush1.msra.mxu0 0.0
    %1980 = vmatprep.subr.mxu0 0.0
    %1981 = vmatpush1.msra.mxu0 0.0
    %1982 = vmatprep.subr.mxu0 0.0
    %1983 = vmatpush1.msra.mxu0 0.0
    %1984 = vmatprep.subr.mxu0 0.0
    %1985 = vmatpush1.msra.mxu0 0.0
    %1986 = vmatprep.subr.mxu0 0.0
    %1987 = vmatpush1.msra.mxu0 0.0
    %1988 = vmatprep.subr.mxu0 0.0
    %1989 = vmatpush1.msra.mxu0 0.0
    %1990 = vmatprep.subr.mxu0 0.0
    %1991 = vmatpush1.msra.mxu0 0.0
    %1992 = vmatprep.subr.mxu0 0.0
    %1993 = vmatpush1.msra.mxu0 0.0
    %1994 = vmatprep.subr.mxu0 0.0
    %1995 = vmatpush1.msra.mxu0 0.0
    %1996 = vmatprep.subr.mxu0 0.0
    %1997 = vmatpush1.msra.mxu0 0.0
    %1998 = vmatprep.subr.mxu0 0.0
    %1999 = vmatpush1.msra.mxu0 0.0
    %2000 = vmatprep.subr.mxu0 0.0
    %2001 = vmatpush1.msra.mxu0 0.0
    %2002 = vmatprep.subr.mxu0 0.0
    %2003 = vmatpush1.msra.mxu0 0.0
    %2004 = vmatprep.subr.mxu0 0.0
    %2005 = vmatpush1.msra.mxu0 0.0
    %2006 = vmatprep.subr.mxu0 0.0
    %2007 = vmatpush1.msra.mxu0 0.0
    %2008 = vmatprep.subr.mxu0 0.0
    %2009 = vmatpush1.msra.mxu0 0.0
    %2010 = vmatprep.subr.mxu0 0.0
    %2011 = vmatpush1.msra.mxu0 0.0
    %2012 = vmatprep.subr.mxu0 0.0
    %2013 = vmatpush1.msra.mxu0 0.0
    %2014 = vmatprep.subr.mxu0 0.0
    %2015 = vmatpush1.msra.mxu0 0.0
    %2016 = vmatprep.subr.mxu0 0.0
    %2017 = vmatpush1.msra.mxu0 0.0
    %2018 = vmatprep.mubr.f32.mxu0 0.0
    %2019 = vmatmul.mubr.f32.gmra.mrb[0].mxu0 %v1952
    %v2020 = vpop.f32.mrb[0].mxu0
    %v2021 = vadd.f32 0.0, %v2020
    %v2022 = vpop.f32.mrb[0].mxu0
    %2023 = vdwg.mxu0
    %v2024 = vld [vmem:[%s6 + $0x10] sm:$0xff]
    %v2026 = vsel %vm340, %v1945, 0
    %v2029 = vsel %vm340, %v2021, 0
    %2031 = vmatprep.subr.mxu0 0.0
    %2032 = vmatpush1.msra.mxu0 %v2024
    %2033 = vmatprep.subr.mxu0 0.0
    %2034 = vmatpush1.msra.mxu0 0.0
    %2035 = vmatprep.subr.mxu0 0.0
    %2036 = vmatpush1.msra.mxu0 0.0
    %2037 = vmatprep.subr.mxu0 0.0
    %2038 = vmatpush1.msra.mxu0 0.0
    %2039 = vmatprep.subr.mxu0 0.0
    %2040 = vmatpush1.msra.mxu0 0.0
    %2041 = vmatprep.subr.mxu0 0.0
    %2042 = vmatpush1.msra.mxu0 0.0
    %2043 = vmatprep.subr.mxu0 0.0
    %2044 = vmatpush1.msra.mxu0 0.0
    %2045 = vmatprep.subr.mxu0 0.0
    %2046 = vmatpush1.msra.mxu0 0.0
    %2047 = vmatprep.subr.mxu0 0.0
    %2048 = vmatpush1.msra.mxu0 0.0
    %2049 = vmatprep.subr.mxu0 0.0
    %2050 = vmatpush1.msra.mxu0 0.0
    %2051 = vmatprep.subr.mxu0 0.0
    %2052 = vmatpush1.msra.mxu0 0.0
    %2053 = vmatprep.subr.mxu0 0.0
    %2054 = vmatpush1.msra.mxu0 0.0
    %2055 = vmatprep.subr.mxu0 0.0
    %2056 = vmatpush1.msra.mxu0 0.0
    %2057 = vmatprep.subr.mxu0 0.0
    %2058 = vmatpush1.msra.mxu0 0.0
    %2059 = vmatprep.subr.mxu0 0.0
    %2060 = vmatpush1.msra.mxu0 0.0
    %2061 = vmatprep.subr.mxu0 0.0
    %2062 = vmatpush1.msra.mxu0 0.0
    %2063 = vmatprep.subr.mxu0 0.0
    %2064 = vmatpush1.msra.mxu0 0.0
    %2065 = vmatprep.subr.mxu0 0.0
    %2066 = vmatpush1.msra.mxu0 0.0
    %2067 = vmatprep.subr.mxu0 0.0
    %2068 = vmatpush1.msra.mxu0 0.0
    %2069 = vmatprep.subr.mxu0 0.0
    %2070 = vmatpush1.msra.mxu0 0.0
    %2071 = vmatprep.subr.mxu0 0.0
    %2072 = vmatpush1.msra.mxu0 0.0
    %2073 = vmatprep.subr.mxu0 0.0
    %2074 = vmatpush1.msra.mxu0 0.0
    %2075 = vmatprep.subr.mxu0 0.0
    %2076 = vmatpush1.msra.mxu0 0.0
    %2077 = vmatprep.subr.mxu0 0.0
    %2078 = vmatpush1.msra.mxu0 0.0
    %2079 = vmatprep.subr.mxu0 0.0
    %2080 = vmatpush1.msra.mxu0 0.0
    %2081 = vmatprep.subr.mxu0 0.0
    %2082 = vmatpush1.msra.mxu0 0.0
    %2083 = vmatprep.subr.mxu0 0.0
    %2084 = vmatpush1.msra.mxu0 0.0
    %2085 = vmatprep.subr.mxu0 0.0
    %2086 = vmatpush1.msra.mxu0 0.0
    %2087 = vmatprep.subr.mxu0 0.0
    %2088 = vmatpush1.msra.mxu0 0.0
    %2089 = vmatprep.subr.mxu0 0.0
    %2090 = vmatpush1.msra.mxu0 0.0
    %2091 = vmatprep.subr.mxu0 0.0
    %2092 = vmatpush1.msra.mxu0 0.0
    %2093 = vmatprep.subr.mxu0 0.0
    %2094 = vmatpush1.msra.mxu0 0.0
    %2095 = vmatprep.mubr.f32.mxu0 0.0
    %2096 = vmatmul.mubr.f32.gmra.mrb[0].mxu0 %v2026
    %v2097 = vpop.f32.mrb[0].mxu0
    %v2098 = vadd.f32 0.0, %v2097
    %v2099 = vpop.f32.mrb[0].mxu0
    %2100 = vmatprep.mubr.f32.mxu0 0.0
    %2101 = vmatmul.mubr.f32.gmra.mrb[0].mxu0 %v2029
    %v2102 = vpop.f32.mrb[0].mxu0
    %v2103 = vadd.f32 0.0, %v2102
    %v2104 = vpop.f32.mrb[0].mxu0
    %2105 = vdwg.mxu0
    %v2106 = vadd.f32 %v1517, %v2098
    %v2107 = vadd.f32 %v1518, %v2103
    %2108 = vrot.lane.b32.xlu0 %v294, 104
    %v2109 = vpop.permute.xlu0 %2108
    %2110 = vrot.lane.b32.xlu0 %v299, 104
    %v2111 = vpop.permute.xlu0 %2110
    %v2112 = vsel %vm340, %v2109, 0
    %v2114 = vsel %vm340, %v2111, 0
    %2116 = vmatprep.subr.mxu0 0.0
    %2117 = vmatpush1.msra.mxu0 %v332
    %2118 = vmatprep.subr.mxu0 0.0
    %2119 = vmatpush1.msra.mxu0 0.0
    %2120 = vmatprep.subr.mxu0 0.0
    %2121 = vmatpush1.msra.mxu0 0.0
    %2122 = vmatprep.subr.mxu0 0.0
    %2123 = vmatpush1.msra.mxu0 0.0
    %2124 = vmatprep.subr.mxu0 0.0
    %2125 = vmatpush1.msra.mxu0 0.0
    %2126 = vmatprep.subr.mxu0 0.0
    %2127 = vmatpush1.msra.mxu0 0.0
    %2128 = vmatprep.subr.mxu0 0.0
    %2129 = vmatpush1.msra.mxu0 0.0
    %2130 = vmatprep.subr.mxu0 0.0
    %2131 = vmatpush1.msra.mxu0 0.0
    %2132 = vmatprep.subr.mxu0 0.0
    %2133 = vmatpush1.msra.mxu0 0.0
    %2134 = vmatprep.subr.mxu0 0.0
    %2135 = vmatpush1.msra.mxu0 0.0
    %2136 = vmatprep.subr.mxu0 0.0
    %2137 = vmatpush1.msra.mxu0 0.0
    %2138 = vmatprep.subr.mxu0 0.0
    %2139 = vmatpush1.msra.mxu0 0.0
    %2140 = vmatprep.subr.mxu0 0.0
    %2141 = vmatpush1.msra.mxu0 0.0
    %2142 = vmatprep.subr.mxu0 0.0
    %2143 = vmatpush1.msra.mxu0 0.0
    %2144 = vmatprep.subr.mxu0 0.0
    %2145 = vmatpush1.msra.mxu0 0.0
    %2146 = vmatprep.subr.mxu0 0.0
    %2147 = vmatpush1.msra.mxu0 0.0
    %2148 = vmatprep.subr.mxu0 0.0
    %2149 = vmatpush1.msra.mxu0 0.0
    %2150 = vmatprep.subr.mxu0 0.0
    %2151 = vmatpush1.msra.mxu0 0.0
    %2152 = vmatprep.subr.mxu0 0.0
    %2153 = vmatpush1.msra.mxu0 0.0
    %2154 = vmatprep.subr.mxu0 0.0
    %2155 = vmatpush1.msra.mxu0 0.0
    %2156 = vmatprep.subr.mxu0 0.0
    %2157 = vmatpush1.msra.mxu0 0.0
    %2158 = vmatprep.subr.mxu0 0.0
    %2159 = vmatpush1.msra.mxu0 0.0
    %2160 = vmatprep.subr.mxu0 0.0
    %2161 = vmatpush1.msra.mxu0 0.0
    %2162 = vmatprep.subr.mxu0 0.0
    %2163 = vmatpush1.msra.mxu0 0.0
    %2164 = vmatprep.subr.mxu0 0.0
    %2165 = vmatpush1.msra.mxu0 0.0
    %2166 = vmatprep.subr.mxu0 0.0
    %2167 = vmatpush1.msra.mxu0 0.0
    %2168 = vmatprep.subr.mxu0 0.0
    %2169 = vmatpush1.msra.mxu0 0.0
    %2170 = vmatprep.subr.mxu0 0.0
    %2171 = vmatpush1.msra.mxu0 0.0
    %2172 = vmatprep.subr.mxu0 0.0
    %2173 = vmatpush1.msra.mxu0 0.0
    %2174 = vmatprep.subr.mxu0 0.0
    %2175 = vmatpush1.msra.mxu0 0.0
    %2176 = vmatprep.subr.mxu0 0.0
    %2177 = vmatpush1.msra.mxu0 0.0
    %2178 = vmatprep.subr.mxu0 0.0
    %2179 = vmatpush1.msra.mxu0 0.0
    %2180 = vmatprep.mubr.f32.mxu0 0.0
    %2181 = vmatmul.mubr.f32.gmra.mrb[0].mxu0 %v2112
    %v2182 = vpop.f32.mrb[0].mxu0
    %v2183 = vadd.f32 0.0, %v2182
    %v2184 = vpop.f32.mrb[0].mxu0
    %2185 = vmatprep.mubr.f32.mxu0 0.0
    %2186 = vmatmul.mubr.f32.gmra.mrb[0].mxu0 %v2114
    %v2187 = vpop.f32.mrb[0].mxu0
    %v2188 = vadd.f32 0.0, %v2187
    %v2189 = vpop.f32.mrb[0].mxu0
    %2190 = vdwg.mxu0
    %2192 = vset.pattern.permute.xlu0 0
    %2193 = vperm.xlu0 %2192, %v2183
    %v2194 = vpop.permute.xlu0 %2193
    %2197 = vset.pattern.permute.xlu0 0
    %2198 = vperm.xlu0 %2197, %v2188
    %v2199 = vpop.permute.xlu0 %2198
    %v2201 = vmul.f32 %v2194, %v310
    %v2202 = vmul.f32 %v2199, %v310
    %v2203 = vadd.f32 %v2201, 0.0
    %v2204 = vadd.f32 %v2202, 0.0
    %2205 = vset.pattern.permute.xlu0 1
    %2206 = vperm.xlu0 %2205, %v2183
    %v2207 = vpop.permute.xlu0 %2206
    %2209 = vset.pattern.permute.xlu0 1
    %2210 = vperm.xlu0 %2209, %v2188
    %v2211 = vpop.permute.xlu0 %2210
    %v2213 = vmul.f32 %v2207, %v313
    %v2214 = vmul.f32 %v2211, %v313
    %v2215 = vadd.f32 %v2203, %v2213
    %v2216 = vadd.f32 %v2204, %v2214
    %2217 = vset.pattern.permute.xlu0 2
    %2218 = vperm.xlu0 %2217, %v2183
    %v2219 = vpop.permute.xlu0 %2218
    %2221 = vset.pattern.permute.xlu0 2
    %2222 = vperm.xlu0 %2221, %v2188
    %v2223 = vpop.permute.xlu0 %2222
    %v2225 = vmul.f32 %v2219, %v316
    %v2226 = vmul.f32 %v2223, %v316
    %v2227 = vadd.f32 %v2215, %v2225
    %v2228 = vadd.f32 %v2216, %v2226
    %2229 = vset.pattern.permute.xlu0 3
    %2230 = vperm.xlu0 %2229, %v2183
    %v2231 = vpop.permute.xlu0 %2230
    %2233 = vset.pattern.permute.xlu0 3
    %2234 = vperm.xlu0 %2233, %v2188
    %v2235 = vpop.permute.xlu0 %2234
    %v2237 = vmul.f32 %v2231, %v319
    %v2238 = vmul.f32 %v2235, %v319
    %v2239 = vadd.f32 %v2227, %v2237
    %v2240 = vadd.f32 %v2228, %v2238
    %2241 = vset.pattern.permute.xlu0 4
    %2242 = vperm.xlu0 %2241, %v2183
    %v2243 = vpop.permute.xlu0 %2242
    %2245 = vset.pattern.permute.xlu0 4
    %2246 = vperm.xlu0 %2245, %v2188
    %v2247 = vpop.permute.xlu0 %2246
    %v2249 = vmul.f32 %v2243, %v322
    %v2250 = vmul.f32 %v2247, %v322
    %v2251 = vadd.f32 %v2239, %v2249
    %v2252 = vadd.f32 %v2240, %v2250
    %2253 = vset.pattern.permute.xlu0 5
    %2254 = vperm.xlu0 %2253, %v2183
    %v2255 = vpop.permute.xlu0 %2254
    %2257 = vset.pattern.permute.xlu0 5
    %2258 = vperm.xlu0 %2257, %v2188
    %v2259 = vpop.permute.xlu0 %2258
    %v2261 = vmul.f32 %v2255, %v325
    %v2262 = vmul.f32 %v2259, %v325
    %v2263 = vadd.f32 %v2251, %v2261
    %v2264 = vadd.f32 %v2252, %v2262
    %2265 = vset.pattern.permute.xlu0 6
    %2266 = vperm.xlu0 %2265, %v2183
    %v2267 = vpop.permute.xlu0 %2266
    %2269 = vset.pattern.permute.xlu0 6
    %2270 = vperm.xlu0 %2269, %v2188
    %v2271 = vpop.permute.xlu0 %2270
    %v2273 = vmul.f32 %v2267, %v328
    %v2274 = vmul.f32 %v2271, %v328
    %v2275 = vadd.f32 %v2263, %v2273
    %v2276 = vadd.f32 %v2264, %v2274
    %2277 = vset.pattern.permute.xlu0 7
    %2278 = vperm.xlu0 %2277, %v2183
    %v2279 = vpop.permute.xlu0 %2278
    %2281 = vset.pattern.permute.xlu0 7
    %2282 = vperm.xlu0 %2281, %v2188
    %v2283 = vpop.permute.xlu0 %2282
    %v2285 = vmul.f32 %v2279, %v331
    %v2286 = vmul.f32 %v2283, %v331
    %v2287 = vadd.f32 %v2275, %v2285
    %v2288 = vadd.f32 %v2276, %v2286
    %2289 = vrot.lane.b32.xlu0 %v294, 72
    %v2290 = vpop.permute.xlu0 %2289
    %v2291 = vsel %vm340, %v2290, 0
    %2293 = vmatprep.subr.mxu0 0.0
    %2294 = vmatpush1.xpose.msra.mxu0 %v2291
    %2295 = vmatprep.subr.mxu0 0.0
    %2296 = vmatpush1.xpose.msra.mxu0 0.0
    %2297 = vmatprep.subr.mxu0 0.0
    %2298 = vmatpush1.xpose.msra.mxu0 0.0
    %2299 = vmatprep.subr.mxu0 0.0
    %2300 = vmatpush1.xpose.msra.mxu0 0.0
    %2301 = vmatprep.subr.mxu0 0.0
    %2302 = vmatpush1.xpose.msra.mxu0 0.0
    %2303 = vmatprep.subr.mxu0 0.0
    %2304 = vmatpush1.xpose.msra.mxu0 0.0
    %2305 = vmatprep.subr.mxu0 0.0
    %2306 = vmatpush1.xpose.msra.mxu0 0.0
    %2307 = vmatprep.subr.mxu0 0.0
    %2308 = vmatpush1.xpose.msra.mxu0 0.0
    %2309 = vmatprep.subr.mxu0 0.0
    %2310 = vmatpush1.xpose.msra.mxu0 0.0
    %2311 = vmatprep.subr.mxu0 0.0
    %2312 = vmatpush1.xpose.msra.mxu0 0.0
    %2313 = vmatprep.subr.mxu0 0.0
    %2314 = vmatpush1.xpose.msra.mxu0 0.0
    %2315 = vmatprep.subr.mxu0 0.0
    %2316 = vmatpush1.xpose.msra.mxu0 0.0
    %2317 = vmatprep.subr.mxu0 0.0
    %2318 = vmatpush1.xpose.msra.mxu0 0.0
    %2319 = vmatprep.subr.mxu0 0.0
    %2320 = vmatpush1.xpose.msra.mxu0 0.0
    %2321 = vmatprep.subr.mxu0 0.0
    %2322 = vmatpush1.xpose.msra.mxu0 0.0
    %2323 = vmatprep.subr.mxu0 0.0
    %2324 = vmatpush1.xpose.msra.mxu0 0.0
    %2325 = vmatprep.subr.mxu0 0.0
    %2326 = vmatpush1.xpose.msra.mxu0 0.0
    %2327 = vmatprep.subr.mxu0 0.0
    %2328 = vmatpush1.xpose.msra.mxu0 0.0
    %2329 = vmatprep.subr.mxu0 0.0
    %2330 = vmatpush1.xpose.msra.mxu0 0.0
    %2331 = vmatprep.subr.mxu0 0.0
    %2332 = vmatpush1.xpose.msra.mxu0 0.0
    %2333 = vmatprep.subr.mxu0 0.0
    %2334 = vmatpush1.xpose.msra.mxu0 0.0
    %2335 = vmatprep.subr.mxu0 0.0
    %2336 = vmatpush1.xpose.msra.mxu0 0.0
    %2337 = vmatprep.subr.mxu0 0.0
    %2338 = vmatpush1.xpose.msra.mxu0 0.0
    %2339 = vmatprep.subr.mxu0 0.0
    %2340 = vmatpush1.xpose.msra.mxu0 0.0
    %2341 = vmatprep.subr.mxu0 0.0
    %2342 = vmatpush1.xpose.msra.mxu0 0.0
    %2343 = vmatprep.subr.mxu0 0.0
    %2344 = vmatpush1.xpose.msra.mxu0 0.0
    %2345 = vmatprep.subr.mxu0 0.0
    %2346 = vmatpush1.xpose.msra.mxu0 0.0
    %2347 = vmatprep.subr.mxu0 0.0
    %2348 = vmatpush1.xpose.msra.mxu0 0.0
    %2349 = vmatprep.subr.mxu0 0.0
    %2350 = vmatpush1.xpose.msra.mxu0 0.0
    %2351 = vmatprep.subr.mxu0 0.0
    %2352 = vmatpush1.xpose.msra.mxu0 0.0
    %2353 = vmatprep.subr.mxu0 0.0
    %2354 = vmatpush1.xpose.msra.mxu0 0.0
    %2355 = vmatprep.subr.mxu0 0.0
    %2356 = vmatpush1.xpose.msra.mxu0 0.0
    %2357 = vmatprep.mubr.f32.mxu0 0.0
    %2358 = vmatmul.mubr.f32.gmra.mrb[0].mxu0 %v2112
    %v2359 = vpop.f32.mrb[0].mxu0
    %v2360 = vadd.f32 %v2287, %v2359
    %v2361 = vpop.f32.mrb[0].mxu0
    %2362 = vdwg.mxu0
    %2363 = vrot.lane.b32.xlu0 %v299, 72
    %v2364 = vpop.permute.xlu0 %2363
    %v2365 = vsel %vm340, %v2364, 0
    %2367 = vmatprep.subr.mxu0 0.0
    %2368 = vmatpush1.xpose.msra.mxu0 %v2365
    %2369 = vmatprep.subr.mxu0 0.0
    %2370 = vmatpush1.xpose.msra.mxu0 0.0
    %2371 = vmatprep.subr.mxu0 0.0
    %2372 = vmatpush1.xpose.msra.mxu0 0.0
    %2373 = vmatprep.subr.mxu0 0.0
    %2374 = vmatpush1.xpose.msra.mxu0 0.0
    %2375 = vmatprep.subr.mxu0 0.0
    %2376 = vmatpush1.xpose.msra.mxu0 0.0
    %2377 = vmatprep.subr.mxu0 0.0
    %2378 = vmatpush1.xpose.msra.mxu0 0.0
    %2379 = vmatprep.subr.mxu0 0.0
    %2380 = vmatpush1.xpose.msra.mxu0 0.0
    %2381 = vmatprep.subr.mxu0 0.0
    %2382 = vmatpush1.xpose.msra.mxu0 0.0
    %2383 = vmatprep.subr.mxu0 0.0
    %2384 = vmatpush1.xpose.msra.mxu0 0.0
    %2385 = vmatprep.subr.mxu0 0.0
    %2386 = vmatpush1.xpose.msra.mxu0 0.0
    %2387 = vmatprep.subr.mxu0 0.0
    %2388 = vmatpush1.xpose.msra.mxu0 0.0
    %2389 = vmatprep.subr.mxu0 0.0
    %2390 = vmatpush1.xpose.msra.mxu0 0.0
    %2391 = vmatprep.subr.mxu0 0.0
    %2392 = vmatpush1.xpose.msra.mxu0 0.0
    %2393 = vmatprep.subr.mxu0 0.0
    %2394 = vmatpush1.xpose.msra.mxu0 0.0
    %2395 = vmatprep.subr.mxu0 0.0
    %2396 = vmatpush1.xpose.msra.mxu0 0.0
    %2397 = vmatprep.subr.mxu0 0.0
    %2398 = vmatpush1.xpose.msra.mxu0 0.0
    %2399 = vmatprep.subr.mxu0 0.0
    %2400 = vmatpush1.xpose.msra.mxu0 0.0
    %2401 = vmatprep.subr.mxu0 0.0
    %2402 = vmatpush1.xpose.msra.mxu0 0.0
    %2403 = vmatprep.subr.mxu0 0.0
    %2404 = vmatpush1.xpose.msra.mxu0 0.0
    %2405 = vmatprep.subr.mxu0 0.0
    %2406 = vmatpush1.xpose.msra.mxu0 0.0
    %2407 = vmatprep.subr.mxu0 0.0
    %2408 = vmatpush1.xpose.msra.mxu0 0.0
    %2409 = vmatprep.subr.mxu0 0.0
    %2410 = vmatpush1.xpose.msra.mxu0 0.0
    %2411 = vmatprep.subr.mxu0 0.0
    %2412 = vmatpush1.xpose.msra.mxu0 0.0
    %2413 = vmatprep.subr.mxu0 0.0
    %2414 = vmatpush1.xpose.msra.mxu0 0.0
    %2415 = vmatprep.subr.mxu0 0.0
    %2416 = vmatpush1.xpose.msra.mxu0 0.0
    %2417 = vmatprep.subr.mxu0 0.0
    %2418 = vmatpush1.xpose.msra.mxu0 0.0
    %2419 = vmatprep.subr.mxu0 0.0
    %2420 = vmatpush1.xpose.msra.mxu0 0.0
    %2421 = vmatprep.subr.mxu0 0.0
    %2422 = vmatpush1.xpose.msra.mxu0 0.0
    %2423 = vmatprep.subr.mxu0 0.0
    %2424 = vmatpush1.xpose.msra.mxu0 0.0
    %2425 = vmatprep.subr.mxu0 0.0
    %2426 = vmatpush1.xpose.msra.mxu0 0.0
    %2427 = vmatprep.subr.mxu0 0.0
    %2428 = vmatpush1.xpose.msra.mxu0 0.0
    %2429 = vmatprep.subr.mxu0 0.0
    %2430 = vmatpush1.xpose.msra.mxu0 0.0
    %2431 = vmatprep.mubr.f32.mxu0 0.0
    %2432 = vmatmul.mubr.f32.gmra.mrb[0].mxu0 %v2114
    %v2433 = vpop.f32.mrb[0].mxu0
    %v2434 = vadd.f32 %v2288, %v2433
    %v2435 = vpop.f32.mrb[0].mxu0
    %2436 = vdwg.mxu0
    %v2437 = vsel %vm669, %v2360, -1e+30
    %v2438 = vsel %vm669, %v2434, -1e+30
    %v2439 = vsel %vm340, %v2437, -inf
    %2440 = vmax.xlane.f32.xlu0 %v2439
    %v2441 = vpop.xlane.xlu0 %2440
    %v2442 = vsel %vm340, %v2438, -inf
    %2443 = vmax.xlane.f32.xlu0 %v2442
    %v2444 = vpop.xlane.xlu0 %2443
    %v2445 = vsub.f32 %v2437, %v2441
    %v2446 = vsub.f32 %v2438, %v2444
    %v2447 = vmul.f32 %v2445, 1.442695
    %v2448 = vpow.pop %v2447
    %v2449 = vmul.f32 %v2446, 1.442695
    %v2450 = vpow.pop %v2449
    %v2451 = vsel %vm340, %v2448, 0.0
    %2452 = vadd.xlane.f32.xlu0 %v2451
    %v2453 = vpop.xlane.xlu0 %2452
    %v2454 = vsel %vm340, %v2450, 0.0
    %2455 = vadd.xlane.f32.xlu0 %v2454
    %v2456 = vpop.xlane.xlu0 %2455
    %v2457 = vrcp.pop %v2453
    %v2458 = vmul.f32 %v2448, %v2457
    %v2459 = vrcp.pop %v2456
    %v2460 = vmul.f32 %v2450, %v2459
    %2461 = vrot.lane.b32.xlu0 %v294, 40
    %v2462 = vpop.permute.xlu0 %2461
    %v2465 = vsel %vm340, %v2458, 0
    %2467 = vmatprep.subr.mxu0 0.0
    %2468 = vmatpush1.msra.mxu0 %v2462
    %2469 = vmatprep.subr.mxu0 0.0
    %2470 = vmatpush1.msra.mxu0 0.0
    %2471 = vmatprep.subr.mxu0 0.0
    %2472 = vmatpush1.msra.mxu0 0.0
    %2473 = vmatprep.subr.mxu0 0.0
    %2474 = vmatpush1.msra.mxu0 0.0
    %2475 = vmatprep.subr.mxu0 0.0
    %2476 = vmatpush1.msra.mxu0 0.0
    %2477 = vmatprep.subr.mxu0 0.0
    %2478 = vmatpush1.msra.mxu0 0.0
    %2479 = vmatprep.subr.mxu0 0.0
    %2480 = vmatpush1.msra.mxu0 0.0
    %2481 = vmatprep.subr.mxu0 0.0
    %2482 = vmatpush1.msra.mxu0 0.0
    %2483 = vmatprep.subr.mxu0 0.0
    %2484 = vmatpush1.msra.mxu0 0.0
    %2485 = vmatprep.subr.mxu0 0.0
    %2486 = vmatpush1.msra.mxu0 0.0
    %2487 = vmatprep.subr.mxu0 0.0
    %2488 = vmatpush1.msra.mxu0 0.0
    %2489 = vmatprep.subr.mxu0 0.0
    %2490 = vmatpush1.msra.mxu0 0.0
    %2491 = vmatprep.subr.mxu0 0.0
    %2492 = vmatpush1.msra.mxu0 0.0
    %2493 = vmatprep.subr.mxu0 0.0
    %2494 = vmatpush1.msra.mxu0 0.0
    %2495 = vmatprep.subr.mxu0 0.0
    %2496 = vmatpush1.msra.mxu0 0.0
    %2497 = vmatprep.subr.mxu0 0.0
    %2498 = vmatpush1.msra.mxu0 0.0
    %2499 = vmatprep.subr.mxu0 0.0
    %2500 = vmatpush1.msra.mxu0 0.0
    %2501 = vmatprep.subr.mxu0 0.0
    %2502 = vmatpush1.msra.mxu0 0.0
    %2503 = vmatprep.subr.mxu0 0.0
    %2504 = vmatpush1.msra.mxu0 0.0
    %2505 = vmatprep.subr.mxu0 0.0
    %2506 = vmatpush1.msra.mxu0 0.0
    %2507 = vmatprep.subr.mxu0 0.0
    %2508 = vmatpush1.msra.mxu0 0.0
    %2509 = vmatprep.subr.mxu0 0.0
    %2510 = vmatpush1.msra.mxu0 0.0
    %2511 = vmatprep.subr.mxu0 0.0
    %2512 = vmatpush1.msra.mxu0 0.0
    %2513 = vmatprep.subr.mxu0 0.0
    %2514 = vmatpush1.msra.mxu0 0.0
    %2515 = vmatprep.subr.mxu0 0.0
    %2516 = vmatpush1.msra.mxu0 0.0
    %2517 = vmatprep.subr.mxu0 0.0
    %2518 = vmatpush1.msra.mxu0 0.0
    %2519 = vmatprep.subr.mxu0 0.0
    %2520 = vmatpush1.msra.mxu0 0.0
    %2521 = vmatprep.subr.mxu0 0.0
    %2522 = vmatpush1.msra.mxu0 0.0
    %2523 = vmatprep.subr.mxu0 0.0
    %2524 = vmatpush1.msra.mxu0 0.0
    %2525 = vmatprep.subr.mxu0 0.0
    %2526 = vmatpush1.msra.mxu0 0.0
    %2527 = vmatprep.subr.mxu0 0.0
    %2528 = vmatpush1.msra.mxu0 0.0
    %2529 = vmatprep.subr.mxu0 0.0
    %2530 = vmatpush1.msra.mxu0 0.0
    %2531 = vmatprep.mubr.f32.mxu0 0.0
    %2532 = vmatmul.mubr.f32.gmra.mrb[0].mxu0 %v2465
    %v2533 = vpop.f32.mrb[0].mxu0
    %v2534 = vadd.f32 0.0, %v2533
    %v2535 = vpop.f32.mrb[0].mxu0
    %2536 = vdwg.mxu0
    %2537 = vrot.lane.b32.xlu0 %v299, 40
    %v2538 = vpop.permute.xlu0 %2537
    %v2541 = vsel %vm340, %v2460, 0
    %2543 = vmatprep.subr.mxu0 0.0
    %2544 = vmatpush1.msra.mxu0 %v2538
    %2545 = vmatprep.subr.mxu0 0.0
    %2546 = vmatpush1.msra.mxu0 0.0
    %2547 = vmatprep.subr.mxu0 0.0
    %2548 = vmatpush1.msra.mxu0 0.0
    %2549 = vmatprep.subr.mxu0 0.0
    %2550 = vmatpush1.msra.mxu0 0.0
    %2551 = vmatprep.subr.mxu0 0.0
    %2552 = vmatpush1.msra.mxu0 0.0
    %2553 = vmatprep.subr.mxu0 0.0
    %2554 = vmatpush1.msra.mxu0 0.0
    %2555 = vmatprep.subr.mxu0 0.0
    %2556 = vmatpush1.msra.mxu0 0.0
    %2557 = vmatprep.subr.mxu0 0.0
    %2558 = vmatpush1.msra.mxu0 0.0
    %2559 = vmatprep.subr.mxu0 0.0
    %2560 = vmatpush1.msra.mxu0 0.0
    %2561 = vmatprep.subr.mxu0 0.0
    %2562 = vmatpush1.msra.mxu0 0.0
    %2563 = vmatprep.subr.mxu0 0.0
    %2564 = vmatpush1.msra.mxu0 0.0
    %2565 = vmatprep.subr.mxu0 0.0
    %2566 = vmatpush1.msra.mxu0 0.0
    %2567 = vmatprep.subr.mxu0 0.0
    %2568 = vmatpush1.msra.mxu0 0.0
    %2569 = vmatprep.subr.mxu0 0.0
    %2570 = vmatpush1.msra.mxu0 0.0
    %2571 = vmatprep.subr.mxu0 0.0
    %2572 = vmatpush1.msra.mxu0 0.0
    %2573 = vmatprep.subr.mxu0 0.0
    %2574 = vmatpush1.msra.mxu0 0.0
    %2575 = vmatprep.subr.mxu0 0.0
    %2576 = vmatpush1.msra.mxu0 0.0
    %2577 = vmatprep.subr.mxu0 0.0
    %2578 = vmatpush1.msra.mxu0 0.0
    %2579 = vmatprep.subr.mxu0 0.0
    %2580 = vmatpush1.msra.mxu0 0.0
    %2581 = vmatprep.subr.mxu0 0.0
    %2582 = vmatpush1.msra.mxu0 0.0
    %2583 = vmatprep.subr.mxu0 0.0
    %2584 = vmatpush1.msra.mxu0 0.0
    %2585 = vmatprep.subr.mxu0 0.0
    %2586 = vmatpush1.msra.mxu0 0.0
    %2587 = vmatprep.subr.mxu0 0.0
    %2588 = vmatpush1.msra.mxu0 0.0
    %2589 = vmatprep.subr.mxu0 0.0
    %2590 = vmatpush1.msra.mxu0 0.0
    %2591 = vmatprep.subr.mxu0 0.0
    %2592 = vmatpush1.msra.mxu0 0.0
    %2593 = vmatprep.subr.mxu0 0.0
    %2594 = vmatpush1.msra.mxu0 0.0
    %2595 = vmatprep.subr.mxu0 0.0
    %2596 = vmatpush1.msra.mxu0 0.0
    %2597 = vmatprep.subr.mxu0 0.0
    %2598 = vmatpush1.msra.mxu0 0.0
    %2599 = vmatprep.subr.mxu0 0.0
    %2600 = vmatpush1.msra.mxu0 0.0
    %2601 = vmatprep.subr.mxu0 0.0
    %2602 = vmatpush1.msra.mxu0 0.0
    %2603 = vmatprep.subr.mxu0 0.0
    %2604 = vmatpush1.msra.mxu0 0.0
    %2605 = vmatprep.subr.mxu0 0.0
    %2606 = vmatpush1.msra.mxu0 0.0
    %2607 = vmatprep.mubr.f32.mxu0 0.0
    %2608 = vmatmul.mubr.f32.gmra.mrb[0].mxu0 %v2541
    %v2609 = vpop.f32.mrb[0].mxu0
    %v2610 = vadd.f32 0.0, %v2609
    %v2611 = vpop.f32.mrb[0].mxu0
    %2612 = vdwg.mxu0
    %v2613 = vld [vmem:[%s6 + $0x18] sm:$0xff]
    %v2615 = vsel %vm340, %v2534, 0
    %v2618 = vsel %vm340, %v2610, 0
    %2620 = vmatprep.subr.mxu0 0.0
    %2621 = vmatpush1.msra.mxu0 %v2613
    %2622 = vmatprep.subr.mxu0 0.0
    %2623 = vmatpush1.msra.mxu0 0.0
    %2624 = vmatprep.subr.mxu0 0.0
    %2625 = vmatpush1.msra.mxu0 0.0
    %2626 = vmatprep.subr.mxu0 0.0
    %2627 = vmatpush1.msra.mxu0 0.0
    %2628 = vmatprep.subr.mxu0 0.0
    %2629 = vmatpush1.msra.mxu0 0.0
    %2630 = vmatprep.subr.mxu0 0.0
    %2631 = vmatpush1.msra.mxu0 0.0
    %2632 = vmatprep.subr.mxu0 0.0
    %2633 = vmatpush1.msra.mxu0 0.0
    %2634 = vmatprep.subr.mxu0 0.0
    %2635 = vmatpush1.msra.mxu0 0.0
    %2636 = vmatprep.subr.mxu0 0.0
    %2637 = vmatpush1.msra.mxu0 0.0
    %2638 = vmatprep.subr.mxu0 0.0
    %2639 = vmatpush1.msra.mxu0 0.0
    %2640 = vmatprep.subr.mxu0 0.0
    %2641 = vmatpush1.msra.mxu0 0.0
    %2642 = vmatprep.subr.mxu0 0.0
    %2643 = vmatpush1.msra.mxu0 0.0
    %2644 = vmatprep.subr.mxu0 0.0
    %2645 = vmatpush1.msra.mxu0 0.0
    %2646 = vmatprep.subr.mxu0 0.0
    %2647 = vmatpush1.msra.mxu0 0.0
    %2648 = vmatprep.subr.mxu0 0.0
    %2649 = vmatpush1.msra.mxu0 0.0
    %2650 = vmatprep.subr.mxu0 0.0
    %2651 = vmatpush1.msra.mxu0 0.0
    %2652 = vmatprep.subr.mxu0 0.0
    %2653 = vmatpush1.msra.mxu0 0.0
    %2654 = vmatprep.subr.mxu0 0.0
    %2655 = vmatpush1.msra.mxu0 0.0
    %2656 = vmatprep.subr.mxu0 0.0
    %2657 = vmatpush1.msra.mxu0 0.0
    %2658 = vmatprep.subr.mxu0 0.0
    %2659 = vmatpush1.msra.mxu0 0.0
    %2660 = vmatprep.subr.mxu0 0.0
    %2661 = vmatpush1.msra.mxu0 0.0
    %2662 = vmatprep.subr.mxu0 0.0
    %2663 = vmatpush1.msra.mxu0 0.0
    %2664 = vmatprep.subr.mxu0 0.0
    %2665 = vmatpush1.msra.mxu0 0.0
    %2666 = vmatprep.subr.mxu0 0.0
    %2667 = vmatpush1.msra.mxu0 0.0
    %2668 = vmatprep.subr.mxu0 0.0
    %2669 = vmatpush1.msra.mxu0 0.0
    %2670 = vmatprep.subr.mxu0 0.0
    %2671 = vmatpush1.msra.mxu0 0.0
    %2672 = vmatprep.subr.mxu0 0.0
    %2673 = vmatpush1.msra.mxu0 0.0
    %2674 = vmatprep.subr.mxu0 0.0
    %2675 = vmatpush1.msra.mxu0 0.0
    %2676 = vmatprep.subr.mxu0 0.0
    %2677 = vmatpush1.msra.mxu0 0.0
    %2678 = vmatprep.subr.mxu0 0.0
    %2679 = vmatpush1.msra.mxu0 0.0
    %2680 = vmatprep.subr.mxu0 0.0
    %2681 = vmatpush1.msra.mxu0 0.0
    %2682 = vmatprep.subr.mxu0 0.0
    %2683 = vmatpush1.msra.mxu0 0.0
    %2684 = vmatprep.mubr.f32.mxu0 0.0
    %2685 = vmatmul.mubr.f32.gmra.mrb[0].mxu0 %v2615
    %v2686 = vpop.f32.mrb[0].mxu0
    %v2687 = vadd.f32 0.0, %v2686
    %v2688 = vpop.f32.mrb[0].mxu0
    %2689 = vmatprep.mubr.f32.mxu0 0.0
    %2690 = vmatmul.mubr.f32.gmra.mrb[0].mxu0 %v2618
    %v2691 = vpop.f32.mrb[0].mxu0
    %v2692 = vadd.f32 0.0, %v2691
    %v2693 = vpop.f32.mrb[0].mxu0
    %2694 = vdwg.mxu0
    %v2695 = vadd.f32 %v2106, %v2687
    %v2696 = vadd.f32 %v2107, %v2692
    %v2697 = vld [vmem:[#allocation10] sm:$0xff]
    %v2698 = vld [vmem:[#allocation10 + $0x8] sm:$0xff]
    %v2699 = vld [vmem:[#allocation10 + $0x10] sm:$0xff]
    %v2700 = vld [vmem:[#allocation10 + $0x18] sm:$0xff]
    %v2702 = vsel %vm220, 0.0, 0
    %2704 = vmatprep.subr.mxu0 0.0
    %2705 = vmatpush1.msra.mxu0 %v2697
    %2706 = vmatprep.subr.mxu0 0.0
    %2707 = vmatpush1.msra.mxu0 %v2698
    %2708 = vmatprep.subr.mxu0 0.0
    %2709 = vmatpush1.msra.mxu0 %v2699
    %2710 = vmatprep.subr.mxu0 0.0
    %2711 = vmatpush1.msra.mxu0 %v2700
    %2712 = vmatprep.subr.mxu0 0.0
    %2713 = vmatpush1.msra.mxu0 0.0
    %2714 = vmatprep.subr.mxu0 0.0
    %2715 = vmatpush1.msra.mxu0 0.0
    %2716 = vmatprep.subr.mxu0 0.0
    %2717 = vmatpush1.msra.mxu0 0.0
    %2718 = vmatprep.subr.mxu0 0.0
    %2719 = vmatpush1.msra.mxu0 0.0
    %2720 = vmatprep.subr.mxu0 0.0
    %2721 = vmatpush1.msra.mxu0 0.0
    %2722 = vmatprep.subr.mxu0 0.0
    %2723 = vmatpush1.msra.mxu0 0.0
    %2724 = vmatprep.subr.mxu0 0.0
    %2725 = vmatpush1.msra.mxu0 0.0
    %2726 = vmatprep.subr.mxu0 0.0
    %2727 = vmatpush1.msra.mxu0 0.0
    %2728 = vmatprep.subr.mxu0 0.0
    %2729 = vmatpush1.msra.mxu0 0.0
    %2730 = vmatprep.subr.mxu0 0.0
    %2731 = vmatpush1.msra.mxu0 0.0
    %2732 = vmatprep.subr.mxu0 0.0
    %2733 = vmatpush1.msra.mxu0 0.0
    %2734 = vmatprep.subr.mxu0 0.0
    %2735 = vmatpush1.msra.mxu0 0.0
    %2736 = vmatprep.subr.mxu0 0.0
    %2737 = vmatpush1.msra.mxu0 0.0
    %2738 = vmatprep.subr.mxu0 0.0
    %2739 = vmatpush1.msra.mxu0 0.0
    %2740 = vmatprep.subr.mxu0 0.0
    %2741 = vmatpush1.msra.mxu0 0.0
    %2742 = vmatprep.subr.mxu0 0.0
    %2743 = vmatpush1.msra.mxu0 0.0
    %2744 = vmatprep.subr.mxu0 0.0
    %2745 = vmatpush1.msra.mxu0 0.0
    %2746 = vmatprep.subr.mxu0 0.0
    %2747 = vmatpush1.msra.mxu0 0.0
    %2748 = vmatprep.subr.mxu0 0.0
    %2749 = vmatpush1.msra.mxu0 0.0
    %2750 = vmatprep.subr.mxu0 0.0
    %2751 = vmatpush1.msra.mxu0 0.0
    %2752 = vmatprep.subr.mxu0 0.0
    %2753 = vmatpush1.msra.mxu0 0.0
    %2754 = vmatprep.subr.mxu0 0.0
    %2755 = vmatpush1.msra.mxu0 0.0
    %2756 = vmatprep.subr.mxu0 0.0
    %2757 = vmatpush1.msra.mxu0 0.0
    %2758 = vmatprep.subr.mxu0 0.0
    %2759 = vmatpush1.msra.mxu0 0.0
    %2760 = vmatprep.subr.mxu0 0.0
    %2761 = vmatpush1.msra.mxu0 0.0
    %2762 = vmatprep.subr.mxu0 0.0
    %2763 = vmatpush1.msra.mxu0 0.0
    %2764 = vmatprep.subr.mxu0 0.0
    %2765 = vmatpush1.msra.mxu0 0.0
    %2766 = vmatprep.subr.mxu0 0.0
    %2767 = vmatpush1.msra.mxu0 0.0
    %2768 = vmatprep.mubr.f32.mxu0 0.0
    %2769 = vmatmul.mubr.f32.gmra.mrb[0].mxu0 %v2702
    %v2770 = vpop.f32.mrb[0].mxu0
    %v2771 = vadd.f32 0.0, %v2770
    %v2772 = vpop.f32.mrb[0].mxu0
    %2773 = vdwg.mxu0
    %v2775 = vrot.slane %v2771, 1
    %v2778 = vadd.f32 %v2695, %v2771
    %v2779 = vadd.f32 %v2696, %v2775
    %v2780 = vxor.u32 %v2778, 2147483648
    %v2781 = vxor.u32 %v2779, 2147483648
    %v2782 = vmul.f32 %v2780, 1.442695
    %v2783 = vpow.pop %v2782
    %v2784 = vmul.f32 %v2781, 1.442695
    %v2785 = vpow.pop %v2784
    %v2786 = vadd.f32 %v2783, 1.0
    %v2787 = vadd.f32 %v2785, 1.0
    %v2788 = vrcp.pop %v2786
    %v2789 = vmul.f32 1.0, %v2788
    %v2790 = vrcp.pop %v2787
    %v2791 = vmul.f32 1.0, %v2790
    %v2792 = vtanh.pop %v2778
    %v2793 = vtanh.pop %v2779
    %v2794 = vmul.f32 %v2789, 0.0
    %v2795 = vmul.f32 %v2791, 0.0
    %2798 = vrot.lane.b32.xlu0 %v2792, 64
    %v2799 = vpop.permute.xlu0 %2798
    %2800 = vrot.lane.b32.xlu0 %v2793, 64
    %v2801 = vpop.permute.xlu0 %2800
    %v2804 = vmul.f32 %v2789, %v2799
    %v2805 = vmul.f32 %v2791, %v2801
    %2808 = vrot.lane.b32.xlu0 %v2804, 32
    %v2809 = vpop.permute.xlu0 %2808
    %2810 = vrot.lane.b32.xlu0 %v2805, 32
    %v2811 = vpop.permute.xlu0 %2810
    %v2814 = vadd.f32 %v2794, %v2809
    %v2815 = vadd.f32 %v2795, %v2811
    %v2816 = vtanh.pop %v2814
    %v2817 = vtanh.pop %v2815
    %2820 = vrot.lane.b32.xlu0 %v2816, 64
    %v2821 = vpop.permute.xlu0 %2820
    %2822 = vrot.lane.b32.xlu0 %v2817, 64
    %v2823 = vpop.permute.xlu0 %2822
    %v2826 = vmul.f32 %v2789, %v2821
    %v2827 = vmul.f32 %v2791, %v2823
    %v2830 = vrot.slane %v2827, 7
    %vm2831 = vcmask 1041409
    %v2832 = vsel %vm2831, %v2830, %v2826
    %2833 = vrot.lane.b32.xlu0 %v2832, 32
    %v2834 = vpop.permute.xlu0 %2833
    %v2835 = vsel %vm220, %v2834, 0
    %2837 = vmatprep.subr.mxu0 0.0
    %2838 = vmatpush1.msra.mxu0 %v2697
    %2839 = vmatprep.subr.mxu0 0.0
    %2840 = vmatpush1.msra.mxu0 %v2698
    %2841 = vmatprep.subr.mxu0 0.0
    %2842 = vmatpush1.msra.mxu0 %v2699
    %2843 = vmatprep.subr.mxu0 0.0
    %2844 = vmatpush1.msra.mxu0 %v2700
    %2845 = vmatprep.subr.mxu0 0.0
    %2846 = vmatpush1.msra.mxu0 0.0
    %2847 = vmatprep.subr.mxu0 0.0
    %2848 = vmatpush1.msra.mxu0 0.0
    %2849 = vmatprep.subr.mxu0 0.0
    %2850 = vmatpush1.msra.mxu0 0.0
    %2851 = vmatprep.subr.mxu0 0.0
    %2852 = vmatpush1.msra.mxu0 0.0
    %2853 = vmatprep.subr.mxu0 0.0
    %2854 = vmatpush1.msra.mxu0 0.0
    %2855 = vmatprep.subr.mxu0 0.0
    %2856 = vmatpush1.msra.mxu0 0.0
    %2857 = vmatprep.subr.mxu0 0.0
    %2858 = vmatpush1.msra.mxu0 0.0
    %2859 = vmatprep.subr.mxu0 0.0
    %2860 = vmatpush1.msra.mxu0 0.0
    %2861 = vmatprep.subr.mxu0 0.0
    %2862 = vmatpush1.msra.mxu0 0.0
    %2863 = vmatprep.subr.mxu0 0.0
    %2864 = vmatpush1.msra.mxu0 0.0
    %2865 = vmatprep.subr.mxu0 0.0
    %2866 = vmatpush1.msra.mxu0 0.0
    %2867 = vmatprep.subr.mxu0 0.0
    %2868 = vmatpush1.msra.mxu0 0.0
    %2869 = vmatprep.subr.mxu0 0.0
    %2870 = vmatpush1.msra.mxu0 0.0
    %2871 = vmatprep.subr.mxu0 0.0
    %2872 = vmatpush1.msra.mxu0 0.0
    %2873 = vmatprep.subr.mxu0 0.0
    %2874 = vmatpush1.msra.mxu0 0.0
    %2875 = vmatprep.subr.mxu0 0.0
    %2876 = vmatpush1.msra.mxu0 0.0
    %2877 = vmatprep.subr.mxu0 0.0
    %2878 = vmatpush1.msra.mxu0 0.0
    %2879 = vmatprep.subr.mxu0 0.0
    %2880 = vmatpush1.msra.mxu0 0.0
    %2881 = vmatprep.subr.mxu0 0.0
    %2882 = vmatpush1.msra.mxu0 0.0
    %2883 = vmatprep.subr.mxu0 0.0
    %2884 = vmatpush1.msra.mxu0 0.0
    %2885 = vmatprep.subr.mxu0 0.0
    %2886 = vmatpush1.msra.mxu0 0.0
    %2887 = vmatprep.subr.mxu0 0.0
    %2888 = vmatpush1.msra.mxu0 0.0
    %2889 = vmatprep.subr.mxu0 0.0
    %2890 = vmatpush1.msra.mxu0 0.0
    %2891 = vmatprep.subr.mxu0 0.0
    %2892 = vmatpush1.msra.mxu0 0.0
    %2893 = vmatprep.subr.mxu0 0.0
    %2894 = vmatpush1.msra.mxu0 0.0
    %2895 = vmatprep.subr.mxu0 0.0
    %2896 = vmatpush1.msra.mxu0 0.0
    %2897 = vmatprep.subr.mxu0 0.0
    %2898 = vmatpush1.msra.mxu0 0.0
    %2899 = vmatprep.subr.mxu0 0.0
    %2900 = vmatpush1.msra.mxu0 0.0
    %2901 = vmatprep.mubr.f32.mxu0 0.0
    %2902 = vmatmul.mubr.f32.gmra.mrb[0].mxu0 %v2835
    %v2903 = vpop.f32.mrb[0].mxu0
    %v2904 = vadd.f32 0.0, %v2903
    %v2905 = vpop.f32.mrb[0].mxu0
    %2906 = vdwg.mxu0
    %v2908 = vrot.slane %v2904, 7
    %v2911 = vadd.f32 %v2695, %v2908
    %v2912 = vadd.f32 %v2696, %v2904
    %v2913 = vxor.u32 %v2911, 2147483648
    %v2914 = vxor.u32 %v2912, 2147483648
    %v2915 = vmul.f32 %v2913, 1.442695
    %v2916 = vpow.pop %v2915
    %v2917 = vmul.f32 %v2914, 1.442695
    %v2918 = vpow.pop %v2917
    %v2919 = vadd.f32 %v2916, 1.0
    %v2920 = vadd.f32 %v2918, 1.0
    %v2921 = vrcp.pop %v2919
    %v2922 = vmul.f32 1.0, %v2921
    %v2923 = vrcp.pop %v2920
    %v2924 = vmul.f32 1.0, %v2923
    %v2925 = vtanh.pop %v2911
    %v2926 = vtanh.pop %v2912
    %v2929 = vrot.slane %v2814, 7
    %v2930 = vrot.slane %v2815, 7
    %v2933 = vmul.f32 %v2922, %v2929
    %v2934 = vmul.f32 %v2924, %v2930
    %2937 = vrot.lane.b32.xlu0 %v2925, 64
    %v2938 = vpop.permute.xlu0 %2937
    %2939 = vrot.lane.b32.xlu0 %v2926, 64
    %v2940 = vpop.permute.xlu0 %2939
    %v2943 = vmul.f32 %v2922, %v2938
    %v2944 = vmul.f32 %v2924, %v2940
    %2947 = vrot.lane.b32.xlu0 %v2943, 32
    %v2948 = vpop.permute.xlu0 %2947
    %2949 = vrot.lane.b32.xlu0 %v2944, 32
    %v2950 = vpop.permute.xlu0 %2949
    %v2953 = vadd.f32 %v2933, %v2948
    %v2954 = vadd.f32 %v2934, %v2950
    %v2955 = vtanh.pop %v2953
    %v2956 = vtanh.pop %v2954
    %2959 = vrot.lane.b32.xlu0 %v2955, 64
    %v2960 = vpop.permute.xlu0 %2959
    %2961 = vrot.lane.b32.xlu0 %v2956, 64
    %v2962 = vpop.permute.xlu0 %2961
    %v2965 = vmul.f32 %v2922, %v2960
    %v2966 = vmul.f32 %v2924, %v2962
    %v2969 = vrot.slane %v2965, 1
    %v2970 = vsel %vm2831, %v2966, %v2969
    %2971 = vrot.lane.b32.xlu0 %v2970, 32
    %v2972 = vpop.permute.xlu0 %2971
    %v2973 = vsel %vm220, %v2972, 0
    %2975 = vmatprep.subr.mxu0 0.0
    %2976 = vmatpush1.msra.mxu0 %v2697
    %2977 = vmatprep.subr.mxu0 0.0
    %2978 = vmatpush1.msra.mxu0 %v2698
    %2979 = vmatprep.subr.mxu0 0.0
    %2980 = vmatpush1.msra.mxu0 %v2699
    %2981 = vmatprep.subr.mxu0 0.0
    %2982 = vmatpush1.msra.mxu0 %v2700
    %2983 = vmatprep.subr.mxu0 0.0
    %2984 = vmatpush1.msra.mxu0 0.0
    %2985 = vmatprep.subr.mxu0 0.0
    %2986 = vmatpush1.msra.mxu0 0.0
    %2987 = vmatprep.subr.mxu0 0.0
    %2988 = vmatpush1.msra.mxu0 0.0
    %2989 = vmatprep.subr.mxu0 0.0
    %2990 = vmatpush1.msra.mxu0 0.0
    %2991 = vmatprep.subr.mxu0 0.0
    %2992 = vmatpush1.msra.mxu0 0.0
    %2993 = vmatprep.subr.mxu0 0.0
    %2994 = vmatpush1.msra.mxu0 0.0
    %2995 = vmatprep.subr.mxu0 0.0
    %2996 = vmatpush1.msra.mxu0 0.0
    %2997 = vmatprep.subr.mxu0 0.0
    %2998 = vmatpush1.msra.mxu0 0.0
    %2999 = vmatprep.subr.mxu0 0.0
    %3000 = vmatpush1.msra.mxu0 0.0
    %3001 = vmatprep.subr.mxu0 0.0
    %3002 = vmatpush1.msra.mxu0 0.0
    %3003 = vmatprep.subr.mxu0 0.0
    %3004 = vmatpush1.msra.mxu0 0.0
    %3005 = vmatprep.subr.mxu0 0.0
    %3006 = vmatpush1.msra.mxu0 0.0
    %3007 = vmatprep.subr.mxu0 0.0
    %3008 = vmatpush1.msra.mxu0 0.0
    %3009 = vmatprep.subr.mxu0 0.0
    %3010 = vmatpush1.msra.mxu0 0.0
    %3011 = vmatprep.subr.mxu0 0.0
    %3012 = vmatpush1.msra.mxu0 0.0
    %3013 = vmatprep.subr.mxu0 0.0
    %3014 = vmatpush1.msra.mxu0 0.0
    %3015 = vmatprep.subr.mxu0 0.0
    %3016 = vmatpush1.msra.mxu0 0.0
    %3017 = vmatprep.subr.mxu0 0.0
    %3018 = vmatpush1.msra.mxu0 0.0
    %3019 = vmatprep.subr.mxu0 0.0
    %3020 = vmatpush1.msra.mxu0 0.0
    %3021 = vmatprep.subr.mxu0 0.0
    %3022 = vmatpush1.msra.mxu0 0.0
    %3023 = vmatprep.subr.mxu0 0.0
    %3024 = vmatpush1.msra.mxu0 0.0
    %3025 = vmatprep.subr.mxu0 0.0
    %3026 = vmatpush1.msra.mxu0 0.0
    %3027 = vmatprep.subr.mxu0 0.0
    %3028 = vmatpush1.msra.mxu0 0.0
    %3029 = vmatprep.subr.mxu0 0.0
    %3030 = vmatpush1.msra.mxu0 0.0
    %3031 = vmatprep.subr.mxu0 0.0
    %3032 = vmatpush1.msra.mxu0 0.0
    %3033 = vmatprep.subr.mxu0 0.0
    %3034 = vmatpush1.msra.mxu0 0.0
    %3035 = vmatprep.subr.mxu0 0.0
    %3036 = vmatpush1.msra.mxu0 0.0
    %3037 = vmatprep.subr.mxu0 0.0
    %3038 = vmatpush1.msra.mxu0 0.0
    %3039 = vmatprep.mubr.f32.mxu0 0.0
    %3040 = vmatmul.mubr.f32.gmra.mrb[0].mxu0 %v2973
    %v3041 = vpop.f32.mrb[0].mxu0
    %v3042 = vadd.f32 0.0, %v3041
    %v3043 = vpop.f32.mrb[0].mxu0
    %3044 = vdwg.mxu0
    %v3046 = vrot.slane %v3042, 6
    %v3047 = vrot.slane %v3042, 7
    %v3050 = vadd.f32 %v2695, %v3046
    %v3051 = vadd.f32 %v2696, %v3047
    %v3052 = vxor.u32 %v3050, 2147483648
    %v3053 = vxor.u32 %v3051, 2147483648
    %v3054 = vmul.f32 %v3052, 1.442695
    %v3055 = vpow.pop %v3054
    %v3056 = vmul.f32 %v3053, 1.442695
    %v3057 = vpow.pop %v3056
    %v3058 = vadd.f32 %v3055, 1.0
    %v3059 = vadd.f32 %v3057, 1.0
    %v3060 = vrcp.pop %v3058
    %v3061 = vmul.f32 1.0, %v3060
    %v3062 = vrcp.pop %v3059
    %v3063 = vmul.f32 1.0, %v3062
    %v3064 = vtanh.pop %v3050
    %v3065 = vtanh.pop %v3051
    %v3068 = vrot.slane %v2953, 7
    %v3069 = vrot.slane %v2954, 7
    %v3072 = vmul.f32 %v3061, %v3068
    %v3073 = vmul.f32 %v3063, %v3069
    %3076 = vrot.lane.b32.xlu0 %v3064, 64
    %v3077 = vpop.permute.xlu0 %3076
    %3078 = vrot.lane.b32.xlu0 %v3065, 64
    %v3079 = vpop.permute.xlu0 %3078
    %v3082 = vmul.f32 %v3061, %v3077
    %v3083 = vmul.f32 %v3063, %v3079
    %3086 = vrot.lane.b32.xlu0 %v3082, 32
    %v3087 = vpop.permute.xlu0 %3086
    %3088 = vrot.lane.b32.xlu0 %v3083, 32
    %v3089 = vpop.permute.xlu0 %3088
    %v3092 = vadd.f32 %v3072, %v3087
    %v3093 = vadd.f32 %v3073, %v3089
    %v3094 = vtanh.pop %v3092
    %v3095 = vtanh.pop %v3093
    %3098 = vrot.lane.b32.xlu0 %v3094, 64
    %v3099 = vpop.permute.xlu0 %3098
    %3100 = vrot.lane.b32.xlu0 %v3095, 64
    %v3101 = vpop.permute.xlu0 %3100
    %v3104 = vmul.f32 %v3061, %v3099
    %v3105 = vmul.f32 %v3063, %v3101
    %v3108 = vrot.slane %v3104, 2
    %v3109 = vrot.slane %v3105, 1
    %v3110 = vsel %vm2831, %v3109, %v3108
    %3111 = vrot.lane.b32.xlu0 %v3110, 32
    %v3112 = vpop.permute.xlu0 %3111
    %v3113 = vsel %vm220, %v3112, 0
    %3115 = vmatprep.subr.mxu0 0.0
    %3116 = vmatpush1.msra.mxu0 %v2697
    %3117 = vmatprep.subr.mxu0 0.0
    %3118 = vmatpush1.msra.mxu0 %v2698
    %3119 = vmatprep.subr.mxu0 0.0
    %3120 = vmatpush1.msra.mxu0 %v2699
    %3121 = vmatprep.subr.mxu0 0.0
    %3122 = vmatpush1.msra.mxu0 %v2700
    %3123 = vmatprep.subr.mxu0 0.0
    %3124 = vmatpush1.msra.mxu0 0.0
    %3125 = vmatprep.subr.mxu0 0.0
    %3126 = vmatpush1.msra.mxu0 0.0
    %3127 = vmatprep.subr.mxu0 0.0
    %3128 = vmatpush1.msra.mxu0 0.0
    %3129 = vmatprep.subr.mxu0 0.0
    %3130 = vmatpush1.msra.mxu0 0.0
    %3131 = vmatprep.subr.mxu0 0.0
    %3132 = vmatpush1.msra.mxu0 0.0
    %3133 = vmatprep.subr.mxu0 0.0
    %3134 = vmatpush1.msra.mxu0 0.0
    %3135 = vmatprep.subr.mxu0 0.0
    %3136 = vmatpush1.msra.mxu0 0.0
    %3137 = vmatprep.subr.mxu0 0.0
    %3138 = vmatpush1.msra.mxu0 0.0
    %3139 = vmatprep.subr.mxu0 0.0
    %3140 = vmatpush1.msra.mxu0 0.0
    %3141 = vmatprep.subr.mxu0 0.0
    %3142 = vmatpush1.msra.mxu0 0.0
    %3143 = vmatprep.subr.mxu0 0.0
    %3144 = vmatpush1.msra.mxu0 0.0
    %3145 = vmatprep.subr.mxu0 0.0
    %3146 = vmatpush1.msra.mxu0 0.0
    %3147 = vmatprep.subr.mxu0 0.0
    %3148 = vmatpush1.msra.mxu0 0.0
    %3149 = vmatprep.subr.mxu0 0.0
    %3150 = vmatpush1.msra.mxu0 0.0
    %3151 = vmatprep.subr.mxu0 0.0
    %3152 = vmatpush1.msra.mxu0 0.0
    %3153 = vmatprep.subr.mxu0 0.0
    %3154 = vmatpush1.msra.mxu0 0.0
    %3155 = vmatprep.subr.mxu0 0.0
    %3156 = vmatpush1.msra.mxu0 0.0
    %3157 = vmatprep.subr.mxu0 0.0
    %3158 = vmatpush1.msra.mxu0 0.0
    %3159 = vmatprep.subr.mxu0 0.0
    %3160 = vmatpush1.msra.mxu0 0.0
    %3161 = vmatprep.subr.mxu0 0.0
    %3162 = vmatpush1.msra.mxu0 0.0
    %3163 = vmatprep.subr.mxu0 0.0
    %3164 = vmatpush1.msra.mxu0 0.0
    %3165 = vmatprep.subr.mxu0 0.0
    %3166 = vmatpush1.msra.mxu0 0.0
    %3167 = vmatprep.subr.mxu0 0.0
    %3168 = vmatpush1.msra.mxu0 0.0
    %3169 = vmatprep.subr.mxu0 0.0
    %3170 = vmatpush1.msra.mxu0 0.0
    %3171 = vmatprep.subr.mxu0 0.0
    %3172 = vmatpush1.msra.mxu0 0.0
    %3173 = vmatprep.subr.mxu0 0.0
    %3174 = vmatpush1.msra.mxu0 0.0
    %3175 = vmatprep.subr.mxu0 0.0
    %3176 = vmatpush1.msra.mxu0 0.0
    %3177 = vmatprep.subr.mxu0 0.0
    %3178 = vmatpush1.msra.mxu0 0.0
    %3179 = vmatprep.mubr.f32.mxu0 0.0
    %3180 = vmatmul.mubr.f32.gmra.mrb[0].mxu0 %v3113
    %v3181 = vpop.f32.mrb[0].mxu0
    %v3182 = vadd.f32 0.0, %v3181
    %v3183 = vpop.f32.mrb[0].mxu0
    %3184 = vdwg.mxu0
    %v3186 = vrot.slane %v3182, 5
    %v3187 = vrot.slane %v3182, 6
    %v3190 = vadd.f32 %v2695, %v3186
    %v3191 = vadd.f32 %v2696, %v3187
    %v3192 = vxor.u32 %v3190, 2147483648
    %v3193 = vxor.u32 %v3191, 2147483648
    %v3194 = vmul.f32 %v3192, 1.442695
    %v3195 = vpow.pop %v3194
    %v3196 = vmul.f32 %v3193, 1.442695
    %v3197 = vpow.pop %v3196
    %v3198 = vadd.f32 %v3195, 1.0
    %v3199 = vadd.f32 %v3197, 1.0
    %v3200 = vrcp.pop %v3198
    %v3201 = vmul.f32 1.0, %v3200
    %v3202 = vrcp.pop %v3199
    %v3203 = vmul.f32 1.0, %v3202
    %v3204 = vtanh.pop %v3190
    %v3205 = vtanh.pop %v3191
    %v3208 = vrot.slane %v3092, 7
    %v3209 = vrot.slane %v3093, 7
    %v3212 = vmul.f32 %v3201, %v3208
    %v3213 = vmul.f32 %v3203, %v3209
    %3216 = vrot.lane.b32.xlu0 %v3204, 64
    %v3217 = vpop.permute.xlu0 %3216
    %3218 = vrot.lane.b32.xlu0 %v3205, 64
    %v3219 = vpop.permute.xlu0 %3218
    %v3222 = vmul.f32 %v3201, %v3217
    %v3223 = vmul.f32 %v3203, %v3219
    %3226 = vrot.lane.b32.xlu0 %v3222, 32
    %v3227 = vpop.permute.xlu0 %3226
    %3228 = vrot.lane.b32.xlu0 %v3223, 32
    %v3229 = vpop.permute.xlu0 %3228
    %v3232 = vadd.f32 %v3212, %v3227
    %v3233 = vadd.f32 %v3213, %v3229
    %v3234 = vtanh.pop %v3232
    %v3235 = vtanh.pop %v3233
    %3238 = vrot.lane.b32.xlu0 %v3234, 64
    %v3239 = vpop.permute.xlu0 %3238
    %3240 = vrot.lane.b32.xlu0 %v3235, 64
    %v3241 = vpop.permute.xlu0 %3240
    %v3244 = vmul.f32 %v3201, %v3239
    %v3245 = vmul.f32 %v3203, %v3241
    %v3248 = vrot.slane %v3244, 3
    %v3249 = vrot.slane %v3245, 2
    %v3250 = vsel %vm2831, %v3249, %v3248
    %3251 = vrot.lane.b32.xlu0 %v3250, 32
    %v3252 = vpop.permute.xlu0 %3251
    %v3253 = vsel %vm220, %v3252, 0
    %3255 = vmatprep.subr.mxu0 0.0
    %3256 = vmatpush1.msra.mxu0 %v2697
    %3257 = vmatprep.subr.mxu0 0.0
    %3258 = vmatpush1.msra.mxu0 %v2698
    %3259 = vmatprep.subr.mxu0 0.0
    %3260 = vmatpush1.msra.mxu0 %v2699
    %3261 = vmatprep.subr.mxu0 0.0
    %3262 = vmatpush1.msra.mxu0 %v2700
    %3263 = vmatprep.subr.mxu0 0.0
    %3264 = vmatpush1.msra.mxu0 0.0
    %3265 = vmatprep.subr.mxu0 0.0
    %3266 = vmatpush1.msra.mxu0 0.0
    %3267 = vmatprep.subr.mxu0 0.0
    %3268 = vmatpush1.msra.mxu0 0.0
    %3269 = vmatprep.subr.mxu0 0.0
    %3270 = vmatpush1.msra.mxu0 0.0
    %3271 = vmatprep.subr.mxu0 0.0
    %3272 = vmatpush1.msra.mxu0 0.0
    %3273 = vmatprep.subr.mxu0 0.0
    %3274 = vmatpush1.msra.mxu0 0.0
    %3275 = vmatprep.subr.mxu0 0.0
    %3276 = vmatpush1.msra.mxu0 0.0
    %3277 = vmatprep.subr.mxu0 0.0
    %3278 = vmatpush1.msra.mxu0 0.0
    %3279 = vmatprep.subr.mxu0 0.0
    %3280 = vmatpush1.msra.mxu0 0.0
    %3281 = vmatprep.subr.mxu0 0.0
    %3282 = vmatpush1.msra.mxu0 0.0
    %3283 = vmatprep.subr.mxu0 0.0
    %3284 = vmatpush1.msra.mxu0 0.0
    %3285 = vmatprep.subr.mxu0 0.0
    %3286 = vmatpush1.msra.mxu0 0.0
    %3287 = vmatprep.subr.mxu0 0.0
    %3288 = vmatpush1.msra.mxu0 0.0
    %3289 = vmatprep.subr.mxu0 0.0
    %3290 = vmatpush1.msra.mxu0 0.0
    %3291 = vmatprep.subr.mxu0 0.0
    %3292 = vmatpush1.msra.mxu0 0.0
    %3293 = vmatprep.subr.mxu0 0.0
    %3294 = vmatpush1.msra.mxu0 0.0
    %3295 = vmatprep.subr.mxu0 0.0
    %3296 = vmatpush1.msra.mxu0 0.0
    %3297 = vmatprep.subr.mxu0 0.0
    %3298 = vmatpush1.msra.mxu0 0.0
    %3299 = vmatprep.subr.mxu0 0.0
    %3300 = vmatpush1.msra.mxu0 0.0
    %3301 = vmatprep.subr.mxu0 0.0
    %3302 = vmatpush1.msra.mxu0 0.0
    %3303 = vmatprep.subr.mxu0 0.0
    %3304 = vmatpush1.msra.mxu0 0.0
    %3305 = vmatprep.subr.mxu0 0.0
    %3306 = vmatpush1.msra.mxu0 0.0
    %3307 = vmatprep.subr.mxu0 0.0
    %3308 = vmatpush1.msra.mxu0 0.0
    %3309 = vmatprep.subr.mxu0 0.0
    %3310 = vmatpush1.msra.mxu0 0.0
    %3311 = vmatprep.subr.mxu0 0.0
    %3312 = vmatpush1.msra.mxu0 0.0
    %3313 = vmatprep.subr.mxu0 0.0
    %3314 = vmatpush1.msra.mxu0 0.0
    %3315 = vmatprep.subr.mxu0 0.0
    %3316 = vmatpush1.msra.mxu0 0.0
    %3317 = vmatprep.subr.mxu0 0.0
    %3318 = vmatpush1.msra.mxu0 0.0
    %3319 = vmatprep.mubr.f32.mxu0 0.0
    %3320 = vmatmul.mubr.f32.gmra.mrb[0].mxu0 %v3253
    %v3321 = vpop.f32.mrb[0].mxu0
    %v3322 = vadd.f32 0.0, %v3321
    %v3323 = vpop.f32.mrb[0].mxu0
    %3324 = vdwg.mxu0
    %v3326 = vrot.slane %v3322, 4
    %v3327 = vrot.slane %v3322, 5
    %v3330 = vadd.f32 %v2695, %v3326
    %v3331 = vadd.f32 %v2696, %v3327
    %v3332 = vxor.u32 %v3330, 2147483648
    %v3333 = vxor.u32 %v3331, 2147483648
    %v3334 = vmul.f32 %v3332, 1.442695
    %v3335 = vpow.pop %v3334
    %v3336 = vmul.f32 %v3333, 1.442695
    %v3337 = vpow.pop %v3336
    %v3338 = vadd.f32 %v3335, 1.0
    %v3339 = vadd.f32 %v3337, 1.0
    %v3340 = vrcp.pop %v3338
    %v3341 = vmul.f32 1.0, %v3340
    %v3342 = vrcp.pop %v3339
    %v3343 = vmul.f32 1.0, %v3342
    %v3344 = vtanh.pop %v3330
    %v3345 = vtanh.pop %v3331
    %v3348 = vrot.slane %v3232, 7
    %v3349 = vrot.slane %v3233, 7
    %v3352 = vmul.f32 %v3341, %v3348
    %v3353 = vmul.f32 %v3343, %v3349
    %3356 = vrot.lane.b32.xlu0 %v3344, 64
    %v3357 = vpop.permute.xlu0 %3356
    %3358 = vrot.lane.b32.xlu0 %v3345, 64
    %v3359 = vpop.permute.xlu0 %3358
    %v3362 = vmul.f32 %v3341, %v3357
    %v3363 = vmul.f32 %v3343, %v3359
    %3366 = vrot.lane.b32.xlu0 %v3362, 32
    %v3367 = vpop.permute.xlu0 %3366
    %3368 = vrot.lane.b32.xlu0 %v3363, 32
    %v3369 = vpop.permute.xlu0 %3368
    %v3372 = vadd.f32 %v3352, %v3367
    %v3373 = vadd.f32 %v3353, %v3369
    %v3374 = vtanh.pop %v3372
    %v3375 = vtanh.pop %v3373
    %3378 = vrot.lane.b32.xlu0 %v3374, 64
    %v3379 = vpop.permute.xlu0 %3378
    %3380 = vrot.lane.b32.xlu0 %v3375, 64
    %v3381 = vpop.permute.xlu0 %3380
    %v3384 = vmul.f32 %v3341, %v3379
    %v3385 = vmul.f32 %v3343, %v3381
    %v3388 = vrot.slane %v3384, 4
    %v3389 = vrot.slane %v3385, 3
    %v3390 = vsel %vm2831, %v3389, %v3388
    %3391 = vrot.lane.b32.xlu0 %v3390, 32
    %v3392 = vpop.permute.xlu0 %3391
    %v3393 = vsel %vm220, %v3392, 0
    %3395 = vmatprep.subr.mxu0 0.0
    %3396 = vmatpush1.msra.mxu0 %v2697
    %3397 = vmatprep.subr.mxu0 0.0
    %3398 = vmatpush1.msra.mxu0 %v2698
    %3399 = vmatprep.subr.mxu0 0.0
    %3400 = vmatpush1.msra.mxu0 %v2699
    %3401 = vmatprep.subr.mxu0 0.0
    %3402 = vmatpush1.msra.mxu0 %v2700
    %3403 = vmatprep.subr.mxu0 0.0
    %3404 = vmatpush1.msra.mxu0 0.0
    %3405 = vmatprep.subr.mxu0 0.0
    %3406 = vmatpush1.msra.mxu0 0.0
    %3407 = vmatprep.subr.mxu0 0.0
    %3408 = vmatpush1.msra.mxu0 0.0
    %3409 = vmatprep.subr.mxu0 0.0
    %3410 = vmatpush1.msra.mxu0 0.0
    %3411 = vmatprep.subr.mxu0 0.0
    %3412 = vmatpush1.msra.mxu0 0.0
    %3413 = vmatprep.subr.mxu0 0.0
    %3414 = vmatpush1.msra.mxu0 0.0
    %3415 = vmatprep.subr.mxu0 0.0
    %3416 = vmatpush1.msra.mxu0 0.0
    %3417 = vmatprep.subr.mxu0 0.0
    %3418 = vmatpush1.msra.mxu0 0.0
    %3419 = vmatprep.subr.mxu0 0.0
    %3420 = vmatpush1.msra.mxu0 0.0
    %3421 = vmatprep.subr.mxu0 0.0
    %3422 = vmatpush1.msra.mxu0 0.0
    %3423 = vmatprep.subr.mxu0 0.0
    %3424 = vmatpush1.msra.mxu0 0.0
    %3425 = vmatprep.subr.mxu0 0.0
    %3426 = vmatpush1.msra.mxu0 0.0
    %3427 = vmatprep.subr.mxu0 0.0
    %3428 = vmatpush1.msra.mxu0 0.0
    %3429 = vmatprep.subr.mxu0 0.0
    %3430 = vmatpush1.msra.mxu0 0.0
    %3431 = vmatprep.subr.mxu0 0.0
    %3432 = vmatpush1.msra.mxu0 0.0
    %3433 = vmatprep.subr.mxu0 0.0
    %3434 = vmatpush1.msra.mxu0 0.0
    %3435 = vmatprep.subr.mxu0 0.0
    %3436 = vmatpush1.msra.mxu0 0.0
    %3437 = vmatprep.subr.mxu0 0.0
    %3438 = vmatpush1.msra.mxu0 0.0
    %3439 = vmatprep.subr.mxu0 0.0
    %3440 = vmatpush1.msra.mxu0 0.0
    %3441 = vmatprep.subr.mxu0 0.0
    %3442 = vmatpush1.msra.mxu0 0.0
    %3443 = vmatprep.subr.mxu0 0.0
    %3444 = vmatpush1.msra.mxu0 0.0
    %3445 = vmatprep.subr.mxu0 0.0
    %3446 = vmatpush1.msra.mxu0 0.0
    %3447 = vmatprep.subr.mxu0 0.0
    %3448 = vmatpush1.msra.mxu0 0.0
    %3449 = vmatprep.subr.mxu0 0.0
    %3450 = vmatpush1.msra.mxu0 0.0
    %3451 = vmatprep.subr.mxu0 0.0
    %3452 = vmatpush1.msra.mxu0 0.0
    %3453 = vmatprep.subr.mxu0 0.0
    %3454 = vmatpush1.msra.mxu0 0.0
    %3455 = vmatprep.subr.mxu0 0.0
    %3456 = vmatpush1.msra.mxu0 0.0
    %3457 = vmatprep.subr.mxu0 0.0
    %3458 = vmatpush1.msra.mxu0 0.0
    %3459 = vmatprep.mubr.f32.mxu0 0.0
    %3460 = vmatmul.mubr.f32.gmra.mrb[0].mxu0 %v3393
    %v3461 = vpop.f32.mrb[0].mxu0
    %v3462 = vadd.f32 0.0, %v3461
    %v3463 = vpop.f32.mrb[0].mxu0
    %3464 = vdwg.mxu0
    %v3466 = vrot.slane %v3462, 3
    %v3467 = vrot.slane %v3462, 4
    %v3470 = vadd.f32 %v2695, %v3466
    %v3471 = vadd.f32 %v2696, %v3467
    %v3472 = vxor.u32 %v3470, 2147483648
    %v3473 = vxor.u32 %v3471, 2147483648
    %v3474 = vmul.f32 %v3472, 1.442695
    %v3475 = vpow.pop %v3474
    %v3476 = vmul.f32 %v3473, 1.442695
    %v3477 = vpow.pop %v3476
    %v3478 = vadd.f32 %v3475, 1.0
    %v3479 = vadd.f32 %v3477, 1.0
    %v3480 = vrcp.pop %v3478
    %v3481 = vmul.f32 1.0, %v3480
    %v3482 = vrcp.pop %v3479
    %v3483 = vmul.f32 1.0, %v3482
    %v3484 = vtanh.pop %v3470
    %v3485 = vtanh.pop %v3471
    %v3488 = vrot.slane %v3372, 7
    %v3489 = vrot.slane %v3373, 7
    %v3492 = vmul.f32 %v3481, %v3488
    %v3493 = vmul.f32 %v3483, %v3489
    %3496 = vrot.lane.b32.xlu0 %v3484, 64
    %v3497 = vpop.permute.xlu0 %3496
    %3498 = vrot.lane.b32.xlu0 %v3485, 64
    %v3499 = vpop.permute.xlu0 %3498
    %v3502 = vmul.f32 %v3481, %v3497
    %v3503 = vmul.f32 %v3483, %v3499
    %3506 = vrot.lane.b32.xlu0 %v3502, 32
    %v3507 = vpop.permute.xlu0 %3506
    %3508 = vrot.lane.b32.xlu0 %v3503, 32
    %v3509 = vpop.permute.xlu0 %3508
    %v3512 = vadd.f32 %v3492, %v3507
    %v3513 = vadd.f32 %v3493, %v3509
    %v3514 = vtanh.pop %v3512
    %v3515 = vtanh.pop %v3513
    %3518 = vrot.lane.b32.xlu0 %v3514, 64
    %v3519 = vpop.permute.xlu0 %3518
    %3520 = vrot.lane.b32.xlu0 %v3515, 64
    %v3521 = vpop.permute.xlu0 %3520
    %v3524 = vmul.f32 %v3481, %v3519
    %v3525 = vmul.f32 %v3483, %v3521
    %v3528 = vrot.slane %v3524, 5
    %v3529 = vrot.slane %v3525, 4
    %v3530 = vsel %vm2831, %v3529, %v3528
    %3531 = vrot.lane.b32.xlu0 %v3530, 32
    %v3532 = vpop.permute.xlu0 %3531
    %v3533 = vsel %vm220, %v3532, 0
    %3535 = vmatprep.subr.mxu0 0.0
    %3536 = vmatpush1.msra.mxu0 %v2697
    %3537 = vmatprep.subr.mxu0 0.0
    %3538 = vmatpush1.msra.mxu0 %v2698
    %3539 = vmatprep.subr.mxu0 0.0
    %3540 = vmatpush1.msra.mxu0 %v2699
    %3541 = vmatprep.subr.mxu0 0.0
    %3542 = vmatpush1.msra.mxu0 %v2700
    %3543 = vmatprep.subr.mxu0 0.0
    %3544 = vmatpush1.msra.mxu0 0.0
    %3545 = vmatprep.subr.mxu0 0.0
    %3546 = vmatpush1.msra.mxu0 0.0
    %3547 = vmatprep.subr.mxu0 0.0
    %3548 = vmatpush1.msra.mxu0 0.0
    %3549 = vmatprep.subr.mxu0 0.0
    %3550 = vmatpush1.msra.mxu0 0.0
    %3551 = vmatprep.subr.mxu0 0.0
    %3552 = vmatpush1.msra.mxu0 0.0
    %3553 = vmatprep.subr.mxu0 0.0
    %3554 = vmatpush1.msra.mxu0 0.0
    %3555 = vmatprep.subr.mxu0 0.0
    %3556 = vmatpush1.msra.mxu0 0.0
    %3557 = vmatprep.subr.mxu0 0.0
    %3558 = vmatpush1.msra.mxu0 0.0
    %3559 = vmatprep.subr.mxu0 0.0
    %3560 = vmatpush1.msra.mxu0 0.0
    %3561 = vmatprep.subr.mxu0 0.0
    %3562 = vmatpush1.msra.mxu0 0.0
    %3563 = vmatprep.subr.mxu0 0.0
    %3564 = vmatpush1.msra.mxu0 0.0
    %3565 = vmatprep.subr.mxu0 0.0
    %3566 = vmatpush1.msra.mxu0 0.0
    %3567 = vmatprep.subr.mxu0 0.0
    %3568 = vmatpush1.msra.mxu0 0.0
    %3569 = vmatprep.subr.mxu0 0.0
    %3570 = vmatpush1.msra.mxu0 0.0
    %3571 = vmatprep.subr.mxu0 0.0
    %3572 = vmatpush1.msra.mxu0 0.0
    %3573 = vmatprep.subr.mxu0 0.0
    %3574 = vmatpush1.msra.mxu0 0.0
    %3575 = vmatprep.subr.mxu0 0.0
    %3576 = vmatpush1.msra.mxu0 0.0
    %3577 = vmatprep.subr.mxu0 0.0
    %3578 = vmatpush1.msra.mxu0 0.0
    %3579 = vmatprep.subr.mxu0 0.0
    %3580 = vmatpush1.msra.mxu0 0.0
    %3581 = vmatprep.subr.mxu0 0.0
    %3582 = vmatpush1.msra.mxu0 0.0
    %3583 = vmatprep.subr.mxu0 0.0
    %3584 = vmatpush1.msra.mxu0 0.0
    %3585 = vmatprep.subr.mxu0 0.0
    %3586 = vmatpush1.msra.mxu0 0.0
    %3587 = vmatprep.subr.mxu0 0.0
    %3588 = vmatpush1.msra.mxu0 0.0
    %3589 = vmatprep.subr.mxu0 0.0
    %3590 = vmatpush1.msra.mxu0 0.0
    %3591 = vmatprep.subr.mxu0 0.0
    %3592 = vmatpush1.msra.mxu0 0.0
    %3593 = vmatprep.subr.mxu0 0.0
    %3594 = vmatpush1.msra.mxu0 0.0
    %3595 = vmatprep.subr.mxu0 0.0
    %3596 = vmatpush1.msra.mxu0 0.0
    %3597 = vmatprep.subr.mxu0 0.0
    %3598 = vmatpush1.msra.mxu0 0.0
    %3599 = vmatprep.mubr.f32.mxu0 0.0
    %3600 = vmatmul.mubr.f32.gmra.mrb[0].mxu0 %v3533
    %v3601 = vpop.f32.mrb[0].mxu0
    %v3602 = vadd.f32 0.0, %v3601
    %v3603 = vpop.f32.mrb[0].mxu0
    %3604 = vdwg.mxu0
    %v3606 = vrot.slane %v3602, 2
    %v3607 = vrot.slane %v3602, 3
    %v3610 = vadd.f32 %v2695, %v3606
    %v3611 = vadd.f32 %v2696, %v3607
    %v3612 = vxor.u32 %v3610, 2147483648
    %v3613 = vxor.u32 %v3611, 2147483648
    %v3614 = vmul.f32 %v3612, 1.442695
    %v3615 = vpow.pop %v3614
    %v3616 = vmul.f32 %v3613, 1.442695
    %v3617 = vpow.pop %v3616
    %v3618 = vadd.f32 %v3615, 1.0
    %v3619 = vadd.f32 %v3617, 1.0
    %v3620 = vrcp.pop %v3618
    %v3621 = vmul.f32 1.0, %v3620
    %v3622 = vrcp.pop %v3619
    %v3623 = vmul.f32 1.0, %v3622
    %v3624 = vtanh.pop %v3610
    %v3625 = vtanh.pop %v3611
    %v3628 = vrot.slane %v3512, 7
    %v3629 = vrot.slane %v3513, 7
    %v3632 = vmul.f32 %v3621, %v3628
    %v3633 = vmul.f32 %v3623, %v3629
    %3636 = vrot.lane.b32.xlu0 %v3624, 64
    %v3637 = vpop.permute.xlu0 %3636
    %3638 = vrot.lane.b32.xlu0 %v3625, 64
    %v3639 = vpop.permute.xlu0 %3638
    %v3642 = vmul.f32 %v3621, %v3637
    %v3643 = vmul.f32 %v3623, %v3639
    %3646 = vrot.lane.b32.xlu0 %v3642, 32
    %v3647 = vpop.permute.xlu0 %3646
    %3648 = vrot.lane.b32.xlu0 %v3643, 32
    %v3649 = vpop.permute.xlu0 %3648
    %v3652 = vadd.f32 %v3632, %v3647
    %v3653 = vadd.f32 %v3633, %v3649
    %v3654 = vtanh.pop %v3652
    %v3655 = vtanh.pop %v3653
    %3658 = vrot.lane.b32.xlu0 %v3654, 64
    %v3659 = vpop.permute.xlu0 %3658
    %3660 = vrot.lane.b32.xlu0 %v3655, 64
    %v3661 = vpop.permute.xlu0 %3660
    %v3664 = vmul.f32 %v3621, %v3659
    %v3665 = vmul.f32 %v3623, %v3661
    %v3668 = vrot.slane %v3664, 6
    %v3669 = vrot.slane %v3665, 5
    %v3670 = vsel %vm2831, %v3669, %v3668
    %3671 = vrot.lane.b32.xlu0 %v3670, 32
    %v3672 = vpop.permute.xlu0 %3671
    %v3673 = vsel %vm220, %v3672, 0
    %3675 = vmatprep.subr.mxu0 0.0
    %3676 = vmatpush1.msra.mxu0 %v2697
    %3677 = vmatprep.subr.mxu0 0.0
    %3678 = vmatpush1.msra.mxu0 %v2698
    %3679 = vmatprep.subr.mxu0 0.0
    %3680 = vmatpush1.msra.mxu0 %v2699
    %3681 = vmatprep.subr.mxu0 0.0
    %3682 = vmatpush1.msra.mxu0 %v2700
    %3683 = vmatprep.subr.mxu0 0.0
    %3684 = vmatpush1.msra.mxu0 0.0
    %3685 = vmatprep.subr.mxu0 0.0
    %3686 = vmatpush1.msra.mxu0 0.0
    %3687 = vmatprep.subr.mxu0 0.0
    %3688 = vmatpush1.msra.mxu0 0.0
    %3689 = vmatprep.subr.mxu0 0.0
    %3690 = vmatpush1.msra.mxu0 0.0
    %3691 = vmatprep.subr.mxu0 0.0
    %3692 = vmatpush1.msra.mxu0 0.0
    %3693 = vmatprep.subr.mxu0 0.0
    %3694 = vmatpush1.msra.mxu0 0.0
    %3695 = vmatprep.subr.mxu0 0.0
    %3696 = vmatpush1.msra.mxu0 0.0
    %3697 = vmatprep.subr.mxu0 0.0
    %3698 = vmatpush1.msra.mxu0 0.0
    %3699 = vmatprep.subr.mxu0 0.0
    %3700 = vmatpush1.msra.mxu0 0.0
    %3701 = vmatprep.subr.mxu0 0.0
    %3702 = vmatpush1.msra.mxu0 0.0
    %3703 = vmatprep.subr.mxu0 0.0
    %3704 = vmatpush1.msra.mxu0 0.0
    %3705 = vmatprep.subr.mxu0 0.0
    %3706 = vmatpush1.msra.mxu0 0.0
    %3707 = vmatprep.subr.mxu0 0.0
    %3708 = vmatpush1.msra.mxu0 0.0
    %3709 = vmatprep.subr.mxu0 0.0
    %3710 = vmatpush1.msra.mxu0 0.0
    %3711 = vmatprep.subr.mxu0 0.0
    %3712 = vmatpush1.msra.mxu0 0.0
    %3713 = vmatprep.subr.mxu0 0.0
    %3714 = vmatpush1.msra.mxu0 0.0
    %3715 = vmatprep.subr.mxu0 0.0
    %3716 = vmatpush1.msra.mxu0 0.0
    %3717 = vmatprep.subr.mxu0 0.0
    %3718 = vmatpush1.msra.mxu0 0.0
    %3719 = vmatprep.subr.mxu0 0.0
    %3720 = vmatpush1.msra.mxu0 0.0
    %3721 = vmatprep.subr.mxu0 0.0
    %3722 = vmatpush1.msra.mxu0 0.0
    %3723 = vmatprep.subr.mxu0 0.0
    %3724 = vmatpush1.msra.mxu0 0.0
    %3725 = vmatprep.subr.mxu0 0.0
    %3726 = vmatpush1.msra.mxu0 0.0
    %3727 = vmatprep.subr.mxu0 0.0
    %3728 = vmatpush1.msra.mxu0 0.0
    %3729 = vmatprep.subr.mxu0 0.0
    %3730 = vmatpush1.msra.mxu0 0.0
    %3731 = vmatprep.subr.mxu0 0.0
    %3732 = vmatpush1.msra.mxu0 0.0
    %3733 = vmatprep.subr.mxu0 0.0
    %3734 = vmatpush1.msra.mxu0 0.0
    %3735 = vmatprep.subr.mxu0 0.0
    %3736 = vmatpush1.msra.mxu0 0.0
    %3737 = vmatprep.subr.mxu0 0.0
    %3738 = vmatpush1.msra.mxu0 0.0
    %3739 = vmatprep.mubr.f32.mxu0 0.0
    %3740 = vmatmul.mubr.f32.gmra.mrb[0].mxu0 %v3673
    %v3741 = vpop.f32.mrb[0].mxu0
    %v3742 = vadd.f32 0.0, %v3741
    %v3743 = vpop.f32.mrb[0].mxu0
    %3744 = vdwg.mxu0
    %v3746 = vrot.slane %v3742, 1
    %v3747 = vrot.slane %v3742, 2
    %v3750 = vadd.f32 %v2695, %v3746
    %v3751 = vadd.f32 %v2696, %v3747
    %v3752 = vxor.u32 %v3750, 2147483648
    %v3753 = vxor.u32 %v3751, 2147483648
    %v3754 = vmul.f32 %v3752, 1.442695
    %v3755 = vpow.pop %v3754
    %v3756 = vmul.f32 %v3753, 1.442695
    %v3757 = vpow.pop %v3756
    %v3758 = vadd.f32 %v3755, 1.0
    %v3759 = vadd.f32 %v3757, 1.0
    %v3760 = vrcp.pop %v3758
    %v3761 = vmul.f32 1.0, %v3760
    %v3762 = vrcp.pop %v3759
    %v3763 = vmul.f32 1.0, %v3762
    %v3764 = vtanh.pop %v3750
    %v3765 = vtanh.pop %v3751
    %v3768 = vrot.slane %v3652, 7
    %v3769 = vrot.slane %v3653, 7
    %v3772 = vmul.f32 %v3761, %v3768
    %v3773 = vmul.f32 %v3763, %v3769
    %3776 = vrot.lane.b32.xlu0 %v3764, 64
    %v3777 = vpop.permute.xlu0 %3776
    %3778 = vrot.lane.b32.xlu0 %v3765, 64
    %v3779 = vpop.permute.xlu0 %3778
    %v3782 = vmul.f32 %v3761, %v3777
    %v3783 = vmul.f32 %v3763, %v3779
    %3786 = vrot.lane.b32.xlu0 %v3782, 32
    %v3787 = vpop.permute.xlu0 %3786
    %3788 = vrot.lane.b32.xlu0 %v3783, 32
    %v3789 = vpop.permute.xlu0 %3788
    %v3792 = vadd.f32 %v3772, %v3787
    %v3793 = vadd.f32 %v3773, %v3789
    %v3794 = vtanh.pop %v3792
    %v3795 = vtanh.pop %v3793
    %3798 = vrot.lane.b32.xlu0 %v3794, 64
    %v3799 = vpop.permute.xlu0 %3798
    %3800 = vrot.lane.b32.xlu0 %v3795, 64
    %v3801 = vpop.permute.xlu0 %3800
    %v3804 = vmul.f32 %v3761, %v3799
    %v3805 = vmul.f32 %v3763, %v3801
    %v3806 = vld [vmem:[#allocation11] sm:$0xff]
    %v3807 = vld [vmem:[#allocation11 + $0x8] sm:$0xf]
    %v3810 = vrot.slane %v3804, 7
    %v3811 = vrot.slane %v3805, 6
    %v3812 = vsel %vm2831, %v3811, %v3810
    %3813 = vrot.lane.b32.xlu0 %v3812, 32
    %v3814 = vpop.permute.xlu0 %3813
    %v3815 = vsel %vm220, %v3814, 0
    %v3818 = vsel %vm220, %v3806, 0
    %v3821 = vsel %vm220, %v3807, 0
    %3823 = vmatprep.subr.mxu0 0.0
    %3824 = vmatpush1.xpose.msra.mxu0 %v3818
    %3825 = vmatprep.subr.mxu0 0.0
    %3826 = vmatpush1.xpose.msra.mxu0 %v3821
    %3827 = vmatprep.subr.mxu0 0.0
    %3828 = vmatpush1.xpose.msra.mxu0 0.0
    %3829 = vmatprep.subr.mxu0 0.0
    %3830 = vmatpush1.xpose.msra.mxu0 0.0
    %3831 = vmatprep.subr.mxu0 0.0
    %3832 = vmatpush1.xpose.msra.mxu0 0.0
    %3833 = vmatprep.subr.mxu0 0.0
    %3834 = vmatpush1.xpose.msra.mxu0 0.0
    %3835 = vmatprep.subr.mxu0 0.0
    %3836 = vmatpush1.xpose.msra.mxu0 0.0
    %3837 = vmatprep.subr.mxu0 0.0
    %3838 = vmatpush1.xpose.msra.mxu0 0.0
    %3839 = vmatprep.subr.mxu0 0.0
    %3840 = vmatpush1.xpose.msra.mxu0 0.0
    %3841 = vmatprep.subr.mxu0 0.0
    %3842 = vmatpush1.xpose.msra.mxu0 0.0
    %3843 = vmatprep.subr.mxu0 0.0
    %3844 = vmatpush1.xpose.msra.mxu0 0.0
    %3845 = vmatprep.subr.mxu0 0.0
    %3846 = vmatpush1.xpose.msra.mxu0 0.0
    %3847 = vmatprep.subr.mxu0 0.0
    %3848 = vmatpush1.xpose.msra.mxu0 0.0
    %3849 = vmatprep.subr.mxu0 0.0
    %3850 = vmatpush1.xpose.msra.mxu0 0.0
    %3851 = vmatprep.subr.mxu0 0.0
    %3852 = vmatpush1.xpose.msra.mxu0 0.0
    %3853 = vmatprep.subr.mxu0 0.0
    %3854 = vmatpush1.xpose.msra.mxu0 0.0
    %3855 = vmatprep.subr.mxu0 0.0
    %3856 = vmatpush1.xpose.msra.mxu0 0.0
    %3857 = vmatprep.subr.mxu0 0.0
    %3858 = vmatpush1.xpose.msra.mxu0 0.0
    %3859 = vmatprep.subr.mxu0 0.0
    %3860 = vmatpush1.xpose.msra.mxu0 0.0
    %3861 = vmatprep.subr.mxu0 0.0
    %3862 = vmatpush1.xpose.msra.mxu0 0.0
    %3863 = vmatprep.subr.mxu0 0.0
    %3864 = vmatpush1.xpose.msra.mxu0 0.0
    %3865 = vmatprep.subr.mxu0 0.0
    %3866 = vmatpush1.xpose.msra.mxu0 0.0
    %3867 = vmatprep.subr.mxu0 0.0
    %3868 = vmatpush1.xpose.msra.mxu0 0.0
    %3869 = vmatprep.subr.mxu0 0.0
    %3870 = vmatpush1.xpose.msra.mxu0 0.0
    %3871 = vmatprep.subr.mxu0 0.0
    %3872 = vmatpush1.xpose.msra.mxu0 0.0
    %3873 = vmatprep.subr.mxu0 0.0
    %3874 = vmatpush1.xpose.msra.mxu0 0.0
    %3875 = vmatprep.subr.mxu0 0.0
    %3876 = vmatpush1.xpose.msra.mxu0 0.0
    %3877 = vmatprep.subr.mxu0 0.0
    %3878 = vmatpush1.xpose.msra.mxu0 0.0
    %3879 = vmatprep.subr.mxu0 0.0
    %3880 = vmatpush1.xpose.msra.mxu0 0.0
    %3881 = vmatprep.subr.mxu0 0.0
    %3882 = vmatpush1.xpose.msra.mxu0 0.0
    %3883 = vmatprep.subr.mxu0 0.0
    %3884 = vmatpush1.xpose.msra.mxu0 0.0
    %3885 = vmatprep.subr.mxu0 0.0
    %3886 = vmatpush1.xpose.msra.mxu0 0.0
    %3887 = vmatprep.mubr.f32.mxu0 0.0
    %3888 = vmatmul.mubr.f32.gmra.mrb[0].mxu0 %v3815
    %v3889 = vpop.f32.mrb[0].mxu0
    %v3890 = vadd.f32 0.0, %v3889
    %v3891 = vpop.f32.mrb[0].mxu0
    %3892 = vdwg.mxu0
    %vm3893 = vcmask 91136
    %3894 = vst.msk [vmem:[#allocation13] sm:$0x3] %vm3893, %v3890
    %vm3895 = vcmask 97280
    %v3897 = vsel %vm3895, %v3890, 0
    %vm3899 = vcmask 1043456
    %v3900 = vsel %vm3899, %v3807, 0
    %3902 = vmatprep.subr.mxu0 0.0
    %3903 = vmatpush1.msra.mxu0 %v3806
    %3904 = vmatprep.subr.mxu0 0.0
    %3905 = vmatpush1.msra.mxu0 %v3900
    %3906 = vmatprep.subr.mxu0 0.0
    %3907 = vmatpush1.msra.mxu0 0.0
    %3908 = vmatprep.subr.mxu0 0.0
    %3909 = vmatpush1.msra.mxu0 0.0
    %3910 = vmatprep.subr.mxu0 0.0
    %3911 = vmatpush1.msra.mxu0 0.0
    %3912 = vmatprep.subr.mxu0 0.0
    %3913 = vmatpush1.msra.mxu0 0.0
    %3914 = vmatprep.subr.mxu0 0.0
    %3915 = vmatpush1.msra.mxu0 0.0
    %3916 = vmatprep.subr.mxu0 0.0
    %3917 = vmatpush1.msra.mxu0 0.0
    %3918 = vmatprep.subr.mxu0 0.0
    %3919 = vmatpush1.msra.mxu0 0.0
    %3920 = vmatprep.subr.mxu0 0.0
    %3921 = vmatpush1.msra.mxu0 0.0
    %3922 = vmatprep.subr.mxu0 0.0
    %3923 = vmatpush1.msra.mxu0 0.0
    %3924 = vmatprep.subr.mxu0 0.0
    %3925 = vmatpush1.msra.mxu0 0.0
    %3926 = vmatprep.subr.mxu0 0.0
    %3927 = vmatpush1.msra.mxu0 0.0
    %3928 = vmatprep.subr.mxu0 0.0
    %3929 = vmatpush1.msra.mxu0 0.0
    %3930 = vmatprep.subr.mxu0 0.0
    %3931 = vmatpush1.msra.mxu0 0.0
    %3932 = vmatprep.subr.mxu0 0.0
    %3933 = vmatpush1.msra.mxu0 0.0
    %3934 = vmatprep.subr.mxu0 0.0
    %3935 = vmatpush1.msra.mxu0 0.0
    %3936 = vmatprep.subr.mxu0 0.0
    %3937 = vmatpush1.msra.mxu0 0.0
    %3938 = vmatprep.subr.mxu0 0.0
    %3939 = vmatpush1.msra.mxu0 0.0
    %3940 = vmatprep.subr.mxu0 0.0
    %3941 = vmatpush1.msra.mxu0 0.0
    %3942 = vmatprep.subr.mxu0 0.0
    %3943 = vmatpush1.msra.mxu0 0.0
    %3944 = vmatprep.subr.mxu0 0.0
    %3945 = vmatpush1.msra.mxu0 0.0
    %3946 = vmatprep.subr.mxu0 0.0
    %3947 = vmatpush1.msra.mxu0 0.0
    %3948 = vmatprep.subr.mxu0 0.0
    %3949 = vmatpush1.msra.mxu0 0.0
    %3950 = vmatprep.subr.mxu0 0.0
    %3951 = vmatpush1.msra.mxu0 0.0
    %3952 = vmatprep.subr.mxu0 0.0
    %3953 = vmatpush1.msra.mxu0 0.0
    %3954 = vmatprep.subr.mxu0 0.0
    %3955 = vmatpush1.msra.mxu0 0.0
    %3956 = vmatprep.subr.mxu0 0.0
    %3957 = vmatpush1.msra.mxu0 0.0
    %3958 = vmatprep.subr.mxu0 0.0
    %3959 = vmatpush1.msra.mxu0 0.0
    %3960 = vmatprep.subr.mxu0 0.0
    %3961 = vmatpush1.msra.mxu0 0.0
    %3962 = vmatprep.subr.mxu0 0.0
    %3963 = vmatpush1.msra.mxu0 0.0
    %3964 = vmatprep.subr.mxu0 0.0
    %3965 = vmatpush1.msra.mxu0 0.0
    %3966 = vmatprep.mubr.f32.mxu0 0.0
    %3967 = vmatmul.mubr.f32.gmra.mrb[0].mxu0 %v3897
    %v3968 = vpop.f32.mrb[0].mxu0
    %v3969 = vadd.f32 0.0, %v3968
    %v3970 = vpop.f32.mrb[0].mxu0
    %3971 = vdwg.mxu0
    %vm3972 = vcmask 254976
    %3973 = vst.msk [vmem:[#allocation14] sm:$0x3] %vm3972, %v3969
    // Predicated region
    $region66: #{zslhar_forward.1} parent=1 // pred_check
      _
    $region67: #{zslhar_forward.1} parent=1 // pred_check_branch
      %3975 = sbr.rel (0) target = $region69
    $region68: #{zslhar_forward.1} parent=1 // pred_region
      %s3977 = ssub.s32 32, 32
      %3978 = vsyncadd [#allocation4], %s3977
      %s3980 = sshll.u32 [#allocation13], 4
      %s3981 = int_to_ptr.vmem [resolvable:$true] %s3980
      %3983 = dma.vmem_to_hbm [thread:$0]  %s3981, 32, %s10, [#allocation4]
    $region69: #{zslhar_forward.1} parent=1 // pred_fallthru
      _
    // Predicated region
    $region70: #{zslhar_forward.1} parent=1 // pred_check
      _
    $region71: #{zslhar_forward.1} parent=1 // pred_check_branch
      %3985 = sbr.rel (0) target = $region73
    $region72: #{zslhar_forward.1} parent=1 // pred_region
      %s3987 = ssub.s32 32, 32
      %3988 = vsyncadd [#allocation15], %s3987
      %s3990 = sshll.u32 [#allocation14], 4
      %s3991 = int_to_ptr.vmem [resolvable:$true] %s3990
      %3993 = dma.vmem_to_hbm [thread:$0]  %s3991, 32, %s11, [#allocation15]
    $region73: #{zslhar_forward.1} parent=1 // pred_fallthru
      _
    // Predicated region
    $region74: #{zslhar_forward.1} parent=1 // pred_check
      _
    $region75: #{zslhar_forward.1} parent=1 // pred_check_branch
      %3995 = sbr.rel (0) target = $region77
    $region76: #{zslhar_forward.1} parent=1 // pred_region
      %3996 = dma.done [#allocation4], 32
    $region77: #{zslhar_forward.1} parent=1 // pred_fallthru
      _
    // Predicated region
    $region78: #{zslhar_forward.1} parent=1 // pred_check
      _
    $region79: #{zslhar_forward.1} parent=1 // pred_check_branch
      %3998 = sbr.rel (0) target = $region81
    $region80: #{zslhar_forward.1} parent=1 // pred_region
      %3999 = dma.done [#allocation15], 32
    $region81: #{zslhar_forward.1} parent=1 // pred_fallthru
      _
    %4000 = vsyncpa [#allocation3], 1
    %4001 = vsyncpa [#allocation6], 1
    %4002 = vsyncpa [#allocation9], 1
    %4003 = vsyncpa [#allocation12], 1
    %4004 = vsyncpa [#allocation4], 1
    %4005 = vsyncpa [#allocation15], 1

</llo_original>
